<compile_context>
chip_gen: v5e
topology: v5e:2x2
jax: 0.10.0
libtpu: 0.0.40
codegen_flags: <defaults>
</compile_context>

<pallas_src>
import jax
import jax.numpy as jnp
from jax import lax
from jax.experimental import pallas as pl
from jax.experimental.pallas import tpu as pltpu


# ----------------------------------------------------------------------------
# Kernel 1: fused conv tower (one image per grid step, all VMEM-resident).
# Activations are kept as (flattened_spatial, channels) 2-D tiles (channels on
# the 128-lane axis) so convs are whole-image matmuls and pools are strided maxes.
# ----------------------------------------------------------------------------
def _conv_tower_kernel(p_ref, w1_ref, b1_ref, w2_ref, b2_ref, o_ref,
                       a1_ref, pw1_ref, p1pad_ref, im2_ref, a2_ref, pw2_ref):
    # conv1 + ReLU: single (784, 9) x (9, 32) MXU matmul (im2col patches input).
    a1 = jnp.dot(p_ref[0], w1_ref[...], preferred_element_type=jnp.float32)
    a1_ref[...] = jnp.maximum(a1 + b1_ref[...], 0.0)                  # (784, 32)

    # max-pool #1, W direction: rows of a1 are flat (h*28 + w); since 28 is even,
    # even flat row <=> even w.  One vectorized max of two strided slices.
    pw1_ref[...] = jnp.maximum(a1_ref[pl.ds(0, 392, stride=2), :],
                               a1_ref[pl.ds(1, 392, stride=2), :])    # rows h*14+wo
    # max-pool #1, H direction -> zero-padded (16,16,32) scratch, so conv2's
    # "same" padding is handled entirely in-kernel.
    p1pad_ref[...] = jnp.zeros_like(p1pad_ref)
    for ho in range(14):
        row = jnp.maximum(pw1_ref[pl.ds(ho * 28, 14), :],
                          pw1_ref[pl.ds(ho * 28 + 14, 14), :])        # (14, 32)
        p1pad_ref[ho + 1, pl.ds(1, 14), :] = row

    # conv2 + ReLU: build the (196, 288) im2col matrix in VMEM, then one
    # (196, 288) x (288, 64) MXU matmul (replaces 14*9 tiny per-row matmuls).
    for h in range(14):
        taps = [p1pad_ref[h + dy, pl.ds(dx, 14), :]                   # (14, 32)
                for dy in range(3) for dx in range(3)]
        im2_ref[pl.ds(h * 14, 14), :] = jnp.concatenate(taps, axis=-1)
    a2 = jnp.dot(im2_ref[...], w2_ref[...], preferred_element_type=jnp.float32)
    a2_ref[...] = jnp.maximum(a2 + b2_ref[...], 0.0)                  # (196, 64)

    # max-pool #2: (14,14,64) -> (7,7,64) = 49 feature rows in HWC order.
    pw2_ref[...] = jnp.maximum(a2_ref[pl.ds(0, 98, stride=2), :],
                               a2_ref[pl.ds(1, 98, stride=2), :])     # rows h*7+wo
    for ho in range(7):
        o_ref[0, pl.ds(ho * 7, 7), :] = jnp.maximum(
            pw2_ref[pl.ds(ho * 14, 7), :], pw2_ref[pl.ds(ho * 14 + 7, 7), :])


def conv_tower(patches, w1, b1, w2, b2):
    N = patches.shape[0]
    return pl.pallas_call(
        _conv_tower_kernel,
        out_shape=jax.ShapeDtypeStruct((N, 49, 64), jnp.float32),
        grid=(N,),
        in_specs=[
            pl.BlockSpec((1, 784, 9), lambda n: (n, 0, 0)),
            # weights / biases: constant index maps -> fetched once, VMEM-resident
            pl.BlockSpec((9, 32), lambda n: (0, 0)),
            pl.BlockSpec((1, 32), lambda n: (0, 0)),
            pl.BlockSpec((288, 64), lambda n: (0, 0)),
            pl.BlockSpec((1, 64), lambda n: (0, 0)),
        ],
        out_specs=pl.BlockSpec((1, 49, 64), lambda n: (n, 0, 0)),
        scratch_shapes=[
            pltpu.VMEM((784, 32), jnp.float32),     # conv1+ReLU output
            pltpu.VMEM((392, 32), jnp.float32),     # pool1 after W direction
            pltpu.VMEM((16, 16, 32), jnp.float32),  # pool1 output, zero-padded
            pltpu.VMEM((196, 288), jnp.float32),    # conv2 im2col
            pltpu.VMEM((196, 64), jnp.float32),     # conv2+ReLU output
            pltpu.VMEM((98, 64), jnp.float32),      # pool2 after W direction
        ],
        compiler_params=pltpu.CompilerParams(
            dimension_semantics=("parallel",)),     # v7x: batch split over 2 TCs
    )(patches, w1, b1, w2, b2)


# ----------------------------------------------------------------------------
# Kernel 2: fused MLP head  relu(x @ W1 + b1) @ W2 + b2  (whole batch at once).
# ----------------------------------------------------------------------------
def _mlp_head_kernel(x_ref, w1_ref, b1_ref, w2_ref, b2_ref, o_ref):
    h = jnp.dot(x_ref[...], w1_ref[...], preferred_element_type=jnp.float32)
    h = jnp.maximum(h + b1_ref[...], 0.0)
    o_ref[...] = (jnp.dot(h, w2_ref[...], preferred_element_type=jnp.float32)
                  + b2_ref[...]).astype(o_ref.dtype)


def mlp_head(x, w1, b1, w2, b2):
    N, K = x.shape
    Dh = w1.shape[1]
    Do = w2.shape[1]
    return pl.pallas_call(
        _mlp_head_kernel,
        out_shape=jax.ShapeDtypeStruct((N, Do), jnp.float32),
        in_specs=[
            pl.BlockSpec((N, K), lambda: (0, 0)),
            pl.BlockSpec((K, Dh), lambda: (0, 0)),
            pl.BlockSpec((1, Dh), lambda: (0, 0)),
            pl.BlockSpec((Dh, Do), lambda: (0, 0)),
            pl.BlockSpec((1, Do), lambda: (0, 0)),
        ],
        out_specs=pl.BlockSpec((N, Do), lambda: (0, 0)),
    )(x, w1, b1, w2, b2)


# ----------------------------------------------------------------------------
# Parameter prep (one-time, outside jit): reshape conv weights for the im2col
# matmuls and permute fc1's rows from torch CHW flatten order to HWC order so
# the kernel needs no runtime transpose before the flatten.
# ----------------------------------------------------------------------------
def prepare_params(p):
    return {
        "w1": p["conv1_w"].reshape(9, 32),            # rows: dy*3 + dx
        "b1": p["conv1_b"].reshape(1, 32),
        "w2": p["conv2_w"].reshape(288, 64),          # rows: (dy*3 + dx)*32 + ci
        "b2": p["conv2_b"].reshape(1, 64),
        # row r_chw = c*49 + h*7 + w  ->  row r_hwc = (h*7 + w)*64 + c
        "fc1_w": p["fc1_w"].reshape(64, 7, 7, 128)
                           .transpose(1, 2, 0, 3).reshape(64 * 7 * 7, 128),
        "fc1_b": p["fc1_b"].reshape(1, 128),
        "fc2_w": p["fc2_w"],
        "fc2_b": p["fc2_b"].reshape(1, 10),
    }


# ----------------------------------------------------------------------------
# Full forward pass (Pallas) and a plain-JAX reference (torch conventions).
# ----------------------------------------------------------------------------
def simple_cnn_forward(x_nchw, kp):
    N = x_nchw.shape[0]
    x = x_nchw.reshape(N, 28, 28)                     # Cin == 1, free reshape
    # conv1 im2col patches (9 taps, ~28 KB/image): one tiny XLA op that also
    # subsumes the zero padding and keeps Cin=1 off the lane axis.
    xp = jnp.pad(x, ((0, 0), (1, 1), (1, 1)))
    patches = jnp.stack([xp[:, dy:dy + 28, dx:dx + 28]
                         for dy in range(3) for dx in range(3)], axis=-1)
    patches = patches.reshape(N, 28 * 28, 9)
    feat = conv_tower(patches, kp["w1"], kp["b1"], kp["w2"], kp["b2"])  # (N,49,64)
    feat = feat.reshape(N, 49 * 64)                   # contiguous merge (HWC order)
    return mlp_head(feat, kp["fc1_w"], kp["fc1_b"], kp["fc2_w"], kp["fc2_b"])


def reference_forward(x_nchw, p):
    hp = lax.Precision.HIGHEST
    x = jnp.transpose(x_nchw, (0, 2, 3, 1))
    dn = ("NHWC", "HWIO", "NHWC")
    y = lax.conv_general_dilated(x, p["conv1_w"], (1, 1), "SAME",
                                 dimension_numbers=dn, precision=hp) + p["conv1_b"]
    y = jnp.maximum(y, 0.0)
    y = lax.reduce_window(y, -jnp.inf, lax.max, (1, 2, 2, 1), (1, 2, 2, 1), "VALID")
    y = lax.conv_general_dilated(y, p["conv2_w"], (1, 1), "SAME",
                                 dimension_numbers=dn, precision=hp) + p["conv2_b"]
    y = jnp.maximum(y, 0.0)
    y = lax.reduce_window(y, -jnp.inf, lax.max, (1, 2, 2, 1), (1, 2, 2, 1), "VALID")
    feat = jnp.transpose(y, (0, 3, 1, 2)).reshape(x.shape[0], -1)   # torch CHW flatten
    h = jnp.maximum(jnp.dot(feat, p["fc1_w"], precision=hp) + p["fc1_b"], 0.0)
    return jnp.dot(h, p["fc2_w"], precision=hp) + p["fc2_b"]


def init_params(key):
    ks = jax.random.split(key, 8)
    f32 = jnp.float32
    return {
        "conv1_w": jax.random.normal(ks[0], (3, 3, 1, 32), f32) * 0.3,
        "conv1_b": jax.random.normal(ks[1], (32,), f32) * 0.05,
        "conv2_w": jax.random.normal(ks[2], (3, 3, 32, 64), f32) * 0.08,
        "conv2_b": jax.random.normal(ks[3], (64,), f32) * 0.05,
        "fc1_w": jax.random.normal(ks[4], (64 * 7 * 7, 128), f32) * 0.02,
        "fc1_b": jax.random.normal(ks[5], (128,), f32) * 0.05,
        "fc2_w": jax.random.normal(ks[6], (128, 10), f32) * 0.1,
        "fc2_b": jax.random.normal(ks[7], (10,), f32) * 0.05,
    }


if __name__ == "__main__":
    key = jax.random.PRNGKey(0)
    kx, kp = jax.random.split(key)
    # The module's fc1 (64*7*7) fixes the spatial size to 28x28 (MNIST).
    x = jax.random.normal(kx, (2, 1, 28, 28), jnp.float32)   # NCHW like PyTorch
    params = init_params(kp)
    kparams = prepare_params(params)                          # one-time re-layout

    out = jax.block_until_ready(jax.jit(simple_cnn_forward)(x, kparams))
    assert out.shape == (2, 10), out.shape

    ref = jax.block_until_ready(reference_forward(x, params))
    # Tightened from 5e-2.  Both sides are f32, but XLA's DEFAULT f32 MXU path can
    # differ in pass count from the in-kernel f32 dots, so keep modest headroom.
    if not jnp.allclose(out, ref, atol=2e-2, rtol=2e-2):
        raise AssertionError(
            f"Pallas output mismatch vs reference: max abs diff "
            f"{float(jnp.max(jnp.abs(out - ref)))}")

    print("KERNEL_OK")
</pallas_src>

<mosaic_0001>
module attributes {stable_mosaic.version = 11 : i64} {
  func.func @_conv_tower_kernel(%arg0: i32, %arg1: memref<1x784x9xf32, #tpu.memory_space<vmem>>, %arg2: memref<9x32xf32, #tpu.memory_space<vmem>>, %arg3: memref<1x32xf32, #tpu.memory_space<vmem>>, %arg4: memref<288x64xf32, #tpu.memory_space<vmem>>, %arg5: memref<1x64xf32, #tpu.memory_space<vmem>>, %arg6: memref<1x49x64xf32, #tpu.memory_space<vmem>>, %arg7: memref<784x32xf32, #tpu.memory_space<vmem>>, %arg8: memref<392x32xf32, #tpu.memory_space<vmem>>, %arg9: memref<16x16x32xf32, #tpu.memory_space<vmem>>, %arg10: memref<196x288xf32, #tpu.memory_space<vmem>>, %arg11: memref<196x64xf32, #tpu.memory_space<vmem>>, %arg12: memref<98x64xf32, #tpu.memory_space<vmem>>) attributes {dimension_semantics = [#tpu.dimension_semantics<parallel>], iteration_bounds = array<i64: 2>, scalar_prefetch = 0 : i64, scratch_operands = 6 : i64, tpu.core_type = #tpu.core_type<tc>, window_params = [{transform_indices = @transform_0, window_bounds = array<i64: 1, 784, 9>}, {pipeline_mode = #tpu.pipeline_mode<synchronous>, transform_indices = @transform_1, window_bounds = array<i64: 9, 32>}, {pipeline_mode = #tpu.pipeline_mode<synchronous>, transform_indices = @transform_2, window_bounds = array<i64: 1, 32>}, {pipeline_mode = #tpu.pipeline_mode<synchronous>, transform_indices = @transform_3, window_bounds = array<i64: 288, 64>}, {pipeline_mode = #tpu.pipeline_mode<synchronous>, transform_indices = @transform_4, window_bounds = array<i64: 1, 64>}, {transform_indices = @transform_5, window_bounds = array<i64: 1, 49, 64>}]} {
    %c0 = arith.constant 0 : index
    %c0_0 = arith.constant 0 : index
    %c0_1 = arith.constant 0 : index
    %0 = vector.load %arg1[%c0, %c0_0, %c0_1] : memref<1x784x9xf32, #tpu.memory_space<vmem>>, vector<1x784x9xf32>
    %1 = vector.shape_cast %0 : vector<1x784x9xf32> to vector<784x9xf32>
    %c0_2 = arith.constant 0 : index
    %c0_3 = arith.constant 0 : index
    %2 = vector.load %arg2[%c0_2, %c0_3] : memref<9x32xf32, #tpu.memory_space<vmem>>, vector<9x32xf32>
    %cst = arith.constant dense<0.000000e+00> : vector<784x32xf32>
    %3 = tpu.matmul %1, %2, %cst {dimension_numbers = #tpu.dot_dimension_numbers<[1], [0], [0], [1], [0, 0, 1, 1], [], []>} : vector<784x9xf32>, vector<9x32xf32>, vector<784x32xf32> -> vector<784x32xf32>
    %c0_4 = arith.constant 0 : index
    %c0_5 = arith.constant 0 : index
    %4 = vector.load %arg3[%c0_4, %c0_5] : memref<1x32xf32, #tpu.memory_space<vmem>>, vector<1x32xf32>
    %5 = vector.broadcast %4 : vector<1x32xf32> to vector<784x32xf32>
    %6 = arith.addf %3, %5 : vector<784x32xf32>
    %cst_6 = arith.constant 0.000000e+00 : f32
    %7 = vector.broadcast %cst_6 : f32 to vector<784x32xf32>
    %8 = arith.maximumf %6, %7 : vector<784x32xf32>
    %c0_7 = arith.constant 0 : index
    %c0_8 = arith.constant 0 : index
    %9 = vector.load %arg7[%c0_7, %c0_8] : memref<784x32xf32, #tpu.memory_space<vmem>>, vector<784x32xf32>
    tpu.vector_store %arg7[%c0_7, %c0_8], %8 {strides = array<i32>} : memref<784x32xf32, #tpu.memory_space<vmem>>, vector<784x32xf32>,
    %c0_9 = arith.constant 0 : index
    %c0_10 = arith.constant 0 : index
    %10 = tpu.strided_load %arg7[%c0_9, %c0_10] {strides = array<i32: 2, 1>} : memref<784x32xf32, #tpu.memory_space<vmem>>, vector<392x32xf32>
    %c1 = arith.constant 1 : index
    %c0_11 = arith.constant 0 : index
    %11 = tpu.strided_load %arg7[%c1, %c0_11] {strides = array<i32: 2, 1>} : memref<784x32xf32, #tpu.memory_space<vmem>>, vector<392x32xf32>
    %12 = arith.maximumf %10, %11 : vector<392x32xf32>
    %c0_12 = arith.constant 0 : index
    %c0_13 = arith.constant 0 : index
    %13 = vector.load %arg8[%c0_12, %c0_13] : memref<392x32xf32, #tpu.memory_space<vmem>>, vector<392x32xf32>
    tpu.vector_store %arg8[%c0_12, %c0_13], %12 {strides = array<i32>} : memref<392x32xf32, #tpu.memory_space<vmem>>, vector<392x32xf32>,
    %cst_14 = arith.constant 0.000000e+00 : f32
    %14 = vector.broadcast %cst_14 : f32 to vector<16x16x32xf32>
    %c0_15 = arith.constant 0 : index
    %c0_16 = arith.constant 0 : index
    %c0_17 = arith.constant 0 : index
    %15 = vector.load %arg9[%c0_15, %c0_16, %c0_17] : memref<16x16x32xf32, #tpu.memory_space<vmem>>, vector<16x16x32xf32>
    tpu.vector_store %arg9[%c0_15, %c0_16, %c0_17], %14 {strides = array<i32>} : memref<16x16x32xf32, #tpu.memory_space<vmem>>, vector<16x16x32xf32>,
    %c0_18 = arith.constant 0 : index
    %c0_19 = arith.constant 0 : index
    %16 = vector.load %arg8[%c0_18, %c0_19] : memref<392x32xf32, #tpu.memory_space<vmem>>, vector<14x32xf32>
    %c14 = arith.constant 14 : index
    %c0_20 = arith.constant 0 : index
    %17 = vector.load %arg8[%c14, %c0_20] : memref<392x32xf32, #tpu.memory_space<vmem>>, vector<14x32xf32>
    %18 = arith.maximumf %16, %17 : vector<14x32xf32>
    %c1_21 = arith.constant 1 : index
    %c1_22 = arith.constant 1 : index
    %c0_23 = arith.constant 0 : index
    %19 = vector.load %arg9[%c1_21, %c1_22, %c0_23] : memref<16x16x32xf32, #tpu.memory_space<vmem>>, vector<1x14x32xf32>
    %20 = vector.shape_cast %19 : vector<1x14x32xf32> to vector<14x32xf32>
    %21 = vector.shape_cast %18 : vector<14x32xf32> to vector<1x14x32xf32>
    tpu.vector_store %arg9[%c1_21, %c1_22, %c0_23], %21 {strides = array<i32>} : memref<16x16x32xf32, #tpu.memory_space<vmem>>, vector<1x14x32xf32>,
    %c28 = arith.constant 28 : index
    %c0_24 = arith.constant 0 : index
    %22 = vector.load %arg8[%c28, %c0_24] : memref<392x32xf32, #tpu.memory_space<vmem>>, vector<14x32xf32>
    %c42 = arith.constant 42 : index
    %c0_25 = arith.constant 0 : index
    %23 = vector.load %arg8[%c42, %c0_25] : memref<392x32xf32, #tpu.memory_space<vmem>>, vector<14x32xf32>
    %24 = arith.maximumf %22, %23 : vector<14x32xf32>
    %c2 = arith.constant 2 : index
    %c1_26 = arith.constant 1 : index
    %c0_27 = arith.constant 0 : index
    %25 = vector.load %arg9[%c2, %c1_26, %c0_27] : memref<16x16x32xf32, #tpu.memory_space<vmem>>, vector<1x14x32xf32>
    %26 = vector.shape_cast %25 : vector<1x14x32xf32> to vector<14x32xf32>
    %27 = vector.shape_cast %24 : vector<14x32xf32> to vector<1x14x32xf32>
    tpu.vector_store %arg9[%c2, %c1_26, %c0_27], %27 {strides = array<i32>} : memref<16x16x32xf32, #tpu.memory_space<vmem>>, vector<1x14x32xf32>,
    %c56 = arith.constant 56 : index
    %c0_28 = arith.constant 0 : index
    %28 = vector.load %arg8[%c56, %c0_28] : memref<392x32xf32, #tpu.memory_space<vmem>>, vector<14x32xf32>
    %c70 = arith.constant 70 : index
    %c0_29 = arith.constant 0 : index
    %29 = vector.load %arg8[%c70, %c0_29] : memref<392x32xf32, #tpu.memory_space<vmem>>, vector<14x32xf32>
    %30 = arith.maximumf %28, %29 : vector<14x32xf32>
    %c3 = arith.constant 3 : index
    %c1_30 = arith.constant 1 : index
    %c0_31 = arith.constant 0 : index
    %31 = vector.load %arg9[%c3, %c1_30, %c0_31] : memref<16x16x32xf32, #tpu.memory_space<vmem>>, vector<1x14x32xf32>
    %32 = vector.shape_cast %31 : vector<1x14x32xf32> to vector<14x32xf32>
    %33 = vector.shape_cast %30 : vector<14x32xf32> to vector<1x14x32xf32>
    tpu.vector_store %arg9[%c3, %c1_30, %c0_31], %33 {strides = array<i32>} : memref<16x16x32xf32, #tpu.memory_space<vmem>>, vector<1x14x32xf32>,
    %c84 = arith.constant 84 : index
    %c0_32 = arith.constant 0 : index
    %34 = vector.load %arg8[%c84, %c0_32] : memref<392x32xf32, #tpu.memory_space<vmem>>, vector<14x32xf32>
    %c98 = arith.constant 98 : index
    %c0_33 = arith.constant 0 : index
    %35 = vector.load %arg8[%c98, %c0_33] : memref<392x32xf32, #tpu.memory_space<vmem>>, vector<14x32xf32>
    %36 = arith.maximumf %34, %35 : vector<14x32xf32>
    %c4 = arith.constant 4 : index
    %c1_34 = arith.constant 1 : index
    %c0_35 = arith.constant 0 : index
    %37 = vector.load %arg9[%c4, %c1_34, %c0_35] : memref<16x16x32xf32, #tpu.memory_space<vmem>>, vector<1x14x32xf32>
    %38 = vector.shape_cast %37 : vector<1x14x32xf32> to vector<14x32xf32>
    %39 = vector.shape_cast %36 : vector<14x32xf32> to vector<1x14x32xf32>
    tpu.vector_store %arg9[%c4, %c1_34, %c0_35], %39 {strides = array<i32>} : memref<16x16x32xf32, #tpu.memory_space<vmem>>, vector<1x14x32xf32>,
    %c112 = arith.constant 112 : index
    %c0_36 = arith.constant 0 : index
    %40 = vector.load %arg8[%c112, %c0_36] : memref<392x32xf32, #tpu.memory_space<vmem>>, vector<14x32xf32>
    %c126 = arith.constant 126 : index
    %c0_37 = arith.constant 0 : index
    %41 = vector.load %arg8[%c126, %c0_37] : memref<392x32xf32, #tpu.memory_space<vmem>>, vector<14x32xf32>
    %42 = arith.maximumf %40, %41 : vector<14x32xf32>
    %c5 = arith.constant 5 : index
    %c1_38 = arith.constant 1 : index
    %c0_39 = arith.constant 0 : index
    %43 = vector.load %arg9[%c5, %c1_38, %c0_39] : memref<16x16x32xf32, #tpu.memory_space<vmem>>, vector<1x14x32xf32>
    %44 = vector.shape_cast %43 : vector<1x14x32xf32> to vector<14x32xf32>
    %45 = vector.shape_cast %42 : vector<14x32xf32> to vector<1x14x32xf32>
    tpu.vector_store %arg9[%c5, %c1_38, %c0_39], %45 {strides = array<i32>} : memref<16x16x32xf32, #tpu.memory_space<vmem>>, vector<1x14x32xf32>,
    %c140 = arith.constant 140 : index
    %c0_40 = arith.constant 0 : index
    %46 = vector.load %arg8[%c140, %c0_40] : memref<392x32xf32, #tpu.memory_space<vmem>>, vector<14x32xf32>
    %c154 = arith.constant 154 : index
    %c0_41 = arith.constant 0 : index
    %47 = vector.load %arg8[%c154, %c0_41] : memref<392x32xf32, #tpu.memory_space<vmem>>, vector<14x32xf32>
    %48 = arith.maximumf %46, %47 : vector<14x32xf32>
    %c6 = arith.constant 6 : index
    %c1_42 = arith.constant 1 : index
    %c0_43 = arith.constant 0 : index
    %49 = vector.load %arg9[%c6, %c1_42, %c0_43] : memref<16x16x32xf32, #tpu.memory_space<vmem>>, vector<1x14x32xf32>
    %50 = vector.shape_cast %49 : vector<1x14x32xf32> to vector<14x32xf32>
    %51 = vector.shape_cast %48 : vector<14x32xf32> to vector<1x14x32xf32>
    tpu.vector_store %arg9[%c6, %c1_42, %c0_43], %51 {strides = array<i32>} : memref<16x16x32xf32, #tpu.memory_space<vmem>>, vector<1x14x32xf32>,
    %c168 = arith.constant 168 : index
    %c0_44 = arith.constant 0 : index
    %52 = vector.load %arg8[%c168, %c0_44] : memref<392x32xf32, #tpu.memory_space<vmem>>, vector<14x32xf32>
    %c182 = arith.constant 182 : index
    %c0_45 = arith.constant 0 : index
    %53 = vector.load %arg8[%c182, %c0_45] : memref<392x32xf32, #tpu.memory_space<vmem>>, vector<14x32xf32>
    %54 = arith.maximumf %52, %53 : vector<14x32xf32>
    %c7 = arith.constant 7 : index
    %c1_46 = arith.constant 1 : index
    %c0_47 = arith.constant 0 : index
    %55 = vector.load %arg9[%c7, %c1_46, %c0_47] : memref<16x16x32xf32, #tpu.memory_space<vmem>>, vector<1x14x32xf32>
    %56 = vector.shape_cast %55 : vector<1x14x32xf32> to vector<14x32xf32>
    %57 = vector.shape_cast %54 : vector<14x32xf32> to vector<1x14x32xf32>
    tpu.vector_store %arg9[%c7, %c1_46, %c0_47], %57 {strides = array<i32>} : memref<16x16x32xf32, #tpu.memory_space<vmem>>, vector<1x14x32xf32>,
    %c196 = arith.constant 196 : index
    %c0_48 = arith.constant 0 : index
    %58 = vector.load %arg8[%c196, %c0_48] : memref<392x32xf32, #tpu.memory_space<vmem>>, vector<14x32xf32>
    %c210 = arith.constant 210 : index
    %c0_49 = arith.constant 0 : index
    %59 = vector.load %arg8[%c210, %c0_49] : memref<392x32xf32, #tpu.memory_space<vmem>>, vector<14x32xf32>
    %60 = arith.maximumf %58, %59 : vector<14x32xf32>
    %c8 = arith.constant 8 : index
    %c1_50 = arith.constant 1 : index
    %c0_51 = arith.constant 0 : index
    %61 = vector.load %arg9[%c8, %c1_50, %c0_51] : memref<16x16x32xf32, #tpu.memory_space<vmem>>, vector<1x14x32xf32>
    %62 = vector.shape_cast %61 : vector<1x14x32xf32> to vector<14x32xf32>
    %63 = vector.shape_cast %60 : vector<14x32xf32> to vector<1x14x32xf32>
    tpu.vector_store %arg9[%c8, %c1_50, %c0_51], %63 {strides = array<i32>} : memref<16x16x32xf32, #tpu.memory_space<vmem>>, vector<1x14x32xf32>,
    %c224 = arith.constant 224 : index
    %c0_52 = arith.constant 0 : index
    %64 = vector.load %arg8[%c224, %c0_52] : memref<392x32xf32, #tpu.memory_space<vmem>>, vector<14x32xf32>
    %c238 = arith.constant 238 : index
    %c0_53 = arith.constant 0 : index
    %65 = vector.load %arg8[%c238, %c0_53] : memref<392x32xf32, #tpu.memory_space<vmem>>, vector<14x32xf32>
    %66 = arith.maximumf %64, %65 : vector<14x32xf32>
    %c9 = arith.constant 9 : index
    %c1_54 = arith.constant 1 : index
    %c0_55 = arith.constant 0 : index
    %67 = vector.load %arg9[%c9, %c1_54, %c0_55] : memref<16x16x32xf32, #tpu.memory_space<vmem>>, vector<1x14x32xf32>
    %68 = vector.shape_cast %67 : vector<1x14x32xf32> to vector<14x32xf32>
    %69 = vector.shape_cast %66 : vector<14x32xf32> to vector<1x14x32xf32>
    tpu.vector_store %arg9[%c9, %c1_54, %c0_55], %69 {strides = array<i32>} : memref<16x16x32xf32, #tpu.memory_space<vmem>>, vector<1x14x32xf32>,
    %c252 = arith.constant 252 : index
    %c0_56 = arith.constant 0 : index
    %70 = vector.load %arg8[%c252, %c0_56] : memref<392x32xf32, #tpu.memory_space<vmem>>, vector<14x32xf32>
    %c266 = arith.constant 266 : index
    %c0_57 = arith.constant 0 : index
    %71 = vector.load %arg8[%c266, %c0_57] : memref<392x32xf32, #tpu.memory_space<vmem>>, vector<14x32xf32>
    %72 = arith.maximumf %70, %71 : vector<14x32xf32>
    %c10 = arith.constant 10 : index
    %c1_58 = arith.constant 1 : index
    %c0_59 = arith.constant 0 : index
    %73 = vector.load %arg9[%c10, %c1_58, %c0_59] : memref<16x16x32xf32, #tpu.memory_space<vmem>>, vector<1x14x32xf32>
    %74 = vector.shape_cast %73 : vector<1x14x32xf32> to vector<14x32xf32>
    %75 = vector.shape_cast %72 : vector<14x32xf32> to vector<1x14x32xf32>
    tpu.vector_store %arg9[%c10, %c1_58, %c0_59], %75 {strides = array<i32>} : memref<16x16x32xf32, #tpu.memory_space<vmem>>, vector<1x14x32xf32>,
    %c280 = arith.constant 280 : index
    %c0_60 = arith.constant 0 : index
    %76 = vector.load %arg8[%c280, %c0_60] : memref<392x32xf32, #tpu.memory_space<vmem>>, vector<14x32xf32>
    %c294 = arith.constant 294 : index
    %c0_61 = arith.constant 0 : index
    %77 = vector.load %arg8[%c294, %c0_61] : memref<392x32xf32, #tpu.memory_space<vmem>>, vector<14x32xf32>
    %78 = arith.maximumf %76, %77 : vector<14x32xf32>
    %c11 = arith.constant 11 : index
    %c1_62 = arith.constant 1 : index
    %c0_63 = arith.constant 0 : index
    %79 = vector.load %arg9[%c11, %c1_62, %c0_63] : memref<16x16x32xf32, #tpu.memory_space<vmem>>, vector<1x14x32xf32>
    %80 = vector.shape_cast %79 : vector<1x14x32xf32> to vector<14x32xf32>
    %81 = vector.shape_cast %78 : vector<14x32xf32> to vector<1x14x32xf32>
    tpu.vector_store %arg9[%c11, %c1_62, %c0_63], %81 {strides = array<i32>} : memref<16x16x32xf32, #tpu.memory_space<vmem>>, vector<1x14x32xf32>,
    %c308 = arith.constant 308 : index
    %c0_64 = arith.constant 0 : index
    %82 = vector.load %arg8[%c308, %c0_64] : memref<392x32xf32, #tpu.memory_space<vmem>>, vector<14x32xf32>
    %c322 = arith.constant 322 : index
    %c0_65 = arith.constant 0 : index
    %83 = vector.load %arg8[%c322, %c0_65] : memref<392x32xf32, #tpu.memory_space<vmem>>, vector<14x32xf32>
    %84 = arith.maximumf %82, %83 : vector<14x32xf32>
    %c12 = arith.constant 12 : index
    %c1_66 = arith.constant 1 : index
    %c0_67 = arith.constant 0 : index
    %85 = vector.load %arg9[%c12, %c1_66, %c0_67] : memref<16x16x32xf32, #tpu.memory_space<vmem>>, vector<1x14x32xf32>
    %86 = vector.shape_cast %85 : vector<1x14x32xf32> to vector<14x32xf32>
    %87 = vector.shape_cast %84 : vector<14x32xf32> to vector<1x14x32xf32>
    tpu.vector_store %arg9[%c12, %c1_66, %c0_67], %87 {strides = array<i32>} : memref<16x16x32xf32, #tpu.memory_space<vmem>>, vector<1x14x32xf32>,
    %c336 = arith.constant 336 : index
    %c0_68 = arith.constant 0 : index
    %88 = vector.load %arg8[%c336, %c0_68] : memref<392x32xf32, #tpu.memory_space<vmem>>, vector<14x32xf32>
    %c350 = arith.constant 350 : index
    %c0_69 = arith.constant 0 : index
    %89 = vector.load %arg8[%c350, %c0_69] : memref<392x32xf32, #tpu.memory_space<vmem>>, vector<14x32xf32>
    %90 = arith.maximumf %88, %89 : vector<14x32xf32>
    %c13 = arith.constant 13 : index
    %c1_70 = arith.constant 1 : index
    %c0_71 = arith.constant 0 : index
    %91 = vector.load %arg9[%c13, %c1_70, %c0_71] : memref<16x16x32xf32, #tpu.memory_space<vmem>>, vector<1x14x32xf32>
    %92 = vector.shape_cast %91 : vector<1x14x32xf32> to vector<14x32xf32>
    %93 = vector.shape_cast %90 : vector<14x32xf32> to vector<1x14x32xf32>
    tpu.vector_store %arg9[%c13, %c1_70, %c0_71], %93 {strides = array<i32>} : memref<16x16x32xf32, #tpu.memory_space<vmem>>, vector<1x14x32xf32>,
    %c364 = arith.constant 364 : index
    %c0_72 = arith.constant 0 : index
    %94 = vector.load %arg8[%c364, %c0_72] : memref<392x32xf32, #tpu.memory_space<vmem>>, vector<14x32xf32>
    %c378 = arith.constant 378 : index
    %c0_73 = arith.constant 0 : index
    %95 = vector.load %arg8[%c378, %c0_73] : memref<392x32xf32, #tpu.memory_space<vmem>>, vector<14x32xf32>
    %96 = arith.maximumf %94, %95 : vector<14x32xf32>
    %c14_74 = arith.constant 14 : index
    %c1_75 = arith.constant 1 : index
    %c0_76 = arith.constant 0 : index
    %97 = vector.load %arg9[%c14_74, %c1_75, %c0_76] : memref<16x16x32xf32, #tpu.memory_space<vmem>>, vector<1x14x32xf32>
    %98 = vector.shape_cast %97 : vector<1x14x32xf32> to vector<14x32xf32>
    %99 = vector.shape_cast %96 : vector<14x32xf32> to vector<1x14x32xf32>
    tpu.vector_store %arg9[%c14_74, %c1_75, %c0_76], %99 {strides = array<i32>} : memref<16x16x32xf32, #tpu.memory_space<vmem>>, vector<1x14x32xf32>,
    %c0_77 = arith.constant 0 : index
    %c0_78 = arith.constant 0 : index
    %c0_79 = arith.constant 0 : index
    %100 = vector.load %arg9[%c0_77, %c0_78, %c0_79] : memref<16x16x32xf32, #tpu.memory_space<vmem>>, vector<1x14x32xf32>
    %101 = vector.shape_cast %100 : vector<1x14x32xf32> to vector<14x32xf32>
    %c0_80 = arith.constant 0 : index
    %c1_81 = arith.constant 1 : index
    %c0_82 = arith.constant 0 : index
    %102 = vector.load %arg9[%c0_80, %c1_81, %c0_82] : memref<16x16x32xf32, #tpu.memory_space<vmem>>, vector<1x14x32xf32>
    %103 = vector.shape_cast %102 : vector<1x14x32xf32> to vector<14x32xf32>
    %c0_83 = arith.constant 0 : index
    %c2_84 = arith.constant 2 : index
    %c0_85 = arith.constant 0 : index
    %104 = vector.load %arg9[%c0_83, %c2_84, %c0_85] : memref<16x16x32xf32, #tpu.memory_space<vmem>>, vector<1x14x32xf32>
    %105 = vector.shape_cast %104 : vector<1x14x32xf32> to vector<14x32xf32>
    %c1_86 = arith.constant 1 : index
    %c0_87 = arith.constant 0 : index
    %c0_88 = arith.constant 0 : index
    %106 = vector.load %arg9[%c1_86, %c0_87, %c0_88] : memref<16x16x32xf32, #tpu.memory_space<vmem>>, vector<1x14x32xf32>
    %107 = vector.shape_cast %106 : vector<1x14x32xf32> to vector<14x32xf32>
    %c1_89 = arith.constant 1 : index
    %c1_90 = arith.constant 1 : index
    %c0_91 = arith.constant 0 : index
    %108 = vector.load %arg9[%c1_89, %c1_90, %c0_91] : memref<16x16x32xf32, #tpu.memory_space<vmem>>, vector<1x14x32xf32>
    %109 = vector.shape_cast %108 : vector<1x14x32xf32> to vector<14x32xf32>
    %c1_92 = arith.constant 1 : index
    %c2_93 = arith.constant 2 : index
    %c0_94 = arith.constant 0 : index
    %110 = vector.load %arg9[%c1_92, %c2_93, %c0_94] : memref<16x16x32xf32, #tpu.memory_space<vmem>>, vector<1x14x32xf32>
    %111 = vector.shape_cast %110 : vector<1x14x32xf32> to vector<14x32xf32>
    %c2_95 = arith.constant 2 : index
    %c0_96 = arith.constant 0 : index
    %c0_97 = arith.constant 0 : index
    %112 = vector.load %arg9[%c2_95, %c0_96, %c0_97] : memref<16x16x32xf32, #tpu.memory_space<vmem>>, vector<1x14x32xf32>
    %113 = vector.shape_cast %112 : vector<1x14x32xf32> to vector<14x32xf32>
    %c2_98 = arith.constant 2 : index
    %c1_99 = arith.constant 1 : index
    %c0_100 = arith.constant 0 : index
    %114 = vector.load %arg9[%c2_98, %c1_99, %c0_100] : memref<16x16x32xf32, #tpu.memory_space<vmem>>, vector<1x14x32xf32>
    %115 = vector.shape_cast %114 : vector<1x14x32xf32> to vector<14x32xf32>
    %c2_101 = arith.constant 2 : index
    %c2_102 = arith.constant 2 : index
    %c0_103 = arith.constant 0 : index
    %116 = vector.load %arg9[%c2_101, %c2_102, %c0_103] : memref<16x16x32xf32, #tpu.memory_space<vmem>>, vector<1x14x32xf32>
    %117 = vector.shape_cast %116 : vector<1x14x32xf32> to vector<14x32xf32>
    %118 = tpu.concatenate %101, %103, %105, %107, %109, %111, %113, %115, %117 in 1 : vector<14x32xf32>, vector<14x32xf32>, vector<14x32xf32>, vector<14x32xf32>, vector<14x32xf32>, vector<14x32xf32>, vector<14x32xf32>, vector<14x32xf32>, vector<14x32xf32> -> vector<14x288xf32>
    %c0_104 = arith.constant 0 : index
    %c0_105 = arith.constant 0 : index
    %119 = vector.load %arg10[%c0_104, %c0_105] : memref<196x288xf32, #tpu.memory_space<vmem>>, vector<14x288xf32>
    tpu.vector_store %arg10[%c0_104, %c0_105], %118 {strides = array<i32>} : memref<196x288xf32, #tpu.memory_space<vmem>>, vector<14x288xf32>,
    %c1_106 = arith.constant 1 : index
    %c0_107 = arith.constant 0 : index
    %c0_108 = arith.constant 0 : index
    %120 = vector.load %arg9[%c1_106, %c0_107, %c0_108] : memref<16x16x32xf32, #tpu.memory_space<vmem>>, vector<1x14x32xf32>
    %121 = vector.shape_cast %120 : vector<1x14x32xf32> to vector<14x32xf32>
    %c1_109 = arith.constant 1 : index
    %c1_110 = arith.constant 1 : index
    %c0_111 = arith.constant 0 : index
    %122 = vector.load %arg9[%c1_109, %c1_110, %c0_111] : memref<16x16x32xf32, #tpu.memory_space<vmem>>, vector<1x14x32xf32>
    %123 = vector.shape_cast %122 : vector<1x14x32xf32> to vector<14x32xf32>
    %c1_112 = arith.constant 1 : index
    %c2_113 = arith.constant 2 : index
    %c0_114 = arith.constant 0 : index
    %124 = vector.load %arg9[%c1_112, %c2_113, %c0_114] : memref<16x16x32xf32, #tpu.memory_space<vmem>>, vector<1x14x32xf32>
    %125 = vector.shape_cast %124 : vector<1x14x32xf32> to vector<14x32xf32>
    %c2_115 = arith.constant 2 : index
    %c0_116 = arith.constant 0 : index
    %c0_117 = arith.constant 0 : index
    %126 = vector.load %arg9[%c2_115, %c0_116, %c0_117] : memref<16x16x32xf32, #tpu.memory_space<vmem>>, vector<1x14x32xf32>
    %127 = vector.shape_cast %126 : vector<1x14x32xf32> to vector<14x32xf32>
    %c2_118 = arith.constant 2 : index
    %c1_119 = arith.constant 1 : index
    %c0_120 = arith.constant 0 : index
    %128 = vector.load %arg9[%c2_118, %c1_119, %c0_120] : memref<16x16x32xf32, #tpu.memory_space<vmem>>, vector<1x14x32xf32>
    %129 = vector.shape_cast %128 : vector<1x14x32xf32> to vector<14x32xf32>
    %c2_121 = arith.constant 2 : index
    %c2_122 = arith.constant 2 : index
    %c0_123 = arith.constant 0 : index
    %130 = vector.load %arg9[%c2_121, %c2_122, %c0_123] : memref<16x16x32xf32, #tpu.memory_space<vmem>>, vector<1x14x32xf32>
    %131 = vector.shape_cast %130 : vector<1x14x32xf32> to vector<14x32xf32>
    %c3_124 = arith.constant 3 : index
    %c0_125 = arith.constant 0 : index
    %c0_126 = arith.constant 0 : index
    %132 = vector.load %arg9[%c3_124, %c0_125, %c0_126] : memref<16x16x32xf32, #tpu.memory_space<vmem>>, vector<1x14x32xf32>
    %133 = vector.shape_cast %132 : vector<1x14x32xf32> to vector<14x32xf32>
    %c3_127 = arith.constant 3 : index
    %c1_128 = arith.constant 1 : index
    %c0_129 = arith.constant 0 : index
    %134 = vector.load %arg9[%c3_127, %c1_128, %c0_129] : memref<16x16x32xf32, #tpu.memory_space<vmem>>, vector<1x14x32xf32>
    %135 = vector.shape_cast %134 : vector<1x14x32xf32> to vector<14x32xf32>
    %c3_130 = arith.constant 3 : index
    %c2_131 = arith.constant 2 : index
    %c0_132 = arith.constant 0 : index
    %136 = vector.load %arg9[%c3_130, %c2_131, %c0_132] : memref<16x16x32xf32, #tpu.memory_space<vmem>>, vector<1x14x32xf32>
    %137 = vector.shape_cast %136 : vector<1x14x32xf32> to vector<14x32xf32>
    %138 = tpu.concatenate %121, %123, %125, %127, %129, %131, %133, %135, %137 in 1 : vector<14x32xf32>, vector<14x32xf32>, vector<14x32xf32>, vector<14x32xf32>, vector<14x32xf32>, vector<14x32xf32>, vector<14x32xf32>, vector<14x32xf32>, vector<14x32xf32> -> vector<14x288xf32>
    %c14_133 = arith.constant 14 : index
    %c0_134 = arith.constant 0 : index
    %139 = vector.load %arg10[%c14_133, %c0_134] : memref<196x288xf32, #tpu.memory_space<vmem>>, vector<14x288xf32>
    tpu.vector_store %arg10[%c14_133, %c0_134], %138 {strides = array<i32>} : memref<196x288xf32, #tpu.memory_space<vmem>>, vector<14x288xf32>,
    %c2_135 = arith.constant 2 : index
    %c0_136 = arith.constant 0 : index
    %c0_137 = arith.constant 0 : index
    %140 = vector.load %arg9[%c2_135, %c0_136, %c0_137] : memref<16x16x32xf32, #tpu.memory_space<vmem>>, vector<1x14x32xf32>
    %141 = vector.shape_cast %140 : vector<1x14x32xf32> to vector<14x32xf32>
    %c2_138 = arith.constant 2 : index
    %c1_139 = arith.constant 1 : index
    %c0_140 = arith.constant 0 : index
    %142 = vector.load %arg9[%c2_138, %c1_139, %c0_140] : memref<16x16x32xf32, #tpu.memory_space<vmem>>, vector<1x14x32xf32>
    %143 = vector.shape_cast %142 : vector<1x14x32xf32> to vector<14x32xf32>
    %c2_141 = arith.constant 2 : index
    %c2_142 = arith.constant 2 : index
    %c0_143 = arith.constant 0 : index
    %144 = vector.load %arg9[%c2_141, %c2_142, %c0_143] : memref<16x16x32xf32, #tpu.memory_space<vmem>>, vector<1x14x32xf32>
    %145 = vector.shape_cast %144 : vector<1x14x32xf32> to vector<14x32xf32>
    %c3_144 = arith.constant 3 : index
    %c0_145 = arith.constant 0 : index
    %c0_146 = arith.constant 0 : index
    %146 = vector.load %arg9[%c3_144, %c0_145, %c0_146] : memref<16x16x32xf32, #tpu.memory_space<vmem>>, vector<1x14x32xf32>
    %147 = vector.shape_cast %146 : vector<1x14x32xf32> to vector<14x32xf32>
    %c3_147 = arith.constant 3 : index
    %c1_148 = arith.constant 1 : index
    %c0_149 = arith.constant 0 : index
    %148 = vector.load %arg9[%c3_147, %c1_148, %c0_149] : memref<16x16x32xf32, #tpu.memory_space<vmem>>, vector<1x14x32xf32>
    %149 = vector.shape_cast %148 : vector<1x14x32xf32> to vector<14x32xf32>
    %c3_150 = arith.constant 3 : index
    %c2_151 = arith.constant 2 : index
    %c0_152 = arith.constant 0 : index
    %150 = vector.load %arg9[%c3_150, %c2_151, %c0_152] : memref<16x16x32xf32, #tpu.memory_space<vmem>>, vector<1x14x32xf32>
    %151 = vector.shape_cast %150 : vector<1x14x32xf32> to vector<14x32xf32>
    %c4_153 = arith.constant 4 : index
    %c0_154 = arith.constant 0 : index
    %c0_155 = arith.constant 0 : index
    %152 = vector.load %arg9[%c4_153, %c0_154, %c0_155] : memref<16x16x32xf32, #tpu.memory_space<vmem>>, vector<1x14x32xf32>
    %153 = vector.shape_cast %152 : vector<1x14x32xf32> to vector<14x32xf32>
    %c4_156 = arith.constant 4 : index
    %c1_157 = arith.constant 1 : index
    %c0_158 = arith.constant 0 : index
    %154 = vector.load %arg9[%c4_156, %c1_157, %c0_158] : memref<16x16x32xf32, #tpu.memory_space<vmem>>, vector<1x14x32xf32>
    %155 = vector.shape_cast %154 : vector<1x14x32xf32> to vector<14x32xf32>
    %c4_159 = arith.constant 4 : index
    %c2_160 = arith.constant 2 : index
    %c0_161 = arith.constant 0 : index
    %156 = vector.load %arg9[%c4_159, %c2_160, %c0_161] : memref<16x16x32xf32, #tpu.memory_space<vmem>>, vector<1x14x32xf32>
    %157 = vector.shape_cast %156 : vector<1x14x32xf32> to vector<14x32xf32>
    %158 = tpu.concatenate %141, %143, %145, %147, %149, %151, %153, %155, %157 in 1 : vector<14x32xf32>, vector<14x32xf32>, vector<14x32xf32>, vector<14x32xf32>, vector<14x32xf32>, vector<14x32xf32>, vector<14x32xf32>, vector<14x32xf32>, vector<14x32xf32> -> vector<14x288xf32>
    %c28_162 = arith.constant 28 : index
    %c0_163 = arith.constant 0 : index
    %159 = vector.load %arg10[%c28_162, %c0_163] : memref<196x288xf32, #tpu.memory_space<vmem>>, vector<14x288xf32>
    tpu.vector_store %arg10[%c28_162, %c0_163], %158 {strides = array<i32>} : memref<196x288xf32, #tpu.memory_space<vmem>>, vector<14x288xf32>,
    %c3_164 = arith.constant 3 : index
    %c0_165 = arith.constant 0 : index
    %c0_166 = arith.constant 0 : index
    %160 = vector.load %arg9[%c3_164, %c0_165, %c0_166] : memref<16x16x32xf32, #tpu.memory_space<vmem>>, vector<1x14x32xf32>
    %161 = vector.shape_cast %160 : vector<1x14x32xf32> to vector<14x32xf32>
    %c3_167 = arith.constant 3 : index
    %c1_168 = arith.constant 1 : index
    %c0_169 = arith.constant 0 : index
    %162 = vector.load %arg9[%c3_167, %c1_168, %c0_169] : memref<16x16x32xf32, #tpu.memory_space<vmem>>, vector<1x14x32xf32>
    %163 = vector.shape_cast %162 : vector<1x14x32xf32> to vector<14x32xf32>
    %c3_170 = arith.constant 3 : index
    %c2_171 = arith.constant 2 : index
    %c0_172 = arith.constant 0 : index
    %164 = vector.load %arg9[%c3_170, %c2_171, %c0_172] : memref<16x16x32xf32, #tpu.memory_space<vmem>>, vector<1x14x32xf32>
    %165 = vector.shape_cast %164 : vector<1x14x32xf32> to vector<14x32xf32>
    %c4_173 = arith.constant 4 : index
    %c0_174 = arith.constant 0 : index
    %c0_175 = arith.constant 0 : index
    %166 = vector.load %arg9[%c4_173, %c0_174, %c0_175] : memref<16x16x32xf32, #tpu.memory_space<vmem>>, vector<1x14x32xf32>
    %167 = vector.shape_cast %166 : vector<1x14x32xf32> to vector<14x32xf32>
    %c4_176 = arith.constant 4 : index
    %c1_177 = arith.constant 1 : index
    %c0_178 = arith.constant 0 : index
    %168 = vector.load %arg9[%c4_176, %c1_177, %c0_178] : memref<16x16x32xf32, #tpu.memory_space<vmem>>, vector<1x14x32xf32>
    %169 = vector.shape_cast %168 : vector<1x14x32xf32> to vector<14x32xf32>
    %c4_179 = arith.constant 4 : index
    %c2_180 = arith.constant 2 : index
    %c0_181 = arith.constant 0 : index
    %170 = vector.load %arg9[%c4_179, %c2_180, %c0_181] : memref<16x16x32xf32, #tpu.memory_space<vmem>>, vector<1x14x32xf32>
    %171 = vector.shape_cast %170 : vector<1x14x32xf32> to vector<14x32xf32>
    %c5_182 = arith.constant 5 : index
    %c0_183 = arith.constant 0 : index
    %c0_184 = arith.constant 0 : index
    %172 = vector.load %arg9[%c5_182, %c0_183, %c0_184] : memref<16x16x32xf32, #tpu.memory_space<vmem>>, vector<1x14x32xf32>
    %173 = vector.shape_cast %172 : vector<1x14x32xf32> to vector<14x32xf32>
    %c5_185 = arith.constant 5 : index
    %c1_186 = arith.constant 1 : index
    %c0_187 = arith.constant 0 : index
    %174 = vector.load %arg9[%c5_185, %c1_186, %c0_187] : memref<16x16x32xf32, #tpu.memory_space<vmem>>, vector<1x14x32xf32>
    %175 = vector.shape_cast %174 : vector<1x14x32xf32> to vector<14x32xf32>
    %c5_188 = arith.constant 5 : index
    %c2_189 = arith.constant 2 : index
    %c0_190 = arith.constant 0 : index
    %176 = vector.load %arg9[%c5_188, %c2_189, %c0_190] : memref<16x16x32xf32, #tpu.memory_space<vmem>>, vector<1x14x32xf32>
    %177 = vector.shape_cast %176 : vector<1x14x32xf32> to vector<14x32xf32>
    %178 = tpu.concatenate %161, %163, %165, %167, %169, %171, %173, %175, %177 in 1 : vector<14x32xf32>, vector<14x32xf32>, vector<14x32xf32>, vector<14x32xf32>, vector<14x32xf32>, vector<14x32xf32>, vector<14x32xf32>, vector<14x32xf32>, vector<14x32xf32> -> vector<14x288xf32>
    %c42_191 = arith.constant 42 : index
    %c0_192 = arith.constant 0 : index
    %179 = vector.load %arg10[%c42_191, %c0_192] : memref<196x288xf32, #tpu.memory_space<vmem>>, vector<14x288xf32>
    tpu.vector_store %arg10[%c42_191, %c0_192], %178 {strides = array<i32>} : memref<196x288xf32, #tpu.memory_space<vmem>>, vector<14x288xf32>,
    %c4_193 = arith.constant 4 : index
    %c0_194 = arith.constant 0 : index
    %c0_195 = arith.constant 0 : index
    %180 = vector.load %arg9[%c4_193, %c0_194, %c0_195] : memref<16x16x32xf32, #tpu.memory_space<vmem>>, vector<1x14x32xf32>
    %181 = vector.shape_cast %180 : vector<1x14x32xf32> to vector<14x32xf32>
    %c4_196 = arith.constant 4 : index
    %c1_197 = arith.constant 1 : index
    %c0_198 = arith.constant 0 : index
    %182 = vector.load %arg9[%c4_196, %c1_197, %c0_198] : memref<16x16x32xf32, #tpu.memory_space<vmem>>, vector<1x14x32xf32>
    %183 = vector.shape_cast %182 : vector<1x14x32xf32> to vector<14x32xf32>
    %c4_199 = arith.constant 4 : index
    %c2_200 = arith.constant 2 : index
    %c0_201 = arith.constant 0 : index
    %184 = vector.load %arg9[%c4_199, %c2_200, %c0_201] : memref<16x16x32xf32, #tpu.memory_space<vmem>>, vector<1x14x32xf32>
    %185 = vector.shape_cast %184 : vector<1x14x32xf32> to vector<14x32xf32>
    %c5_202 = arith.constant 5 : index
    %c0_203 = arith.constant 0 : index
    %c0_204 = arith.constant 0 : index
    %186 = vector.load %arg9[%c5_202, %c0_203, %c0_204] : memref<16x16x32xf32, #tpu.memory_space<vmem>>, vector<1x14x32xf32>
    %187 = vector.shape_cast %186 : vector<1x14x32xf32> to vector<14x32xf32>
    %c5_205 = arith.constant 5 : index
    %c1_206 = arith.constant 1 : index
    %c0_207 = arith.constant 0 : index
    %188 = vector.load %arg9[%c5_205, %c1_206, %c0_207] : memref<16x16x32xf32, #tpu.memory_space<vmem>>, vector<1x14x32xf32>
    %189 = vector.shape_cast %188 : vector<1x14x32xf32> to vector<14x32xf32>
    %c5_208 = arith.constant 5 : index
    %c2_209 = arith.constant 2 : index
    %c0_210 = arith.constant 0 : index
    %190 = vector.load %arg9[%c5_208, %c2_209, %c0_210] : memref<16x16x32xf32, #tpu.memory_space<vmem>>, vector<1x14x32xf32>
    %191 = vector.shape_cast %190 : vector<1x14x32xf32> to vector<14x32xf32>
    %c6_211 = arith.constant 6 : index
    %c0_212 = arith.constant 0 : index
    %c0_213 = arith.constant 0 : index
    %192 = vector.load %arg9[%c6_211, %c0_212, %c0_213] : memref<16x16x32xf32, #tpu.memory_space<vmem>>, vector<1x14x32xf32>
    %193 = vector.shape_cast %192 : vector<1x14x32xf32> to vector<14x32xf32>
    %c6_214 = arith.constant 6 : index
    %c1_215 = arith.constant 1 : index
    %c0_216 = arith.constant 0 : index
    %194 = vector.load %arg9[%c6_214, %c1_215, %c0_216] : memref<16x16x32xf32, #tpu.memory_space<vmem>>, vector<1x14x32xf32>
    %195 = vector.shape_cast %194 : vector<1x14x32xf32> to vector<14x32xf32>
    %c6_217 = arith.constant 6 : index
    %c2_218 = arith.constant 2 : index
    %c0_219 = arith.constant 0 : index
    %196 = vector.load %arg9[%c6_217, %c2_218, %c0_219] : memref<16x16x32xf32, #tpu.memory_space<vmem>>, vector<1x14x32xf32>
    %197 = vector.shape_cast %196 : vector<1x14x32xf32> to vector<14x32xf32>
    %198 = tpu.concatenate %181, %183, %185, %187, %189, %191, %193, %195, %197 in 1 : vector<14x32xf32>, vector<14x32xf32>, vector<14x32xf32>, vector<14x32xf32>, vector<14x32xf32>, vector<14x32xf32>, vector<14x32xf32>, vector<14x32xf32>, vector<14x32xf32> -> vector<14x288xf32>
    %c56_220 = arith.constant 56 : index
    %c0_221 = arith.constant 0 : index
    %199 = vector.load %arg10[%c56_220, %c0_221] : memref<196x288xf32, #tpu.memory_space<vmem>>, vector<14x288xf32>
    tpu.vector_store %arg10[%c56_220, %c0_221], %198 {strides = array<i32>} : memref<196x288xf32, #tpu.memory_space<vmem>>, vector<14x288xf32>,
    %c5_222 = arith.constant 5 : index
    %c0_223 = arith.constant 0 : index
    %c0_224 = arith.constant 0 : index
    %200 = vector.load %arg9[%c5_222, %c0_223, %c0_224] : memref<16x16x32xf32, #tpu.memory_space<vmem>>, vector<1x14x32xf32>
    %201 = vector.shape_cast %200 : vector<1x14x32xf32> to vector<14x32xf32>
    %c5_225 = arith.constant 5 : index
    %c1_226 = arith.constant 1 : index
    %c0_227 = arith.constant 0 : index
    %202 = vector.load %arg9[%c5_225, %c1_226, %c0_227] : memref<16x16x32xf32, #tpu.memory_space<vmem>>, vector<1x14x32xf32>
    %203 = vector.shape_cast %202 : vector<1x14x32xf32> to vector<14x32xf32>
    %c5_228 = arith.constant 5 : index
    %c2_229 = arith.constant 2 : index
    %c0_230 = arith.constant 0 : index
    %204 = vector.load %arg9[%c5_228, %c2_229, %c0_230] : memref<16x16x32xf32, #tpu.memory_space<vmem>>, vector<1x14x32xf32>
    %205 = vector.shape_cast %204 : vector<1x14x32xf32> to vector<14x32xf32>
    %c6_231 = arith.constant 6 : index
    %c0_232 = arith.constant 0 : index
    %c0_233 = arith.constant 0 : index
    %206 = vector.load %arg9[%c6_231, %c0_232, %c0_233] : memref<16x16x32xf32, #tpu.memory_space<vmem>>, vector<1x14x32xf32>
    %207 = vector.shape_cast %206 : vector<1x14x32xf32> to vector<14x32xf32>
    %c6_234 = arith.constant 6 : index
    %c1_235 = arith.constant 1 : index
    %c0_236 = arith.constant 0 : index
    %208 = vector.load %arg9[%c6_234, %c1_235, %c0_236] : memref<16x16x32xf32, #tpu.memory_space<vmem>>, vector<1x14x32xf32>
    %209 = vector.shape_cast %208 : vector<1x14x32xf32> to vector<14x32xf32>
    %c6_237 = arith.constant 6 : index
    %c2_238 = arith.constant 2 : index
    %c0_239 = arith.constant 0 : index
    %210 = vector.load %arg9[%c6_237, %c2_238, %c0_239] : memref<16x16x32xf32, #tpu.memory_space<vmem>>, vector<1x14x32xf32>
    %211 = vector.shape_cast %210 : vector<1x14x32xf32> to vector<14x32xf32>
    %c7_240 = arith.constant 7 : index
    %c0_241 = arith.constant 0 : index
    %c0_242 = arith.constant 0 : index
    %212 = vector.load %arg9[%c7_240, %c0_241, %c0_242] : memref<16x16x32xf32, #tpu.memory_space<vmem>>, vector<1x14x32xf32>
    %213 = vector.shape_cast %212 : vector<1x14x32xf32> to vector<14x32xf32>
    %c7_243 = arith.constant 7 : index
    %c1_244 = arith.constant 1 : index
    %c0_245 = arith.constant 0 : index
    %214 = vector.load %arg9[%c7_243, %c1_244, %c0_245] : memref<16x16x32xf32, #tpu.memory_space<vmem>>, vector<1x14x32xf32>
    %215 = vector.shape_cast %214 : vector<1x14x32xf32> to vector<14x32xf32>
    %c7_246 = arith.constant 7 : index
    %c2_247 = arith.constant 2 : index
    %c0_248 = arith.constant 0 : index
    %216 = vector.load %arg9[%c7_246, %c2_247, %c0_248] : memref<16x16x32xf32, #tpu.memory_space<vmem>>, vector<1x14x32xf32>
    %217 = vector.shape_cast %216 : vector<1x14x32xf32> to vector<14x32xf32>
    %218 = tpu.concatenate %201, %203, %205, %207, %209, %211, %213, %215, %217 in 1 : vector<14x32xf32>, vector<14x32xf32>, vector<14x32xf32>, vector<14x32xf32>, vector<14x32xf32>, vector<14x32xf32>, vector<14x32xf32>, vector<14x32xf32>, vector<14x32xf32> -> vector<14x288xf32>
    %c70_249 = arith.constant 70 : index
    %c0_250 = arith.constant 0 : index
    %219 = vector.load %arg10[%c70_249, %c0_250] : memref<196x288xf32, #tpu.memory_space<vmem>>, vector<14x288xf32>
    tpu.vector_store %arg10[%c70_249, %c0_250], %218 {strides = array<i32>} : memref<196x288xf32, #tpu.memory_space<vmem>>, vector<14x288xf32>,
    %c6_251 = arith.constant 6 : index
    %c0_252 = arith.constant 0 : index
    %c0_253 = arith.constant 0 : index
    %220 = vector.load %arg9[%c6_251, %c0_252, %c0_253] : memref<16x16x32xf32, #tpu.memory_space<vmem>>, vector<1x14x32xf32>
    %221 = vector.shape_cast %220 : vector<1x14x32xf32> to vector<14x32xf32>
    %c6_254 = arith.constant 6 : index
    %c1_255 = arith.constant 1 : index
    %c0_256 = arith.constant 0 : index
    %222 = vector.load %arg9[%c6_254, %c1_255, %c0_256] : memref<16x16x32xf32, #tpu.memory_space<vmem>>, vector<1x14x32xf32>
    %223 = vector.shape_cast %222 : vector<1x14x32xf32> to vector<14x32xf32>
    %c6_257 = arith.constant 6 : index
    %c2_258 = arith.constant 2 : index
    %c0_259 = arith.constant 0 : index
    %224 = vector.load %arg9[%c6_257, %c2_258, %c0_259] : memref<16x16x32xf32, #tpu.memory_space<vmem>>, vector<1x14x32xf32>
    %225 = vector.shape_cast %224 : vector<1x14x32xf32> to vector<14x32xf32>
    %c7_260 = arith.constant 7 : index
    %c0_261 = arith.constant 0 : index
    %c0_262 = arith.constant 0 : index
    %226 = vector.load %arg9[%c7_260, %c0_261, %c0_262] : memref<16x16x32xf32, #tpu.memory_space<vmem>>, vector<1x14x32xf32>
    %227 = vector.shape_cast %226 : vector<1x14x32xf32> to vector<14x32xf32>
    %c7_263 = arith.constant 7 : index
    %c1_264 = arith.constant 1 : index
    %c0_265 = arith.constant 0 : index
    %228 = vector.load %arg9[%c7_263, %c1_264, %c0_265] : memref<16x16x32xf32, #tpu.memory_space<vmem>>, vector<1x14x32xf32>
    %229 = vector.shape_cast %228 : vector<1x14x32xf32> to vector<14x32xf32>
    %c7_266 = arith.constant 7 : index
    %c2_267 = arith.constant 2 : index
    %c0_268 = arith.constant 0 : index
    %230 = vector.load %arg9[%c7_266, %c2_267, %c0_268] : memref<16x16x32xf32, #tpu.memory_space<vmem>>, vector<1x14x32xf32>
    %231 = vector.shape_cast %230 : vector<1x14x32xf32> to vector<14x32xf32>
    %c8_269 = arith.constant 8 : index
    %c0_270 = arith.constant 0 : index
    %c0_271 = arith.constant 0 : index
    %232 = vector.load %arg9[%c8_269, %c0_270, %c0_271] : memref<16x16x32xf32, #tpu.memory_space<vmem>>, vector<1x14x32xf32>
    %233 = vector.shape_cast %232 : vector<1x14x32xf32> to vector<14x32xf32>
    %c8_272 = arith.constant 8 : index
    %c1_273 = arith.constant 1 : index
    %c0_274 = arith.constant 0 : index
    %234 = vector.load %arg9[%c8_272, %c1_273, %c0_274] : memref<16x16x32xf32, #tpu.memory_space<vmem>>, vector<1x14x32xf32>
    %235 = vector.shape_cast %234 : vector<1x14x32xf32> to vector<14x32xf32>
    %c8_275 = arith.constant 8 : index
    %c2_276 = arith.constant 2 : index
    %c0_277 = arith.constant 0 : index
    %236 = vector.load %arg9[%c8_275, %c2_276, %c0_277] : memref<16x16x32xf32, #tpu.memory_space<vmem>>, vector<1x14x32xf32>
    %237 = vector.shape_cast %236 : vector<1x14x32xf32> to vector<14x32xf32>
    %238 = tpu.concatenate %221, %223, %225, %227, %229, %231, %233, %235, %237 in 1 : vector<14x32xf32>, vector<14x32xf32>, vector<14x32xf32>, vector<14x32xf32>, vector<14x32xf32>, vector<14x32xf32>, vector<14x32xf32>, vector<14x32xf32>, vector<14x32xf32> -> vector<14x288xf32>
    %c84_278 = arith.constant 84 : index
    %c0_279 = arith.constant 0 : index
    %239 = vector.load %arg10[%c84_278, %c0_279] : memref<196x288xf32, #tpu.memory_space<vmem>>, vector<14x288xf32>
    tpu.vector_store %arg10[%c84_278, %c0_279], %238 {strides = array<i32>} : memref<196x288xf32, #tpu.memory_space<vmem>>, vector<14x288xf32>,
    %c7_280 = arith.constant 7 : index
    %c0_281 = arith.constant 0 : index
    %c0_282 = arith.constant 0 : index
    %240 = vector.load %arg9[%c7_280, %c0_281, %c0_282] : memref<16x16x32xf32, #tpu.memory_space<vmem>>, vector<1x14x32xf32>
    %241 = vector.shape_cast %240 : vector<1x14x32xf32> to vector<14x32xf32>
    %c7_283 = arith.constant 7 : index
    %c1_284 = arith.constant 1 : index
    %c0_285 = arith.constant 0 : index
    %242 = vector.load %arg9[%c7_283, %c1_284, %c0_285] : memref<16x16x32xf32, #tpu.memory_space<vmem>>, vector<1x14x32xf32>
    %243 = vector.shape_cast %242 : vector<1x14x32xf32> to vector<14x32xf32>
    %c7_286 = arith.constant 7 : index
    %c2_287 = arith.constant 2 : index
    %c0_288 = arith.constant 0 : index
    %244 = vector.load %arg9[%c7_286, %c2_287, %c0_288] : memref<16x16x32xf32, #tpu.memory_space<vmem>>, vector<1x14x32xf32>
    %245 = vector.shape_cast %244 : vector<1x14x32xf32> to vector<14x32xf32>
    %c8_289 = arith.constant 8 : index
    %c0_290 = arith.constant 0 : index
    %c0_291 = arith.constant 0 : index
    %246 = vector.load %arg9[%c8_289, %c0_290, %c0_291] : memref<16x16x32xf32, #tpu.memory_space<vmem>>, vector<1x14x32xf32>
    %247 = vector.shape_cast %246 : vector<1x14x32xf32> to vector<14x32xf32>
    %c8_292 = arith.constant 8 : index
    %c1_293 = arith.constant 1 : index
    %c0_294 = arith.constant 0 : index
    %248 = vector.load %arg9[%c8_292, %c1_293, %c0_294] : memref<16x16x32xf32, #tpu.memory_space<vmem>>, vector<1x14x32xf32>
    %249 = vector.shape_cast %248 : vector<1x14x32xf32> to vector<14x32xf32>
    %c8_295 = arith.constant 8 : index
    %c2_296 = arith.constant 2 : index
    %c0_297 = arith.constant 0 : index
    %250 = vector.load %arg9[%c8_295, %c2_296, %c0_297] : memref<16x16x32xf32, #tpu.memory_space<vmem>>, vector<1x14x32xf32>
    %251 = vector.shape_cast %250 : vector<1x14x32xf32> to vector<14x32xf32>
    %c9_298 = arith.constant 9 : index
    %c0_299 = arith.constant 0 : index
    %c0_300 = arith.constant 0 : index
    %252 = vector.load %arg9[%c9_298, %c0_299, %c0_300] : memref<16x16x32xf32, #tpu.memory_space<vmem>>, vector<1x14x32xf32>
    %253 = vector.shape_cast %252 : vector<1x14x32xf32> to vector<14x32xf32>
    %c9_301 = arith.constant 9 : index
    %c1_302 = arith.constant 1 : index
    %c0_303 = arith.constant 0 : index
    %254 = vector.load %arg9[%c9_301, %c1_302, %c0_303] : memref<16x16x32xf32, #tpu.memory_space<vmem>>, vector<1x14x32xf32>
    %255 = vector.shape_cast %254 : vector<1x14x32xf32> to vector<14x32xf32>
    %c9_304 = arith.constant 9 : index
    %c2_305 = arith.constant 2 : index
    %c0_306 = arith.constant 0 : index
    %256 = vector.load %arg9[%c9_304, %c2_305, %c0_306] : memref<16x16x32xf32, #tpu.memory_space<vmem>>, vector<1x14x32xf32>
    %257 = vector.shape_cast %256 : vector<1x14x32xf32> to vector<14x32xf32>
    %258 = tpu.concatenate %241, %243, %245, %247, %249, %251, %253, %255, %257 in 1 : vector<14x32xf32>, vector<14x32xf32>, vector<14x32xf32>, vector<14x32xf32>, vector<14x32xf32>, vector<14x32xf32>, vector<14x32xf32>, vector<14x32xf32>, vector<14x32xf32> -> vector<14x288xf32>
    %c98_307 = arith.constant 98 : index
    %c0_308 = arith.constant 0 : index
    %259 = vector.load %arg10[%c98_307, %c0_308] : memref<196x288xf32, #tpu.memory_space<vmem>>, vector<14x288xf32>
    tpu.vector_store %arg10[%c98_307, %c0_308], %258 {strides = array<i32>} : memref<196x288xf32, #tpu.memory_space<vmem>>, vector<14x288xf32>,
    %c8_309 = arith.constant 8 : index
    %c0_310 = arith.constant 0 : index
    %c0_311 = arith.constant 0 : index
    %260 = vector.load %arg9[%c8_309, %c0_310, %c0_311] : memref<16x16x32xf32, #tpu.memory_space<vmem>>, vector<1x14x32xf32>
    %261 = vector.shape_cast %260 : vector<1x14x32xf32> to vector<14x32xf32>
    %c8_312 = arith.constant 8 : index
    %c1_313 = arith.constant 1 : index
    %c0_314 = arith.constant 0 : index
    %262 = vector.load %arg9[%c8_312, %c1_313, %c0_314] : memref<16x16x32xf32, #tpu.memory_space<vmem>>, vector<1x14x32xf32>
    %263 = vector.shape_cast %262 : vector<1x14x32xf32> to vector<14x32xf32>
    %c8_315 = arith.constant 8 : index
    %c2_316 = arith.constant 2 : index
    %c0_317 = arith.constant 0 : index
    %264 = vector.load %arg9[%c8_315, %c2_316, %c0_317] : memref<16x16x32xf32, #tpu.memory_space<vmem>>, vector<1x14x32xf32>
    %265 = vector.shape_cast %264 : vector<1x14x32xf32> to vector<14x32xf32>
    %c9_318 = arith.constant 9 : index
    %c0_319 = arith.constant 0 : index
    %c0_320 = arith.constant 0 : index
    %266 = vector.load %arg9[%c9_318, %c0_319, %c0_320] : memref<16x16x32xf32, #tpu.memory_space<vmem>>, vector<1x14x32xf32>
    %267 = vector.shape_cast %266 : vector<1x14x32xf32> to vector<14x32xf32>
    %c9_321 = arith.constant 9 : index
    %c1_322 = arith.constant 1 : index
    %c0_323 = arith.constant 0 : index
    %268 = vector.load %arg9[%c9_321, %c1_322, %c0_323] : memref<16x16x32xf32, #tpu.memory_space<vmem>>, vector<1x14x32xf32>
    %269 = vector.shape_cast %268 : vector<1x14x32xf32> to vector<14x32xf32>
    %c9_324 = arith.constant 9 : index
    %c2_325 = arith.constant 2 : index
    %c0_326 = arith.constant 0 : index
    %270 = vector.load %arg9[%c9_324, %c2_325, %c0_326] : memref<16x16x32xf32, #tpu.memory_space<vmem>>, vector<1x14x32xf32>
    %271 = vector.shape_cast %270 : vector<1x14x32xf32> to vector<14x32xf32>
    %c10_327 = arith.constant 10 : index
    %c0_328 = arith.constant 0 : index
    %c0_329 = arith.constant 0 : index
    %272 = vector.load %arg9[%c10_327, %c0_328, %c0_329] : memref<16x16x32xf32, #tpu.memory_space<vmem>>, vector<1x14x32xf32>
    %273 = vector.shape_cast %272 : vector<1x14x32xf32> to vector<14x32xf32>
    %c10_330 = arith.constant 10 : index
    %c1_331 = arith.constant 1 : index
    %c0_332 = arith.constant 0 : index
    %274 = vector.load %arg9[%c10_330, %c1_331, %c0_332] : memref<16x16x32xf32, #tpu.memory_space<vmem>>, vector<1x14x32xf32>
    %275 = vector.shape_cast %274 : vector<1x14x32xf32> to vector<14x32xf32>
    %c10_333 = arith.constant 10 : index
    %c2_334 = arith.constant 2 : index
    %c0_335 = arith.constant 0 : index
    %276 = vector.load %arg9[%c10_333, %c2_334, %c0_335] : memref<16x16x32xf32, #tpu.memory_space<vmem>>, vector<1x14x32xf32>
    %277 = vector.shape_cast %276 : vector<1x14x32xf32> to vector<14x32xf32>
    %278 = tpu.concatenate %261, %263, %265, %267, %269, %271, %273, %275, %277 in 1 : vector<14x32xf32>, vector<14x32xf32>, vector<14x32xf32>, vector<14x32xf32>, vector<14x32xf32>, vector<14x32xf32>, vector<14x32xf32>, vector<14x32xf32>, vector<14x32xf32> -> vector<14x288xf32>
    %c112_336 = arith.constant 112 : index
    %c0_337 = arith.constant 0 : index
    %279 = vector.load %arg10[%c112_336, %c0_337] : memref<196x288xf32, #tpu.memory_space<vmem>>, vector<14x288xf32>
    tpu.vector_store %arg10[%c112_336, %c0_337], %278 {strides = array<i32>} : memref<196x288xf32, #tpu.memory_space<vmem>>, vector<14x288xf32>,
    %c9_338 = arith.constant 9 : index
    %c0_339 = arith.constant 0 : index
    %c0_340 = arith.constant 0 : index
    %280 = vector.load %arg9[%c9_338, %c0_339, %c0_340] : memref<16x16x32xf32, #tpu.memory_space<vmem>>, vector<1x14x32xf32>
    %281 = vector.shape_cast %280 : vector<1x14x32xf32> to vector<14x32xf32>
    %c9_341 = arith.constant 9 : index
    %c1_342 = arith.constant 1 : index
    %c0_343 = arith.constant 0 : index
    %282 = vector.load %arg9[%c9_341, %c1_342, %c0_343] : memref<16x16x32xf32, #tpu.memory_space<vmem>>, vector<1x14x32xf32>
    %283 = vector.shape_cast %282 : vector<1x14x32xf32> to vector<14x32xf32>
    %c9_344 = arith.constant 9 : index
    %c2_345 = arith.constant 2 : index
    %c0_346 = arith.constant 0 : index
    %284 = vector.load %arg9[%c9_344, %c2_345, %c0_346] : memref<16x16x32xf32, #tpu.memory_space<vmem>>, vector<1x14x32xf32>
    %285 = vector.shape_cast %284 : vector<1x14x32xf32> to vector<14x32xf32>
    %c10_347 = arith.constant 10 : index
    %c0_348 = arith.constant 0 : index
    %c0_349 = arith.constant 0 : index
    %286 = vector.load %arg9[%c10_347, %c0_348, %c0_349] : memref<16x16x32xf32, #tpu.memory_space<vmem>>, vector<1x14x32xf32>
    %287 = vector.shape_cast %286 : vector<1x14x32xf32> to vector<14x32xf32>
    %c10_350 = arith.constant 10 : index
    %c1_351 = arith.constant 1 : index
    %c0_352 = arith.constant 0 : index
    %288 = vector.load %arg9[%c10_350, %c1_351, %c0_352] : memref<16x16x32xf32, #tpu.memory_space<vmem>>, vector<1x14x32xf32>
    %289 = vector.shape_cast %288 : vector<1x14x32xf32> to vector<14x32xf32>
    %c10_353 = arith.constant 10 : index
    %c2_354 = arith.constant 2 : index
    %c0_355 = arith.constant 0 : index
    %290 = vector.load %arg9[%c10_353, %c2_354, %c0_355] : memref<16x16x32xf32, #tpu.memory_space<vmem>>, vector<1x14x32xf32>
    %291 = vector.shape_cast %290 : vector<1x14x32xf32> to vector<14x32xf32>
    %c11_356 = arith.constant 11 : index
    %c0_357 = arith.constant 0 : index
    %c0_358 = arith.constant 0 : index
    %292 = vector.load %arg9[%c11_356, %c0_357, %c0_358] : memref<16x16x32xf32, #tpu.memory_space<vmem>>, vector<1x14x32xf32>
    %293 = vector.shape_cast %292 : vector<1x14x32xf32> to vector<14x32xf32>
    %c11_359 = arith.constant 11 : index
    %c1_360 = arith.constant 1 : index
    %c0_361 = arith.constant 0 : index
    %294 = vector.load %arg9[%c11_359, %c1_360, %c0_361] : memref<16x16x32xf32, #tpu.memory_space<vmem>>, vector<1x14x32xf32>
    %295 = vector.shape_cast %294 : vector<1x14x32xf32> to vector<14x32xf32>
    %c11_362 = arith.constant 11 : index
    %c2_363 = arith.constant 2 : index
    %c0_364 = arith.constant 0 : index
    %296 = vector.load %arg9[%c11_362, %c2_363, %c0_364] : memref<16x16x32xf32, #tpu.memory_space<vmem>>, vector<1x14x32xf32>
    %297 = vector.shape_cast %296 : vector<1x14x32xf32> to vector<14x32xf32>
    %298 = tpu.concatenate %281, %283, %285, %287, %289, %291, %293, %295, %297 in 1 : vector<14x32xf32>, vector<14x32xf32>, vector<14x32xf32>, vector<14x32xf32>, vector<14x32xf32>, vector<14x32xf32>, vector<14x32xf32>, vector<14x32xf32>, vector<14x32xf32> -> vector<14x288xf32>
    %c126_365 = arith.constant 126 : index
    %c0_366 = arith.constant 0 : index
    %299 = vector.load %arg10[%c126_365, %c0_366] : memref<196x288xf32, #tpu.memory_space<vmem>>, vector<14x288xf32>
    tpu.vector_store %arg10[%c126_365, %c0_366], %298 {strides = array<i32>} : memref<196x288xf32, #tpu.memory_space<vmem>>, vector<14x288xf32>,
    %c10_367 = arith.constant 10 : index
    %c0_368 = arith.constant 0 : index
    %c0_369 = arith.constant 0 : index
    %300 = vector.load %arg9[%c10_367, %c0_368, %c0_369] : memref<16x16x32xf32, #tpu.memory_space<vmem>>, vector<1x14x32xf32>
    %301 = vector.shape_cast %300 : vector<1x14x32xf32> to vector<14x32xf32>
    %c10_370 = arith.constant 10 : index
    %c1_371 = arith.constant 1 : index
    %c0_372 = arith.constant 0 : index
    %302 = vector.load %arg9[%c10_370, %c1_371, %c0_372] : memref<16x16x32xf32, #tpu.memory_space<vmem>>, vector<1x14x32xf32>
    %303 = vector.shape_cast %302 : vector<1x14x32xf32> to vector<14x32xf32>
    %c10_373 = arith.constant 10 : index
    %c2_374 = arith.constant 2 : index
    %c0_375 = arith.constant 0 : index
    %304 = vector.load %arg9[%c10_373, %c2_374, %c0_375] : memref<16x16x32xf32, #tpu.memory_space<vmem>>, vector<1x14x32xf32>
    %305 = vector.shape_cast %304 : vector<1x14x32xf32> to vector<14x32xf32>
    %c11_376 = arith.constant 11 : index
    %c0_377 = arith.constant 0 : index
    %c0_378 = arith.constant 0 : index
    %306 = vector.load %arg9[%c11_376, %c0_377, %c0_378] : memref<16x16x32xf32, #tpu.memory_space<vmem>>, vector<1x14x32xf32>
    %307 = vector.shape_cast %306 : vector<1x14x32xf32> to vector<14x32xf32>
    %c11_379 = arith.constant 11 : index
    %c1_380 = arith.constant 1 : index
    %c0_381 = arith.constant 0 : index
    %308 = vector.load %arg9[%c11_379, %c1_380, %c0_381] : memref<16x16x32xf32, #tpu.memory_space<vmem>>, vector<1x14x32xf32>
    %309 = vector.shape_cast %308 : vector<1x14x32xf32> to vector<14x32xf32>
    %c11_382 = arith.constant 11 : index
    %c2_383 = arith.constant 2 : index
    %c0_384 = arith.constant 0 : index
    %310 = vector.load %arg9[%c11_382, %c2_383, %c0_384] : memref<16x16x32xf32, #tpu.memory_space<vmem>>, vector<1x14x32xf32>
    %311 = vector.shape_cast %310 : vector<1x14x32xf32> to vector<14x32xf32>
    %c12_385 = arith.constant 12 : index
    %c0_386 = arith.constant 0 : index
    %c0_387 = arith.constant 0 : index
    %312 = vector.load %arg9[%c12_385, %c0_386, %c0_387] : memref<16x16x32xf32, #tpu.memory_space<vmem>>, vector<1x14x32xf32>
    %313 = vector.shape_cast %312 : vector<1x14x32xf32> to vector<14x32xf32>
    %c12_388 = arith.constant 12 : index
    %c1_389 = arith.constant 1 : index
    %c0_390 = arith.constant 0 : index
    %314 = vector.load %arg9[%c12_388, %c1_389, %c0_390] : memref<16x16x32xf32, #tpu.memory_space<vmem>>, vector<1x14x32xf32>
    %315 = vector.shape_cast %314 : vector<1x14x32xf32> to vector<14x32xf32>
    %c12_391 = arith.constant 12 : index
    %c2_392 = arith.constant 2 : index
    %c0_393 = arith.constant 0 : index
    %316 = vector.load %arg9[%c12_391, %c2_392, %c0_393] : memref<16x16x32xf32, #tpu.memory_space<vmem>>, vector<1x14x32xf32>
    %317 = vector.shape_cast %316 : vector<1x14x32xf32> to vector<14x32xf32>
    %318 = tpu.concatenate %301, %303, %305, %307, %309, %311, %313, %315, %317 in 1 : vector<14x32xf32>, vector<14x32xf32>, vector<14x32xf32>, vector<14x32xf32>, vector<14x32xf32>, vector<14x32xf32>, vector<14x32xf32>, vector<14x32xf32>, vector<14x32xf32> -> vector<14x288xf32>
    %c140_394 = arith.constant 140 : index
    %c0_395 = arith.constant 0 : index
    %319 = vector.load %arg10[%c140_394, %c0_395] : memref<196x288xf32, #tpu.memory_space<vmem>>, vector<14x288xf32>
    tpu.vector_store %arg10[%c140_394, %c0_395], %318 {strides = array<i32>} : memref<196x288xf32, #tpu.memory_space<vmem>>, vector<14x288xf32>,
    %c11_396 = arith.constant 11 : index
    %c0_397 = arith.constant 0 : index
    %c0_398 = arith.constant 0 : index
    %320 = vector.load %arg9[%c11_396, %c0_397, %c0_398] : memref<16x16x32xf32, #tpu.memory_space<vmem>>, vector<1x14x32xf32>
    %321 = vector.shape_cast %320 : vector<1x14x32xf32> to vector<14x32xf32>
    %c11_399 = arith.constant 11 : index
    %c1_400 = arith.constant 1 : index
    %c0_401 = arith.constant 0 : index
    %322 = vector.load %arg9[%c11_399, %c1_400, %c0_401] : memref<16x16x32xf32, #tpu.memory_space<vmem>>, vector<1x14x32xf32>
    %323 = vector.shape_cast %322 : vector<1x14x32xf32> to vector<14x32xf32>
    %c11_402 = arith.constant 11 : index
    %c2_403 = arith.constant 2 : index
    %c0_404 = arith.constant 0 : index
    %324 = vector.load %arg9[%c11_402, %c2_403, %c0_404] : memref<16x16x32xf32, #tpu.memory_space<vmem>>, vector<1x14x32xf32>
    %325 = vector.shape_cast %324 : vector<1x14x32xf32> to vector<14x32xf32>
    %c12_405 = arith.constant 12 : index
    %c0_406 = arith.constant 0 : index
    %c0_407 = arith.constant 0 : index
    %326 = vector.load %arg9[%c12_405, %c0_406, %c0_407] : memref<16x16x32xf32, #tpu.memory_space<vmem>>, vector<1x14x32xf32>
    %327 = vector.shape_cast %326 : vector<1x14x32xf32> to vector<14x32xf32>
    %c12_408 = arith.constant 12 : index
    %c1_409 = arith.constant 1 : index
    %c0_410 = arith.constant 0 : index
    %328 = vector.load %arg9[%c12_408, %c1_409, %c0_410] : memref<16x16x32xf32, #tpu.memory_space<vmem>>, vector<1x14x32xf32>
    %329 = vector.shape_cast %328 : vector<1x14x32xf32> to vector<14x32xf32>
    %c12_411 = arith.constant 12 : index
    %c2_412 = arith.constant 2 : index
    %c0_413 = arith.constant 0 : index
    %330 = vector.load %arg9[%c12_411, %c2_412, %c0_413] : memref<16x16x32xf32, #tpu.memory_space<vmem>>, vector<1x14x32xf32>
    %331 = vector.shape_cast %330 : vector<1x14x32xf32> to vector<14x32xf32>
    %c13_414 = arith.constant 13 : index
    %c0_415 = arith.constant 0 : index
    %c0_416 = arith.constant 0 : index
    %332 = vector.load %arg9[%c13_414, %c0_415, %c0_416] : memref<16x16x32xf32, #tpu.memory_space<vmem>>, vector<1x14x32xf32>
    %333 = vector.shape_cast %332 : vector<1x14x32xf32> to vector<14x32xf32>
    %c13_417 = arith.constant 13 : index
    %c1_418 = arith.constant 1 : index
    %c0_419 = arith.constant 0 : index
    %334 = vector.load %arg9[%c13_417, %c1_418, %c0_419] : memref<16x16x32xf32, #tpu.memory_space<vmem>>, vector<1x14x32xf32>
    %335 = vector.shape_cast %334 : vector<1x14x32xf32> to vector<14x32xf32>
    %c13_420 = arith.constant 13 : index
    %c2_421 = arith.constant 2 : index
    %c0_422 = arith.constant 0 : index
    %336 = vector.load %arg9[%c13_420, %c2_421, %c0_422] : memref<16x16x32xf32, #tpu.memory_space<vmem>>, vector<1x14x32xf32>
    %337 = vector.shape_cast %336 : vector<1x14x32xf32> to vector<14x32xf32>
    %338 = tpu.concatenate %321, %323, %325, %327, %329, %331, %333, %335, %337 in 1 : vector<14x32xf32>, vector<14x32xf32>, vector<14x32xf32>, vector<14x32xf32>, vector<14x32xf32>, vector<14x32xf32>, vector<14x32xf32>, vector<14x32xf32>, vector<14x32xf32> -> vector<14x288xf32>
    %c154_423 = arith.constant 154 : index
    %c0_424 = arith.constant 0 : index
    %339 = vector.load %arg10[%c154_423, %c0_424] : memref<196x288xf32, #tpu.memory_space<vmem>>, vector<14x288xf32>
    tpu.vector_store %arg10[%c154_423, %c0_424], %338 {strides = array<i32>} : memref<196x288xf32, #tpu.memory_space<vmem>>, vector<14x288xf32>,
    %c12_425 = arith.constant 12 : index
    %c0_426 = arith.constant 0 : index
    %c0_427 = arith.constant 0 : index
    %340 = vector.load %arg9[%c12_425, %c0_426, %c0_427] : memref<16x16x32xf32, #tpu.memory_space<vmem>>, vector<1x14x32xf32>
    %341 = vector.shape_cast %340 : vector<1x14x32xf32> to vector<14x32xf32>
    %c12_428 = arith.constant 12 : index
    %c1_429 = arith.constant 1 : index
    %c0_430 = arith.constant 0 : index
    %342 = vector.load %arg9[%c12_428, %c1_429, %c0_430] : memref<16x16x32xf32, #tpu.memory_space<vmem>>, vector<1x14x32xf32>
    %343 = vector.shape_cast %342 : vector<1x14x32xf32> to vector<14x32xf32>
    %c12_431 = arith.constant 12 : index
    %c2_432 = arith.constant 2 : index
    %c0_433 = arith.constant 0 : index
    %344 = vector.load %arg9[%c12_431, %c2_432, %c0_433] : memref<16x16x32xf32, #tpu.memory_space<vmem>>, vector<1x14x32xf32>
    %345 = vector.shape_cast %344 : vector<1x14x32xf32> to vector<14x32xf32>
    %c13_434 = arith.constant 13 : index
    %c0_435 = arith.constant 0 : index
    %c0_436 = arith.constant 0 : index
    %346 = vector.load %arg9[%c13_434, %c0_435, %c0_436] : memref<16x16x32xf32, #tpu.memory_space<vmem>>, vector<1x14x32xf32>
    %347 = vector.shape_cast %346 : vector<1x14x32xf32> to vector<14x32xf32>
    %c13_437 = arith.constant 13 : index
    %c1_438 = arith.constant 1 : index
    %c0_439 = arith.constant 0 : index
    %348 = vector.load %arg9[%c13_437, %c1_438, %c0_439] : memref<16x16x32xf32, #tpu.memory_space<vmem>>, vector<1x14x32xf32>
    %349 = vector.shape_cast %348 : vector<1x14x32xf32> to vector<14x32xf32>
    %c13_440 = arith.constant 13 : index
    %c2_441 = arith.constant 2 : index
    %c0_442 = arith.constant 0 : index
    %350 = vector.load %arg9[%c13_440, %c2_441, %c0_442] : memref<16x16x32xf32, #tpu.memory_space<vmem>>, vector<1x14x32xf32>
    %351 = vector.shape_cast %350 : vector<1x14x32xf32> to vector<14x32xf32>
    %c14_443 = arith.constant 14 : index
    %c0_444 = arith.constant 0 : index
    %c0_445 = arith.constant 0 : index
    %352 = vector.load %arg9[%c14_443, %c0_444, %c0_445] : memref<16x16x32xf32, #tpu.memory_space<vmem>>, vector<1x14x32xf32>
    %353 = vector.shape_cast %352 : vector<1x14x32xf32> to vector<14x32xf32>
    %c14_446 = arith.constant 14 : index
    %c1_447 = arith.constant 1 : index
    %c0_448 = arith.constant 0 : index
    %354 = vector.load %arg9[%c14_446, %c1_447, %c0_448] : memref<16x16x32xf32, #tpu.memory_space<vmem>>, vector<1x14x32xf32>
    %355 = vector.shape_cast %354 : vector<1x14x32xf32> to vector<14x32xf32>
    %c14_449 = arith.constant 14 : index
    %c2_450 = arith.constant 2 : index
    %c0_451 = arith.constant 0 : index
    %356 = vector.load %arg9[%c14_449, %c2_450, %c0_451] : memref<16x16x32xf32, #tpu.memory_space<vmem>>, vector<1x14x32xf32>
    %357 = vector.shape_cast %356 : vector<1x14x32xf32> to vector<14x32xf32>
    %358 = tpu.concatenate %341, %343, %345, %347, %349, %351, %353, %355, %357 in 1 : vector<14x32xf32>, vector<14x32xf32>, vector<14x32xf32>, vector<14x32xf32>, vector<14x32xf32>, vector<14x32xf32>, vector<14x32xf32>, vector<14x32xf32>, vector<14x32xf32> -> vector<14x288xf32>
    %c168_452 = arith.constant 168 : index
    %c0_453 = arith.constant 0 : index
    %359 = vector.load %arg10[%c168_452, %c0_453] : memref<196x288xf32, #tpu.memory_space<vmem>>, vector<14x288xf32>
    tpu.vector_store %arg10[%c168_452, %c0_453], %358 {strides = array<i32>} : memref<196x288xf32, #tpu.memory_space<vmem>>, vector<14x288xf32>,
    %c13_454 = arith.constant 13 : index
    %c0_455 = arith.constant 0 : index
    %c0_456 = arith.constant 0 : index
    %360 = vector.load %arg9[%c13_454, %c0_455, %c0_456] : memref<16x16x32xf32, #tpu.memory_space<vmem>>, vector<1x14x32xf32>
    %361 = vector.shape_cast %360 : vector<1x14x32xf32> to vector<14x32xf32>
    %c13_457 = arith.constant 13 : index
    %c1_458 = arith.constant 1 : index
    %c0_459 = arith.constant 0 : index
    %362 = vector.load %arg9[%c13_457, %c1_458, %c0_459] : memref<16x16x32xf32, #tpu.memory_space<vmem>>, vector<1x14x32xf32>
    %363 = vector.shape_cast %362 : vector<1x14x32xf32> to vector<14x32xf32>
    %c13_460 = arith.constant 13 : index
    %c2_461 = arith.constant 2 : index
    %c0_462 = arith.constant 0 : index
    %364 = vector.load %arg9[%c13_460, %c2_461, %c0_462] : memref<16x16x32xf32, #tpu.memory_space<vmem>>, vector<1x14x32xf32>
    %365 = vector.shape_cast %364 : vector<1x14x32xf32> to vector<14x32xf32>
    %c14_463 = arith.constant 14 : index
    %c0_464 = arith.constant 0 : index
    %c0_465 = arith.constant 0 : index
    %366 = vector.load %arg9[%c14_463, %c0_464, %c0_465] : memref<16x16x32xf32, #tpu.memory_space<vmem>>, vector<1x14x32xf32>
    %367 = vector.shape_cast %366 : vector<1x14x32xf32> to vector<14x32xf32>
    %c14_466 = arith.constant 14 : index
    %c1_467 = arith.constant 1 : index
    %c0_468 = arith.constant 0 : index
    %368 = vector.load %arg9[%c14_466, %c1_467, %c0_468] : memref<16x16x32xf32, #tpu.memory_space<vmem>>, vector<1x14x32xf32>
    %369 = vector.shape_cast %368 : vector<1x14x32xf32> to vector<14x32xf32>
    %c14_469 = arith.constant 14 : index
    %c2_470 = arith.constant 2 : index
    %c0_471 = arith.constant 0 : index
    %370 = vector.load %arg9[%c14_469, %c2_470, %c0_471] : memref<16x16x32xf32, #tpu.memory_space<vmem>>, vector<1x14x32xf32>
    %371 = vector.shape_cast %370 : vector<1x14x32xf32> to vector<14x32xf32>
    %c15 = arith.constant 15 : index
    %c0_472 = arith.constant 0 : index
    %c0_473 = arith.constant 0 : index
    %372 = vector.load %arg9[%c15, %c0_472, %c0_473] : memref<16x16x32xf32, #tpu.memory_space<vmem>>, vector<1x14x32xf32>
    %373 = vector.shape_cast %372 : vector<1x14x32xf32> to vector<14x32xf32>
    %c15_474 = arith.constant 15 : index
    %c1_475 = arith.constant 1 : index
    %c0_476 = arith.constant 0 : index
    %374 = vector.load %arg9[%c15_474, %c1_475, %c0_476] : memref<16x16x32xf32, #tpu.memory_space<vmem>>, vector<1x14x32xf32>
    %375 = vector.shape_cast %374 : vector<1x14x32xf32> to vector<14x32xf32>
    %c15_477 = arith.constant 15 : index
    %c2_478 = arith.constant 2 : index
    %c0_479 = arith.constant 0 : index
    %376 = vector.load %arg9[%c15_477, %c2_478, %c0_479] : memref<16x16x32xf32, #tpu.memory_space<vmem>>, vector<1x14x32xf32>
    %377 = vector.shape_cast %376 : vector<1x14x32xf32> to vector<14x32xf32>
    %378 = tpu.concatenate %361, %363, %365, %367, %369, %371, %373, %375, %377 in 1 : vector<14x32xf32>, vector<14x32xf32>, vector<14x32xf32>, vector<14x32xf32>, vector<14x32xf32>, vector<14x32xf32>, vector<14x32xf32>, vector<14x32xf32>, vector<14x32xf32> -> vector<14x288xf32>
    %c182_480 = arith.constant 182 : index
    %c0_481 = arith.constant 0 : index
    %379 = vector.load %arg10[%c182_480, %c0_481] : memref<196x288xf32, #tpu.memory_space<vmem>>, vector<14x288xf32>
    tpu.vector_store %arg10[%c182_480, %c0_481], %378 {strides = array<i32>} : memref<196x288xf32, #tpu.memory_space<vmem>>, vector<14x288xf32>,
    %c0_482 = arith.constant 0 : index
    %c0_483 = arith.constant 0 : index
    %380 = vector.load %arg10[%c0_482, %c0_483] : memref<196x288xf32, #tpu.memory_space<vmem>>, vector<196x288xf32>
    %c0_484 = arith.constant 0 : index
    %c0_485 = arith.constant 0 : index
    %381 = vector.load %arg4[%c0_484, %c0_485] : memref<288x64xf32, #tpu.memory_space<vmem>>, vector<288x64xf32>
    %cst_486 = arith.constant dense<0.000000e+00> : vector<196x64xf32>
    %382 = tpu.matmul %380, %381, %cst_486 {dimension_numbers = #tpu.dot_dimension_numbers<[1], [0], [0], [1], [0, 0, 1, 1], [], []>} : vector<196x288xf32>, vector<288x64xf32>, vector<196x64xf32> -> vector<196x64xf32>
    %c0_487 = arith.constant 0 : index
    %c0_488 = arith.constant 0 : index
    %383 = vector.load %arg5[%c0_487, %c0_488] : memref<1x64xf32, #tpu.memory_space<vmem>>, vector<1x64xf32>
    %384 = vector.broadcast %383 : vector<1x64xf32> to vector<196x64xf32>
    %385 = arith.addf %382, %384 : vector<196x64xf32>
    %cst_489 = arith.constant 0.000000e+00 : f32
    %386 = vector.broadcast %cst_489 : f32 to vector<196x64xf32>
    %387 = arith.maximumf %385, %386 : vector<196x64xf32>
    %c0_490 = arith.constant 0 : index
    %c0_491 = arith.constant 0 : index
    %388 = vector.load %arg11[%c0_490, %c0_491] : memref<196x64xf32, #tpu.memory_space<vmem>>, vector<196x64xf32>
    tpu.vector_store %arg11[%c0_490, %c0_491], %387 {strides = array<i32>} : memref<196x64xf32, #tpu.memory_space<vmem>>, vector<196x64xf32>,
    %c0_492 = arith.constant 0 : index
    %c0_493 = arith.constant 0 : index
    %389 = tpu.strided_load %arg11[%c0_492, %c0_493] {strides = array<i32: 2, 1>} : memref<196x64xf32, #tpu.memory_space<vmem>>, vector<98x64xf32>
    %c1_494 = arith.constant 1 : index
    %c0_495 = arith.constant 0 : index
    %390 = tpu.strided_load %arg11[%c1_494, %c0_495] {strides = array<i32: 2, 1>} : memref<196x64xf32, #tpu.memory_space<vmem>>, vector<98x64xf32>
    %391 = arith.maximumf %389, %390 : vector<98x64xf32>
    %c0_496 = arith.constant 0 : index
    %c0_497 = arith.constant 0 : index
    %392 = vector.load %arg12[%c0_496, %c0_497] : memref<98x64xf32, #tpu.memory_space<vmem>>, vector<98x64xf32>
    tpu.vector_store %arg12[%c0_496, %c0_497], %391 {strides = array<i32>} : memref<98x64xf32, #tpu.memory_space<vmem>>, vector<98x64xf32>,
    %c0_498 = arith.constant 0 : index
    %c0_499 = arith.constant 0 : index
    %393 = vector.load %arg12[%c0_498, %c0_499] : memref<98x64xf32, #tpu.memory_space<vmem>>, vector<7x64xf32>
    %c7_500 = arith.constant 7 : index
    %c0_501 = arith.constant 0 : index
    %394 = vector.load %arg12[%c7_500, %c0_501] : memref<98x64xf32, #tpu.memory_space<vmem>>, vector<7x64xf32>
    %395 = arith.maximumf %393, %394 : vector<7x64xf32>
    %c0_502 = arith.constant 0 : index
    %c0_503 = arith.constant 0 : index
    %c0_504 = arith.constant 0 : index
    %396 = vector.load %arg6[%c0_502, %c0_503, %c0_504] : memref<1x49x64xf32, #tpu.memory_space<vmem>>, vector<1x7x64xf32>
    %397 = vector.shape_cast %396 : vector<1x7x64xf32> to vector<7x64xf32>
    %398 = vector.shape_cast %395 : vector<7x64xf32> to vector<1x7x64xf32>
    tpu.vector_store %arg6[%c0_502, %c0_503, %c0_504], %398 {strides = array<i32>} : memref<1x49x64xf32, #tpu.memory_space<vmem>>, vector<1x7x64xf32>,
    %c14_505 = arith.constant 14 : index
    %c0_506 = arith.constant 0 : index
    %399 = vector.load %arg12[%c14_505, %c0_506] : memref<98x64xf32, #tpu.memory_space<vmem>>, vector<7x64xf32>
    %c21 = arith.constant 21 : index
    %c0_507 = arith.constant 0 : index
    %400 = vector.load %arg12[%c21, %c0_507] : memref<98x64xf32, #tpu.memory_space<vmem>>, vector<7x64xf32>
    %401 = arith.maximumf %399, %400 : vector<7x64xf32>
    %c0_508 = arith.constant 0 : index
    %c7_509 = arith.constant 7 : index
    %c0_510 = arith.constant 0 : index
    %402 = vector.load %arg6[%c0_508, %c7_509, %c0_510] : memref<1x49x64xf32, #tpu.memory_space<vmem>>, vector<1x7x64xf32>
    %403 = vector.shape_cast %402 : vector<1x7x64xf32> to vector<7x64xf32>
    %404 = vector.shape_cast %401 : vector<7x64xf32> to vector<1x7x64xf32>
    tpu.vector_store %arg6[%c0_508, %c7_509, %c0_510], %404 {strides = array<i32>} : memref<1x49x64xf32, #tpu.memory_space<vmem>>, vector<1x7x64xf32>,
    %c28_511 = arith.constant 28 : index
    %c0_512 = arith.constant 0 : index
    %405 = vector.load %arg12[%c28_511, %c0_512] : memref<98x64xf32, #tpu.memory_space<vmem>>, vector<7x64xf32>
    %c35 = arith.constant 35 : index
    %c0_513 = arith.constant 0 : index
    %406 = vector.load %arg12[%c35, %c0_513] : memref<98x64xf32, #tpu.memory_space<vmem>>, vector<7x64xf32>
    %407 = arith.maximumf %405, %406 : vector<7x64xf32>
    %c0_514 = arith.constant 0 : index
    %c14_515 = arith.constant 14 : index
    %c0_516 = arith.constant 0 : index
    %408 = vector.load %arg6[%c0_514, %c14_515, %c0_516] : memref<1x49x64xf32, #tpu.memory_space<vmem>>, vector<1x7x64xf32>
    %409 = vector.shape_cast %408 : vector<1x7x64xf32> to vector<7x64xf32>
    %410 = vector.shape_cast %407 : vector<7x64xf32> to vector<1x7x64xf32>
    tpu.vector_store %arg6[%c0_514, %c14_515, %c0_516], %410 {strides = array<i32>} : memref<1x49x64xf32, #tpu.memory_space<vmem>>, vector<1x7x64xf32>,
    %c42_517 = arith.constant 42 : index
    %c0_518 = arith.constant 0 : index
    %411 = vector.load %arg12[%c42_517, %c0_518] : memref<98x64xf32, #tpu.memory_space<vmem>>, vector<7x64xf32>
    %c49 = arith.constant 49 : index
    %c0_519 = arith.constant 0 : index
    %412 = vector.load %arg12[%c49, %c0_519] : memref<98x64xf32, #tpu.memory_space<vmem>>, vector<7x64xf32>
    %413 = arith.maximumf %411, %412 : vector<7x64xf32>
    %c0_520 = arith.constant 0 : index
    %c21_521 = arith.constant 21 : index
    %c0_522 = arith.constant 0 : index
    %414 = vector.load %arg6[%c0_520, %c21_521, %c0_522] : memref<1x49x64xf32, #tpu.memory_space<vmem>>, vector<1x7x64xf32>
    %415 = vector.shape_cast %414 : vector<1x7x64xf32> to vector<7x64xf32>
    %416 = vector.shape_cast %413 : vector<7x64xf32> to vector<1x7x64xf32>
    tpu.vector_store %arg6[%c0_520, %c21_521, %c0_522], %416 {strides = array<i32>} : memref<1x49x64xf32, #tpu.memory_space<vmem>>, vector<1x7x64xf32>,
    %c56_523 = arith.constant 56 : index
    %c0_524 = arith.constant 0 : index
    %417 = vector.load %arg12[%c56_523, %c0_524] : memref<98x64xf32, #tpu.memory_space<vmem>>, vector<7x64xf32>
    %c63 = arith.constant 63 : index
    %c0_525 = arith.constant 0 : index
    %418 = vector.load %arg12[%c63, %c0_525] : memref<98x64xf32, #tpu.memory_space<vmem>>, vector<7x64xf32>
    %419 = arith.maximumf %417, %418 : vector<7x64xf32>
    %c0_526 = arith.constant 0 : index
    %c28_527 = arith.constant 28 : index
    %c0_528 = arith.constant 0 : index
    %420 = vector.load %arg6[%c0_526, %c28_527, %c0_528] : memref<1x49x64xf32, #tpu.memory_space<vmem>>, vector<1x7x64xf32>
    %421 = vector.shape_cast %420 : vector<1x7x64xf32> to vector<7x64xf32>
    %422 = vector.shape_cast %419 : vector<7x64xf32> to vector<1x7x64xf32>
    tpu.vector_store %arg6[%c0_526, %c28_527, %c0_528], %422 {strides = array<i32>} : memref<1x49x64xf32, #tpu.memory_space<vmem>>, vector<1x7x64xf32>,
    %c70_529 = arith.constant 70 : index
    %c0_530 = arith.constant 0 : index
    %423 = vector.load %arg12[%c70_529, %c0_530] : memref<98x64xf32, #tpu.memory_space<vmem>>, vector<7x64xf32>
    %c77 = arith.constant 77 : index
    %c0_531 = arith.constant 0 : index
    %424 = vector.load %arg12[%c77, %c0_531] : memref<98x64xf32, #tpu.memory_space<vmem>>, vector<7x64xf32>
    %425 = arith.maximumf %423, %424 : vector<7x64xf32>
    %c0_532 = arith.constant 0 : index
    %c35_533 = arith.constant 35 : index
    %c0_534 = arith.constant 0 : index
    %426 = vector.load %arg6[%c0_532, %c35_533, %c0_534] : memref<1x49x64xf32, #tpu.memory_space<vmem>>, vector<1x7x64xf32>
    %427 = vector.shape_cast %426 : vector<1x7x64xf32> to vector<7x64xf32>
    %428 = vector.shape_cast %425 : vector<7x64xf32> to vector<1x7x64xf32>
    tpu.vector_store %arg6[%c0_532, %c35_533, %c0_534], %428 {strides = array<i32>} : memref<1x49x64xf32, #tpu.memory_space<vmem>>, vector<1x7x64xf32>,
    %c84_535 = arith.constant 84 : index
    %c0_536 = arith.constant 0 : index
    %429 = vector.load %arg12[%c84_535, %c0_536] : memref<98x64xf32, #tpu.memory_space<vmem>>, vector<7x64xf32>
    %c91 = arith.constant 91 : index
    %c0_537 = arith.constant 0 : index
    %430 = vector.load %arg12[%c91, %c0_537] : memref<98x64xf32, #tpu.memory_space<vmem>>, vector<7x64xf32>
    %431 = arith.maximumf %429, %430 : vector<7x64xf32>
    %c0_538 = arith.constant 0 : index
    %c42_539 = arith.constant 42 : index
    %c0_540 = arith.constant 0 : index
    %432 = vector.load %arg6[%c0_538, %c42_539, %c0_540] : memref<1x49x64xf32, #tpu.memory_space<vmem>>, vector<1x7x64xf32>
    %433 = vector.shape_cast %432 : vector<1x7x64xf32> to vector<7x64xf32>
    %434 = vector.shape_cast %431 : vector<7x64xf32> to vector<1x7x64xf32>
    tpu.vector_store %arg6[%c0_538, %c42_539, %c0_540], %434 {strides = array<i32>} : memref<1x49x64xf32, #tpu.memory_space<vmem>>, vector<1x7x64xf32>,
    return
  }
  func.func @transform_0(%arg0: i32) -> (i32, i32, i32) {
    %c0_i32 = arith.constant 0 : i32
    %c0_i32_0 = arith.constant 0 : i32
    %c0_i32_1 = arith.constant 0 : i32
    return %arg0, %c0_i32, %c0_i32_0 : i32, i32, i32
  }
  func.func @transform_1(%arg0: i32) -> (i32, i32) {
    %c0_i32 = arith.constant 0 : i32
    %c0_i32_0 = arith.constant 0 : i32
    %c0_i32_1 = arith.constant 0 : i32
    return %c0_i32, %c0_i32_0 : i32, i32
  }
  func.func @transform_2(%arg0: i32) -> (i32, i32) {
    %c0_i32 = arith.constant 0 : i32
    %c0_i32_0 = arith.constant 0 : i32
    %c0_i32_1 = arith.constant 0 : i32
    return %c0_i32, %c0_i32_0 : i32, i32
  }
  func.func @transform_3(%arg0: i32) -> (i32, i32) {
    %c0_i32 = arith.constant 0 : i32
    %c0_i32_0 = arith.constant 0 : i32
    %c0_i32_1 = arith.constant 0 : i32
    return %c0_i32, %c0_i32_0 : i32, i32
  }
  func.func @transform_4(%arg0: i32) -> (i32, i32) {
    %c0_i32 = arith.constant 0 : i32
    %c0_i32_0 = arith.constant 0 : i32
    %c0_i32_1 = arith.constant 0 : i32
    return %c0_i32, %c0_i32_0 : i32, i32
  }
  func.func @transform_5(%arg0: i32) -> (i32, i32, i32) {
    %c0_i32 = arith.constant 0 : i32
    %c0_i32_0 = arith.constant 0 : i32
    %c0_i32_1 = arith.constant 0 : i32
    return %arg0, %c0_i32, %c0_i32_0 : i32, i32, i32
  }
}

module attributes {stable_mosaic.version = 11 : i64} {
  func.func @_mlp_head_kernel(%arg0: memref<2x3136xf32, #tpu.memory_space<vmem>>, %arg1: memref<3136x128xf32, #tpu.memory_space<vmem>>, %arg2: memref<1x128xf32, #tpu.memory_space<vmem>>, %arg3: memref<128x10xf32, #tpu.memory_space<vmem>>, %arg4: memref<1x10xf32, #tpu.memory_space<vmem>>, %arg5: memref<2x10xf32, #tpu.memory_space<vmem>>) attributes {dimension_semantics = [], scalar_prefetch = 0 : i64, scratch_operands = 0 : i64, tpu.core_type = #tpu.core_type<tc>} {
    %c0 = arith.constant 0 : index
    %c0_0 = arith.constant 0 : index
    %0 = vector.load %arg0[%c0, %c0_0] : memref<2x3136xf32, #tpu.memory_space<vmem>>, vector<2x3136xf32>
    %c0_1 = arith.constant 0 : index
    %c0_2 = arith.constant 0 : index
    %1 = vector.load %arg1[%c0_1, %c0_2] : memref<3136x128xf32, #tpu.memory_space<vmem>>, vector<3136x128xf32>
    %cst = arith.constant dense<0.000000e+00> : vector<2x128xf32>
    %2 = tpu.matmul %0, %1, %cst {dimension_numbers = #tpu.dot_dimension_numbers<[1], [0], [0], [1], [0, 0, 1, 1], [], []>} : vector<2x3136xf32>, vector<3136x128xf32>, vector<2x128xf32> -> vector<2x128xf32>
    %c0_3 = arith.constant 0 : index
    %c0_4 = arith.constant 0 : index
    %3 = vector.load %arg2[%c0_3, %c0_4] : memref<1x128xf32, #tpu.memory_space<vmem>>, vector<1x128xf32>
    %4 = vector.broadcast %3 : vector<1x128xf32> to vector<2x128xf32>
    %5 = arith.addf %2, %4 : vector<2x128xf32>
    %cst_5 = arith.constant 0.000000e+00 : f32
    %6 = vector.broadcast %cst_5 : f32 to vector<2x128xf32>
    %7 = arith.maximumf %5, %6 : vector<2x128xf32>
    %c0_6 = arith.constant 0 : index
    %c0_7 = arith.constant 0 : index
    %8 = vector.load %arg3[%c0_6, %c0_7] : memref<128x10xf32, #tpu.memory_space<vmem>>, vector<128x10xf32>
    %cst_8 = arith.constant dense<0.000000e+00> : vector<2x10xf32>
    %9 = tpu.matmul %7, %8, %cst_8 {dimension_numbers = #tpu.dot_dimension_numbers<[1], [0], [0], [1], [0, 0, 1, 1], [], []>} : vector<2x128xf32>, vector<128x10xf32>, vector<2x10xf32> -> vector<2x10xf32>
    %c0_9 = arith.constant 0 : index
    %c0_10 = arith.constant 0 : index
    %10 = vector.load %arg4[%c0_9, %c0_10] : memref<1x10xf32, #tpu.memory_space<vmem>>, vector<1x10xf32>
    %11 = vector.broadcast %10 : vector<1x10xf32> to vector<2x10xf32>
    %12 = arith.addf %9, %11 : vector<2x10xf32>
    %c0_11 = arith.constant 0 : index
    %c0_12 = arith.constant 0 : index
    %13 = vector.load %arg5[%c0_11, %c0_12] : memref<2x10xf32, #tpu.memory_space<vmem>>, vector<2x10xf32>
    tpu.vector_store %arg5[%c0_11, %c0_12], %12 {strides = array<i32>} : memref<2x10xf32, #tpu.memory_space<vmem>>, vector<2x10xf32>,
    return
  }
}

</mosaic_0001>

<llo_original>
// kernel: simple_cnn_forward.3
$region0: #{simple_cnn_forward.3}
  #allocation0 [shape = 'u32[]', space=smem, size = 0x4, offset = 0x4, fixed_abs, tag = 'smem constant byte address 0x4 - core index']
  #allocation1 [shape = 'u32[72,128]{1,0:T(1,128)}', space=vmem, size = 0x9000, scoped, tag = 'internal scratch']
  %s0 = inlined_call_operand.vmem [shape: f32[2,3136], index: 0, kind: input, shape index: {}]
  %s1 = inlined_call_operand.vmem [shape: f32[3136,128], index: 1, kind: input, shape index: {}]
  %s2 = inlined_call_operand.vmem [shape: f32[1,128], index: 2, kind: input, shape index: {}]
  %s3 = inlined_call_operand.vmem [shape: f32[128,10], index: 3, kind: input, shape index: {}]
  %s4 = inlined_call_operand.vmem [shape: f32[1,10], index: 4, kind: input, shape index: {}]
  %s5 = inlined_call_operand.hbm [shape: f32[2,10], index: 5, kind: output, shape index: {}]
  %s6 = sld [smem:[#allocation0]]
  $region30: #{simple_cnn_forward.3} parent=0
    _
  %s8 = ssub.s32 1, %s6
  %s9 = scalar_select 0, %s8, %s6
  $region1: #{simple_cnn_forward.3} parent=0
    #allocation2 [shape = 'u8[1024]{0}', space=vmem, size = 0x400, scoped, tag = 'output window, operand 0, single buffered']
    #allocation3 [shape = 's32[1]{0}', space=sflag, size = 0x4, scoped, tag = 'scoped memory for simple_cnn_forward.3']
    %10 = vsyncpa [#allocation3], 0
    // Predicated region
    $region2: #{simple_cnn_forward.3} parent=1 // pred_check
      _
    $region3: #{simple_cnn_forward.3} parent=1 // pred_check_branch
      %12 = sbr.rel (0) target = $region5
    $region4: #{simple_cnn_forward.3} parent=1 // pred_region
      _
    $region5: #{simple_cnn_forward.3} parent=1 // pred_fallthru
      _
    // Predicated region
    $region6: #{simple_cnn_forward.3} parent=1 // pred_check
      _
    $region7: #{simple_cnn_forward.3} parent=1 // pred_check_branch
      %14 = sbr.rel (0) target = $region9
    $region8: #{simple_cnn_forward.3} parent=1 // pred_region
      _
    $region9: #{simple_cnn_forward.3} parent=1 // pred_fallthru
      _
    // Predicated region
    $region10: #{simple_cnn_forward.3} parent=1 // pred_check
      _
    $region11: #{simple_cnn_forward.3} parent=1 // pred_check_branch
      %16 = sbr.rel (0) target = $region13
    $region12: #{simple_cnn_forward.3} parent=1 // pred_region
      _
    $region13: #{simple_cnn_forward.3} parent=1 // pred_fallthru
      _
    // Predicated region
    $region14: #{simple_cnn_forward.3} parent=1 // pred_check
      _
    $region15: #{simple_cnn_forward.3} parent=1 // pred_check_branch
      %18 = sbr.rel (0) target = $region17
    $region16: #{simple_cnn_forward.3} parent=1 // pred_region
      _
    $region17: #{simple_cnn_forward.3} parent=1 // pred_fallthru
      _
    // Predicated region
    $region18: #{simple_cnn_forward.3} parent=1 // pred_check
      _
    $region19: #{simple_cnn_forward.3} parent=1 // pred_check_branch
      %20 = sbr.rel (0) target = $region21
    $region20: #{simple_cnn_forward.3} parent=1 // pred_region
      _
    $region21: #{simple_cnn_forward.3} parent=1 // pred_fallthru
      _
    %v21 = vld [vmem:[%s0] sm:$0xff]
    %v22 = vld [vmem:[%s0 + $0x8] sm:$0xff]
    %v23 = vld [vmem:[%s0 + $0x10] sm:$0xff]
    %v24 = vld [vmem:[%s0 + $0x18] sm:$0xff]
    %v25 = vld [vmem:[%s0 + $0x20] sm:$0xff]
    %v26 = vld [vmem:[%s0 + $0x28] sm:$0xff]
    %v27 = vld [vmem:[%s0 + $0x30] sm:$0x3]
    %v28 = vld [vmem:[%s1] sm:$0xff]
    %v29 = vld [vmem:[%s1 + $0x8] sm:$0xff]
    %v30 = vld [vmem:[%s1 + $0x10] sm:$0xff]
    %v31 = vld [vmem:[%s1 + $0x18] sm:$0xff]
    %v32 = vld [vmem:[%s1 + $0x20] sm:$0xff]
    %v33 = vld [vmem:[%s1 + $0x28] sm:$0xff]
    %v34 = vld [vmem:[%s1 + $0x30] sm:$0xff]
    %v35 = vld [vmem:[%s1 + $0x38] sm:$0xff]
    %v36 = vld [vmem:[%s1 + $0x40] sm:$0xff]
    %v37 = vld [vmem:[%s1 + $0x48] sm:$0xff]
    %v38 = vld [vmem:[%s1 + $0x50] sm:$0xff]
    %v39 = vld [vmem:[%s1 + $0x58] sm:$0xff]
    %v40 = vld [vmem:[%s1 + $0x60] sm:$0xff]
    %v41 = vld [vmem:[%s1 + $0x68] sm:$0xff]
    %v42 = vld [vmem:[%s1 + $0x70] sm:$0xff]
    %v43 = vld [vmem:[%s1 + $0x78] sm:$0xff]
    %v44 = vld [vmem:[%s1 + $0x80] sm:$0xff]
    %v45 = vld [vmem:[%s1 + $0x88] sm:$0xff]
    %v46 = vld [vmem:[%s1 + $0x90] sm:$0xff]
    %v47 = vld [vmem:[%s1 + $0x98] sm:$0xff]
    %v48 = vld [vmem:[%s1 + $0xa0] sm:$0xff]
    %v49 = vld [vmem:[%s1 + $0xa8] sm:$0xff]
    %v50 = vld [vmem:[%s1 + $0xb0] sm:$0xff]
    %v51 = vld [vmem:[%s1 + $0xb8] sm:$0xff]
    %v52 = vld [vmem:[%s1 + $0xc0] sm:$0xff]
    %v53 = vld [vmem:[%s1 + $0xc8] sm:$0xff]
    %v54 = vld [vmem:[%s1 + $0xd0] sm:$0xff]
    %v55 = vld [vmem:[%s1 + $0xd8] sm:$0xff]
    %v56 = vld [vmem:[%s1 + $0xe0] sm:$0xff]
    %v57 = vld [vmem:[%s1 + $0xe8] sm:$0xff]
    %v58 = vld [vmem:[%s1 + $0xf0] sm:$0xff]
    %v59 = vld [vmem:[%s1 + $0xf8] sm:$0xff]
    %v60 = vld [vmem:[%s1 + $0x100] sm:$0xff]
    %v61 = vld [vmem:[%s1 + $0x108] sm:$0xff]
    %v62 = vld [vmem:[%s1 + $0x110] sm:$0xff]
    %v63 = vld [vmem:[%s1 + $0x118] sm:$0xff]
    %v64 = vld [vmem:[%s1 + $0x120] sm:$0xff]
    %v65 = vld [vmem:[%s1 + $0x128] sm:$0xff]
    %v66 = vld [vmem:[%s1 + $0x130] sm:$0xff]
    %v67 = vld [vmem:[%s1 + $0x138] sm:$0xff]
    %v68 = vld [vmem:[%s1 + $0x140] sm:$0xff]
    %v69 = vld [vmem:[%s1 + $0x148] sm:$0xff]
    %v70 = vld [vmem:[%s1 + $0x150] sm:$0xff]
    %v71 = vld [vmem:[%s1 + $0x158] sm:$0xff]
    %v72 = vld [vmem:[%s1 + $0x160] sm:$0xff]
    %v73 = vld [vmem:[%s1 + $0x168] sm:$0xff]
    %v74 = vld [vmem:[%s1 + $0x170] sm:$0xff]
    %v75 = vld [vmem:[%s1 + $0x178] sm:$0xff]
    %v76 = vld [vmem:[%s1 + $0x180] sm:$0xff]
    %v77 = vld [vmem:[%s1 + $0x188] sm:$0xff]
    %v78 = vld [vmem:[%s1 + $0x190] sm:$0xff]
    %v79 = vld [vmem:[%s1 + $0x198] sm:$0xff]
    %v80 = vld [vmem:[%s1 + $0x1a0] sm:$0xff]
    %v81 = vld [vmem:[%s1 + $0x1a8] sm:$0xff]
    %v82 = vld [vmem:[%s1 + $0x1b0] sm:$0xff]
    %v83 = vld [vmem:[%s1 + $0x1b8] sm:$0xff]
    %v84 = vld [vmem:[%s1 + $0x1c0] sm:$0xff]
    %v85 = vld [vmem:[%s1 + $0x1c8] sm:$0xff]
    %v86 = vld [vmem:[%s1 + $0x1d0] sm:$0xff]
    %v87 = vld [vmem:[%s1 + $0x1d8] sm:$0xff]
    %v88 = vld [vmem:[%s1 + $0x1e0] sm:$0xff]
    %v89 = vld [vmem:[%s1 + $0x1e8] sm:$0xff]
    %v90 = vld [vmem:[%s1 + $0x1f0] sm:$0xff]
    %v91 = vld [vmem:[%s1 + $0x1f8] sm:$0xff]
    %v92 = vld [vmem:[%s1 + $0x200] sm:$0xff]
    %v93 = vld [vmem:[%s1 + $0x208] sm:$0xff]
    %v94 = vld [vmem:[%s1 + $0x210] sm:$0xff]
    %v95 = vld [vmem:[%s1 + $0x218] sm:$0xff]
    %v96 = vld [vmem:[%s1 + $0x220] sm:$0xff]
    %v97 = vld [vmem:[%s1 + $0x228] sm:$0xff]
    %v98 = vld [vmem:[%s1 + $0x230] sm:$0xff]
    %v99 = vld [vmem:[%s1 + $0x238] sm:$0xff]
    %v100 = vld [vmem:[%s1 + $0x240] sm:$0xff]
    %v101 = vld [vmem:[%s1 + $0x248] sm:$0xff]
    %v102 = vld [vmem:[%s1 + $0x250] sm:$0xff]
    %v103 = vld [vmem:[%s1 + $0x258] sm:$0xff]
    %v104 = vld [vmem:[%s1 + $0x260] sm:$0xff]
    %v105 = vld [vmem:[%s1 + $0x268] sm:$0xff]
    %v106 = vld [vmem:[%s1 + $0x270] sm:$0xff]
    %v107 = vld [vmem:[%s1 + $0x278] sm:$0xff]
    %v108 = vld [vmem:[%s1 + $0x280] sm:$0xff]
    %v109 = vld [vmem:[%s1 + $0x288] sm:$0xff]
    %v110 = vld [vmem:[%s1 + $0x290] sm:$0xff]
    %v111 = vld [vmem:[%s1 + $0x298] sm:$0xff]
    %v112 = vld [vmem:[%s1 + $0x2a0] sm:$0xff]
    %v113 = vld [vmem:[%s1 + $0x2a8] sm:$0xff]
    %v114 = vld [vmem:[%s1 + $0x2b0] sm:$0xff]
    %v115 = vld [vmem:[%s1 + $0x2b8] sm:$0xff]
    %v116 = vld [vmem:[%s1 + $0x2c0] sm:$0xff]
    %v117 = vld [vmem:[%s1 + $0x2c8] sm:$0xff]
    %v118 = vld [vmem:[%s1 + $0x2d0] sm:$0xff]
    %v119 = vld [vmem:[%s1 + $0x2d8] sm:$0xff]
    %v120 = vld [vmem:[%s1 + $0x2e0] sm:$0xff]
    %v121 = vld [vmem:[%s1 + $0x2e8] sm:$0xff]
    %v122 = vld [vmem:[%s1 + $0x2f0] sm:$0xff]
    %v123 = vld [vmem:[%s1 + $0x2f8] sm:$0xff]
    %v124 = vld [vmem:[%s1 + $0x300] sm:$0xff]
    %v125 = vld [vmem:[%s1 + $0x308] sm:$0xff]
    %v126 = vld [vmem:[%s1 + $0x310] sm:$0xff]
    %v127 = vld [vmem:[%s1 + $0x318] sm:$0xff]
    %v128 = vld [vmem:[%s1 + $0x320] sm:$0xff]
    %v129 = vld [vmem:[%s1 + $0x328] sm:$0xff]
    %v130 = vld [vmem:[%s1 + $0x330] sm:$0xff]
    %v131 = vld [vmem:[%s1 + $0x338] sm:$0xff]
    %v132 = vld [vmem:[%s1 + $0x340] sm:$0xff]
    %v133 = vld [vmem:[%s1 + $0x348] sm:$0xff]
    %v134 = vld [vmem:[%s1 + $0x350] sm:$0xff]
    %v135 = vld [vmem:[%s1 + $0x358] sm:$0xff]
    %v136 = vld [vmem:[%s1 + $0x360] sm:$0xff]
    %v137 = vld [vmem:[%s1 + $0x368] sm:$0xff]
    %v138 = vld [vmem:[%s1 + $0x370] sm:$0xff]
    %v139 = vld [vmem:[%s1 + $0x378] sm:$0xff]
    %v140 = vld [vmem:[%s1 + $0x380] sm:$0xff]
    %v141 = vld [vmem:[%s1 + $0x388] sm:$0xff]
    %v142 = vld [vmem:[%s1 + $0x390] sm:$0xff]
    %v143 = vld [vmem:[%s1 + $0x398] sm:$0xff]
    %v144 = vld [vmem:[%s1 + $0x3a0] sm:$0xff]
    %v145 = vld [vmem:[%s1 + $0x3a8] sm:$0xff]
    %v146 = vld [vmem:[%s1 + $0x3b0] sm:$0xff]
    %v147 = vld [vmem:[%s1 + $0x3b8] sm:$0xff]
    %v148 = vld [vmem:[%s1 + $0x3c0] sm:$0xff]
    %v149 = vld [vmem:[%s1 + $0x3c8] sm:$0xff]
    %v150 = vld [vmem:[%s1 + $0x3d0] sm:$0xff]
    %v151 = vld [vmem:[%s1 + $0x3d8] sm:$0xff]
    %v152 = vld [vmem:[%s1 + $0x3e0] sm:$0xff]
    %v153 = vld [vmem:[%s1 + $0x3e8] sm:$0xff]
    %v154 = vld [vmem:[%s1 + $0x3f0] sm:$0xff]
    %v155 = vld [vmem:[%s1 + $0x3f8] sm:$0xff]
    %v156 = vld [vmem:[%s1 + $0x400] sm:$0xff]
    %v157 = vld [vmem:[%s1 + $0x408] sm:$0xff]
    %v158 = vld [vmem:[%s1 + $0x410] sm:$0xff]
    %v159 = vld [vmem:[%s1 + $0x418] sm:$0xff]
    %v160 = vld [vmem:[%s1 + $0x420] sm:$0xff]
    %v161 = vld [vmem:[%s1 + $0x428] sm:$0xff]
    %v162 = vld [vmem:[%s1 + $0x430] sm:$0xff]
    %v163 = vld [vmem:[%s1 + $0x438] sm:$0xff]
    %v164 = vld [vmem:[%s1 + $0x440] sm:$0xff]
    %v165 = vld [vmem:[%s1 + $0x448] sm:$0xff]
    %v166 = vld [vmem:[%s1 + $0x450] sm:$0xff]
    %v167 = vld [vmem:[%s1 + $0x458] sm:$0xff]
    %v168 = vld [vmem:[%s1 + $0x460] sm:$0xff]
    %v169 = vld [vmem:[%s1 + $0x468] sm:$0xff]
    %v170 = vld [vmem:[%s1 + $0x470] sm:$0xff]
    %v171 = vld [vmem:[%s1 + $0x478] sm:$0xff]
    %v172 = vld [vmem:[%s1 + $0x480] sm:$0xff]
    %v173 = vld [vmem:[%s1 + $0x488] sm:$0xff]
    %v174 = vld [vmem:[%s1 + $0x490] sm:$0xff]
    %v175 = vld [vmem:[%s1 + $0x498] sm:$0xff]
    %v176 = vld [vmem:[%s1 + $0x4a0] sm:$0xff]
    %v177 = vld [vmem:[%s1 + $0x4a8] sm:$0xff]
    %v178 = vld [vmem:[%s1 + $0x4b0] sm:$0xff]
    %v179 = vld [vmem:[%s1 + $0x4b8] sm:$0xff]
    %v180 = vld [vmem:[%s1 + $0x4c0] sm:$0xff]
    %v181 = vld [vmem:[%s1 + $0x4c8] sm:$0xff]
    %v182 = vld [vmem:[%s1 + $0x4d0] sm:$0xff]
    %v183 = vld [vmem:[%s1 + $0x4d8] sm:$0xff]
    %v184 = vld [vmem:[%s1 + $0x4e0] sm:$0xff]
    %v185 = vld [vmem:[%s1 + $0x4e8] sm:$0xff]
    %v186 = vld [vmem:[%s1 + $0x4f0] sm:$0xff]
    %v187 = vld [vmem:[%s1 + $0x4f8] sm:$0xff]
    %v188 = vld [vmem:[%s1 + $0x500] sm:$0xff]
    %v189 = vld [vmem:[%s1 + $0x508] sm:$0xff]
    %v190 = vld [vmem:[%s1 + $0x510] sm:$0xff]
    %v191 = vld [vmem:[%s1 + $0x518] sm:$0xff]
    %v192 = vld [vmem:[%s1 + $0x520] sm:$0xff]
    %v193 = vld [vmem:[%s1 + $0x528] sm:$0xff]
    %v194 = vld [vmem:[%s1 + $0x530] sm:$0xff]
    %v195 = vld [vmem:[%s1 + $0x538] sm:$0xff]
    %v196 = vld [vmem:[%s1 + $0x540] sm:$0xff]
    %v197 = vld [vmem:[%s1 + $0x548] sm:$0xff]
    %v198 = vld [vmem:[%s1 + $0x550] sm:$0xff]
    %v199 = vld [vmem:[%s1 + $0x558] sm:$0xff]
    %v200 = vld [vmem:[%s1 + $0x560] sm:$0xff]
    %v201 = vld [vmem:[%s1 + $0x568] sm:$0xff]
    %v202 = vld [vmem:[%s1 + $0x570] sm:$0xff]
    %v203 = vld [vmem:[%s1 + $0x578] sm:$0xff]
    %v204 = vld [vmem:[%s1 + $0x580] sm:$0xff]
    %v205 = vld [vmem:[%s1 + $0x588] sm:$0xff]
    %v206 = vld [vmem:[%s1 + $0x590] sm:$0xff]
    %v207 = vld [vmem:[%s1 + $0x598] sm:$0xff]
    %v208 = vld [vmem:[%s1 + $0x5a0] sm:$0xff]
    %v209 = vld [vmem:[%s1 + $0x5a8] sm:$0xff]
    %v210 = vld [vmem:[%s1 + $0x5b0] sm:$0xff]
    %v211 = vld [vmem:[%s1 + $0x5b8] sm:$0xff]
    %v212 = vld [vmem:[%s1 + $0x5c0] sm:$0xff]
    %v213 = vld [vmem:[%s1 + $0x5c8] sm:$0xff]
    %v214 = vld [vmem:[%s1 + $0x5d0] sm:$0xff]
    %v215 = vld [vmem:[%s1 + $0x5d8] sm:$0xff]
    %v216 = vld [vmem:[%s1 + $0x5e0] sm:$0xff]
    %v217 = vld [vmem:[%s1 + $0x5e8] sm:$0xff]
    %v218 = vld [vmem:[%s1 + $0x5f0] sm:$0xff]
    %v219 = vld [vmem:[%s1 + $0x5f8] sm:$0xff]
    %v220 = vld [vmem:[%s1 + $0x600] sm:$0xff]
    %v221 = vld [vmem:[%s1 + $0x608] sm:$0xff]
    %v222 = vld [vmem:[%s1 + $0x610] sm:$0xff]
    %v223 = vld [vmem:[%s1 + $0x618] sm:$0xff]
    %v224 = vld [vmem:[%s1 + $0x620] sm:$0xff]
    %v225 = vld [vmem:[%s1 + $0x628] sm:$0xff]
    %v226 = vld [vmem:[%s1 + $0x630] sm:$0xff]
    %v227 = vld [vmem:[%s1 + $0x638] sm:$0xff]
    %v228 = vld [vmem:[%s1 + $0x640] sm:$0xff]
    %v229 = vld [vmem:[%s1 + $0x648] sm:$0xff]
    %v230 = vld [vmem:[%s1 + $0x650] sm:$0xff]
    %v231 = vld [vmem:[%s1 + $0x658] sm:$0xff]
    %v232 = vld [vmem:[%s1 + $0x660] sm:$0xff]
    %v233 = vld [vmem:[%s1 + $0x668] sm:$0xff]
    %v234 = vld [vmem:[%s1 + $0x670] sm:$0xff]
    %v235 = vld [vmem:[%s1 + $0x678] sm:$0xff]
    %v236 = vld [vmem:[%s1 + $0x680] sm:$0xff]
    %v237 = vld [vmem:[%s1 + $0x688] sm:$0xff]
    %v238 = vld [vmem:[%s1 + $0x690] sm:$0xff]
    %v239 = vld [vmem:[%s1 + $0x698] sm:$0xff]
    %v240 = vld [vmem:[%s1 + $0x6a0] sm:$0xff]
    %v241 = vld [vmem:[%s1 + $0x6a8] sm:$0xff]
    %v242 = vld [vmem:[%s1 + $0x6b0] sm:$0xff]
    %v243 = vld [vmem:[%s1 + $0x6b8] sm:$0xff]
    %v244 = vld [vmem:[%s1 + $0x6c0] sm:$0xff]
    %v245 = vld [vmem:[%s1 + $0x6c8] sm:$0xff]
    %v246 = vld [vmem:[%s1 + $0x6d0] sm:$0xff]
    %v247 = vld [vmem:[%s1 + $0x6d8] sm:$0xff]
    %v248 = vld [vmem:[%s1 + $0x6e0] sm:$0xff]
    %v249 = vld [vmem:[%s1 + $0x6e8] sm:$0xff]
    %v250 = vld [vmem:[%s1 + $0x6f0] sm:$0xff]
    %v251 = vld [vmem:[%s1 + $0x6f8] sm:$0xff]
    %v252 = vld [vmem:[%s1 + $0x700] sm:$0xff]
    %v253 = vld [vmem:[%s1 + $0x708] sm:$0xff]
    %v254 = vld [vmem:[%s1 + $0x710] sm:$0xff]
    %v255 = vld [vmem:[%s1 + $0x718] sm:$0xff]
    %v256 = vld [vmem:[%s1 + $0x720] sm:$0xff]
    %v257 = vld [vmem:[%s1 + $0x728] sm:$0xff]
    %v258 = vld [vmem:[%s1 + $0x730] sm:$0xff]
    %v259 = vld [vmem:[%s1 + $0x738] sm:$0xff]
    %v260 = vld [vmem:[%s1 + $0x740] sm:$0xff]
    %v261 = vld [vmem:[%s1 + $0x748] sm:$0xff]
    %v262 = vld [vmem:[%s1 + $0x750] sm:$0xff]
    %v263 = vld [vmem:[%s1 + $0x758] sm:$0xff]
    %v264 = vld [vmem:[%s1 + $0x760] sm:$0xff]
    %v265 = vld [vmem:[%s1 + $0x768] sm:$0xff]
    %v266 = vld [vmem:[%s1 + $0x770] sm:$0xff]
    %v267 = vld [vmem:[%s1 + $0x778] sm:$0xff]
    %v268 = vld [vmem:[%s1 + $0x780] sm:$0xff]
    %v269 = vld [vmem:[%s1 + $0x788] sm:$0xff]
    %v270 = vld [vmem:[%s1 + $0x790] sm:$0xff]
    %v271 = vld [vmem:[%s1 + $0x798] sm:$0xff]
    %v272 = vld [vmem:[%s1 + $0x7a0] sm:$0xff]
    %v273 = vld [vmem:[%s1 + $0x7a8] sm:$0xff]
    %v274 = vld [vmem:[%s1 + $0x7b0] sm:$0xff]
    %v275 = vld [vmem:[%s1 + $0x7b8] sm:$0xff]
    %v276 = vld [vmem:[%s1 + $0x7c0] sm:$0xff]
    %v277 = vld [vmem:[%s1 + $0x7c8] sm:$0xff]
    %v278 = vld [vmem:[%s1 + $0x7d0] sm:$0xff]
    %v279 = vld [vmem:[%s1 + $0x7d8] sm:$0xff]
    %v280 = vld [vmem:[%s1 + $0x7e0] sm:$0xff]
    %v281 = vld [vmem:[%s1 + $0x7e8] sm:$0xff]
    %v282 = vld [vmem:[%s1 + $0x7f0] sm:$0xff]
    %v283 = vld [vmem:[%s1 + $0x7f8] sm:$0xff]
    %v284 = vld [vmem:[%s1 + $0x800] sm:$0xff]
    %v285 = vld [vmem:[%s1 + $0x808] sm:$0xff]
    %v286 = vld [vmem:[%s1 + $0x810] sm:$0xff]
    %v287 = vld [vmem:[%s1 + $0x818] sm:$0xff]
    %v288 = vld [vmem:[%s1 + $0x820] sm:$0xff]
    %v289 = vld [vmem:[%s1 + $0x828] sm:$0xff]
    %v290 = vld [vmem:[%s1 + $0x830] sm:$0xff]
    %v291 = vld [vmem:[%s1 + $0x838] sm:$0xff]
    %v292 = vld [vmem:[%s1 + $0x840] sm:$0xff]
    %v293 = vld [vmem:[%s1 + $0x848] sm:$0xff]
    %v294 = vld [vmem:[%s1 + $0x850] sm:$0xff]
    %v295 = vld [vmem:[%s1 + $0x858] sm:$0xff]
    %v296 = vld [vmem:[%s1 + $0x860] sm:$0xff]
    %v297 = vld [vmem:[%s1 + $0x868] sm:$0xff]
    %v298 = vld [vmem:[%s1 + $0x870] sm:$0xff]
    %v299 = vld [vmem:[%s1 + $0x878] sm:$0xff]
    %v300 = vld [vmem:[%s1 + $0x880] sm:$0xff]
    %v301 = vld [vmem:[%s1 + $0x888] sm:$0xff]
    %v302 = vld [vmem:[%s1 + $0x890] sm:$0xff]
    %v303 = vld [vmem:[%s1 + $0x898] sm:$0xff]
    %v304 = vld [vmem:[%s1 + $0x8a0] sm:$0xff]
    %v305 = vld [vmem:[%s1 + $0x8a8] sm:$0xff]
    %v306 = vld [vmem:[%s1 + $0x8b0] sm:$0xff]
    %v307 = vld [vmem:[%s1 + $0x8b8] sm:$0xff]
    %v308 = vld [vmem:[%s1 + $0x8c0] sm:$0xff]
    %v309 = vld [vmem:[%s1 + $0x8c8] sm:$0xff]
    %v310 = vld [vmem:[%s1 + $0x8d0] sm:$0xff]
    %v311 = vld [vmem:[%s1 + $0x8d8] sm:$0xff]
    %v312 = vld [vmem:[%s1 + $0x8e0] sm:$0xff]
    %v313 = vld [vmem:[%s1 + $0x8e8] sm:$0xff]
    %v314 = vld [vmem:[%s1 + $0x8f0] sm:$0xff]
    %v315 = vld [vmem:[%s1 + $0x8f8] sm:$0xff]
    %v316 = vld [vmem:[%s1 + $0x900] sm:$0xff]
    %v317 = vld [vmem:[%s1 + $0x908] sm:$0xff]
    %v318 = vld [vmem:[%s1 + $0x910] sm:$0xff]
    %v319 = vld [vmem:[%s1 + $0x918] sm:$0xff]
    %v320 = vld [vmem:[%s1 + $0x920] sm:$0xff]
    %v321 = vld [vmem:[%s1 + $0x928] sm:$0xff]
    %v322 = vld [vmem:[%s1 + $0x930] sm:$0xff]
    %v323 = vld [vmem:[%s1 + $0x938] sm:$0xff]
    %v324 = vld [vmem:[%s1 + $0x940] sm:$0xff]
    %v325 = vld [vmem:[%s1 + $0x948] sm:$0xff]
    %v326 = vld [vmem:[%s1 + $0x950] sm:$0xff]
    %v327 = vld [vmem:[%s1 + $0x958] sm:$0xff]
    %v328 = vld [vmem:[%s1 + $0x960] sm:$0xff]
    %v329 = vld [vmem:[%s1 + $0x968] sm:$0xff]
    %v330 = vld [vmem:[%s1 + $0x970] sm:$0xff]
    %v331 = vld [vmem:[%s1 + $0x978] sm:$0xff]
    %v332 = vld [vmem:[%s1 + $0x980] sm:$0xff]
    %v333 = vld [vmem:[%s1 + $0x988] sm:$0xff]
    %v334 = vld [vmem:[%s1 + $0x990] sm:$0xff]
    %v335 = vld [vmem:[%s1 + $0x998] sm:$0xff]
    %v336 = vld [vmem:[%s1 + $0x9a0] sm:$0xff]
    %v337 = vld [vmem:[%s1 + $0x9a8] sm:$0xff]
    %v338 = vld [vmem:[%s1 + $0x9b0] sm:$0xff]
    %v339 = vld [vmem:[%s1 + $0x9b8] sm:$0xff]
    %v340 = vld [vmem:[%s1 + $0x9c0] sm:$0xff]
    %v341 = vld [vmem:[%s1 + $0x9c8] sm:$0xff]
    %v342 = vld [vmem:[%s1 + $0x9d0] sm:$0xff]
    %v343 = vld [vmem:[%s1 + $0x9d8] sm:$0xff]
    %v344 = vld [vmem:[%s1 + $0x9e0] sm:$0xff]
    %v345 = vld [vmem:[%s1 + $0x9e8] sm:$0xff]
    %v346 = vld [vmem:[%s1 + $0x9f0] sm:$0xff]
    %v347 = vld [vmem:[%s1 + $0x9f8] sm:$0xff]
    %v348 = vld [vmem:[%s1 + $0xa00] sm:$0xff]
    %v349 = vld [vmem:[%s1 + $0xa08] sm:$0xff]
    %v350 = vld [vmem:[%s1 + $0xa10] sm:$0xff]
    %v351 = vld [vmem:[%s1 + $0xa18] sm:$0xff]
    %v352 = vld [vmem:[%s1 + $0xa20] sm:$0xff]
    %v353 = vld [vmem:[%s1 + $0xa28] sm:$0xff]
    %v354 = vld [vmem:[%s1 + $0xa30] sm:$0xff]
    %v355 = vld [vmem:[%s1 + $0xa38] sm:$0xff]
    %v356 = vld [vmem:[%s1 + $0xa40] sm:$0xff]
    %v357 = vld [vmem:[%s1 + $0xa48] sm:$0xff]
    %v358 = vld [vmem:[%s1 + $0xa50] sm:$0xff]
    %v359 = vld [vmem:[%s1 + $0xa58] sm:$0xff]
    %v360 = vld [vmem:[%s1 + $0xa60] sm:$0xff]
    %v361 = vld [vmem:[%s1 + $0xa68] sm:$0xff]
    %v362 = vld [vmem:[%s1 + $0xa70] sm:$0xff]
    %v363 = vld [vmem:[%s1 + $0xa78] sm:$0xff]
    %v364 = vld [vmem:[%s1 + $0xa80] sm:$0xff]
    %v365 = vld [vmem:[%s1 + $0xa88] sm:$0xff]
    %v366 = vld [vmem:[%s1 + $0xa90] sm:$0xff]
    %v367 = vld [vmem:[%s1 + $0xa98] sm:$0xff]
    %v368 = vld [vmem:[%s1 + $0xaa0] sm:$0xff]
    %v369 = vld [vmem:[%s1 + $0xaa8] sm:$0xff]
    %v370 = vld [vmem:[%s1 + $0xab0] sm:$0xff]
    %v371 = vld [vmem:[%s1 + $0xab8] sm:$0xff]
    %v372 = vld [vmem:[%s1 + $0xac0] sm:$0xff]
    %v373 = vld [vmem:[%s1 + $0xac8] sm:$0xff]
    %v374 = vld [vmem:[%s1 + $0xad0] sm:$0xff]
    %v375 = vld [vmem:[%s1 + $0xad8] sm:$0xff]
    %v376 = vld [vmem:[%s1 + $0xae0] sm:$0xff]
    %v377 = vld [vmem:[%s1 + $0xae8] sm:$0xff]
    %v378 = vld [vmem:[%s1 + $0xaf0] sm:$0xff]
    %v379 = vld [vmem:[%s1 + $0xaf8] sm:$0xff]
    %v380 = vld [vmem:[%s1 + $0xb00] sm:$0xff]
    %v381 = vld [vmem:[%s1 + $0xb08] sm:$0xff]
    %v382 = vld [vmem:[%s1 + $0xb10] sm:$0xff]
    %v383 = vld [vmem:[%s1 + $0xb18] sm:$0xff]
    %v384 = vld [vmem:[%s1 + $0xb20] sm:$0xff]
    %v385 = vld [vmem:[%s1 + $0xb28] sm:$0xff]
    %v386 = vld [vmem:[%s1 + $0xb30] sm:$0xff]
    %v387 = vld [vmem:[%s1 + $0xb38] sm:$0xff]
    %v388 = vld [vmem:[%s1 + $0xb40] sm:$0xff]
    %v389 = vld [vmem:[%s1 + $0xb48] sm:$0xff]
    %v390 = vld [vmem:[%s1 + $0xb50] sm:$0xff]
    %v391 = vld [vmem:[%s1 + $0xb58] sm:$0xff]
    %v392 = vld [vmem:[%s1 + $0xb60] sm:$0xff]
    %v393 = vld [vmem:[%s1 + $0xb68] sm:$0xff]
    %v394 = vld [vmem:[%s1 + $0xb70] sm:$0xff]
    %v395 = vld [vmem:[%s1 + $0xb78] sm:$0xff]
    %v396 = vld [vmem:[%s1 + $0xb80] sm:$0xff]
    %v397 = vld [vmem:[%s1 + $0xb88] sm:$0xff]
    %v398 = vld [vmem:[%s1 + $0xb90] sm:$0xff]
    %v399 = vld [vmem:[%s1 + $0xb98] sm:$0xff]
    %v400 = vld [vmem:[%s1 + $0xba0] sm:$0xff]
    %v401 = vld [vmem:[%s1 + $0xba8] sm:$0xff]
    %v402 = vld [vmem:[%s1 + $0xbb0] sm:$0xff]
    %v403 = vld [vmem:[%s1 + $0xbb8] sm:$0xff]
    %v404 = vld [vmem:[%s1 + $0xbc0] sm:$0xff]
    %v405 = vld [vmem:[%s1 + $0xbc8] sm:$0xff]
    %v406 = vld [vmem:[%s1 + $0xbd0] sm:$0xff]
    %v407 = vld [vmem:[%s1 + $0xbd8] sm:$0xff]
    %v408 = vld [vmem:[%s1 + $0xbe0] sm:$0xff]
    %v409 = vld [vmem:[%s1 + $0xbe8] sm:$0xff]
    %v410 = vld [vmem:[%s1 + $0xbf0] sm:$0xff]
    %v411 = vld [vmem:[%s1 + $0xbf8] sm:$0xff]
    %v412 = vld [vmem:[%s1 + $0xc00] sm:$0xff]
    %v413 = vld [vmem:[%s1 + $0xc08] sm:$0xff]
    %v414 = vld [vmem:[%s1 + $0xc10] sm:$0xff]
    %v415 = vld [vmem:[%s1 + $0xc18] sm:$0xff]
    %v416 = vld [vmem:[%s1 + $0xc20] sm:$0xff]
    %v417 = vld [vmem:[%s1 + $0xc28] sm:$0xff]
    %v418 = vld [vmem:[%s1 + $0xc30] sm:$0xff]
    %v419 = vld [vmem:[%s1 + $0xc38] sm:$0xff]
    %v420 = vld [vmem:[%s2] sm:$0x1]
    %v422 = vperm.slane %v420, 0
    %431 = vst [vmem:[#allocation1] ss:$4 sm:$0xff] %v21
    %s432 = scalar_lea.vmem [#allocation1], 32
    %433 = vst [vmem:[%s432] ss:$4 sm:$0xff] %v22
    %v434 = vld.sshfl [vmem:[#allocation1] sm:$0xff pattern:$0x73625140]
    %v435 = vld.sshfl [vmem:[#allocation1 + $0x8] sm:$0xff pattern:$0x73625140]
    %v436 = vld.sshfl [vmem:[#allocation1 + $0x10] sm:$0xff pattern:$0x73625140]
    %v437 = vld.sshfl [vmem:[#allocation1 + $0x18] sm:$0xff pattern:$0x73625140]
    %v438 = vld.sshfl [vmem:[#allocation1 + $0x20] sm:$0xff pattern:$0x73625140]
    %v439 = vld.sshfl [vmem:[#allocation1 + $0x28] sm:$0xff pattern:$0x73625140]
    %v440 = vld.sshfl [vmem:[#allocation1 + $0x30] sm:$0xff pattern:$0x73625140]
    %v441 = vld.sshfl [vmem:[#allocation1 + $0x38] sm:$0xff pattern:$0x73625140]
    %442 = vst [vmem:[#allocation1] ss:$4 sm:$0xff] %v23
    %443 = vst [vmem:[%s432] ss:$4 sm:$0xff] %v24
    %v444 = vld.sshfl [vmem:[#allocation1] sm:$0xff pattern:$0x73625140]
    %v445 = vld.sshfl [vmem:[#allocation1 + $0x8] sm:$0xff pattern:$0x73625140]
    %v446 = vld.sshfl [vmem:[#allocation1 + $0x10] sm:$0xff pattern:$0x73625140]
    %v447 = vld.sshfl [vmem:[#allocation1 + $0x18] sm:$0xff pattern:$0x73625140]
    %v448 = vld.sshfl [vmem:[#allocation1 + $0x20] sm:$0xff pattern:$0x73625140]
    %v449 = vld.sshfl [vmem:[#allocation1 + $0x28] sm:$0xff pattern:$0x73625140]
    %v450 = vld.sshfl [vmem:[#allocation1 + $0x30] sm:$0xff pattern:$0x73625140]
    %v451 = vld.sshfl [vmem:[#allocation1 + $0x38] sm:$0xff pattern:$0x73625140]
    %452 = vst [vmem:[#allocation1] ss:$4 sm:$0xff] %v25
    %453 = vst [vmem:[%s432] ss:$4 sm:$0xff] %v26
    %v454 = vld.sshfl [vmem:[#allocation1] sm:$0xff pattern:$0x73625140]
    %v455 = vld.sshfl [vmem:[#allocation1 + $0x8] sm:$0xff pattern:$0x73625140]
    %v456 = vld.sshfl [vmem:[#allocation1 + $0x10] sm:$0xff pattern:$0x73625140]
    %v457 = vld.sshfl [vmem:[#allocation1 + $0x18] sm:$0xff pattern:$0x73625140]
    %v458 = vld.sshfl [vmem:[#allocation1 + $0x20] sm:$0xff pattern:$0x73625140]
    %v459 = vld.sshfl [vmem:[#allocation1 + $0x28] sm:$0xff pattern:$0x73625140]
    %v460 = vld.sshfl [vmem:[#allocation1 + $0x30] sm:$0xff pattern:$0x73625140]
    %v461 = vld.sshfl [vmem:[#allocation1 + $0x38] sm:$0xff pattern:$0x73625140]
    %462 = vst [vmem:[#allocation1] ss:$4 sm:$0xff] %v27
    %v463 = vld.sshfl [vmem:[#allocation1] sm:$0xff pattern:$0x73625140]
    %vm488 = vcmask 523264
    %v489 = vsel %vm488, %v463, 0
    %491 = vmatpush.msra.mxu0 %v43
    %492 = vmatpush.msra.mxu0 %v42
    %493 = vmatpush.msra.mxu0 %v41
    %494 = vmatpush.msra.mxu0 %v40
    %495 = vmatpush.msra.mxu0 %v39
    %496 = vmatpush.msra.mxu0 %v38
    %497 = vmatpush.msra.mxu0 %v37
    %498 = vmatpush.msra.mxu0 %v36
    %499 = vmatpush.msra.mxu0 %v35
    %500 = vmatpush.msra.mxu0 %v34
    %501 = vmatpush.msra.mxu0 %v33
    %502 = vmatpush.msra.mxu0 %v32
    %503 = vmatpush.msra.mxu0 %v31
    %504 = vmatpush.msra.mxu0 %v30
    %505 = vmatpush.msra.mxu0 %v29
    %506 = vmatpush.msra.mxu0 %v28
    %507 = vmatmul.f32.gmra.mxu0 %v434
    %v508 = vpop.f32.mrf.mxu0
    %v509 = vadd.f32 %v422, %v508
    %510 = vdwg.mxu0
    %511 = vmatpush.msra.mxu0 %v59
    %512 = vmatpush.msra.mxu0 %v58
    %513 = vmatpush.msra.mxu0 %v57
    %514 = vmatpush.msra.mxu0 %v56
    %515 = vmatpush.msra.mxu0 %v55
    %516 = vmatpush.msra.mxu0 %v54
    %517 = vmatpush.msra.mxu0 %v53
    %518 = vmatpush.msra.mxu0 %v52
    %519 = vmatpush.msra.mxu0 %v51
    %520 = vmatpush.msra.mxu0 %v50
    %521 = vmatpush.msra.mxu0 %v49
    %522 = vmatpush.msra.mxu0 %v48
    %523 = vmatpush.msra.mxu0 %v47
    %524 = vmatpush.msra.mxu0 %v46
    %525 = vmatpush.msra.mxu0 %v45
    %526 = vmatpush.msra.mxu0 %v44
    %527 = vmatmul.f32.gmra.mxu0 %v435
    %v528 = vpop.f32.mrf.mxu0
    %v529 = vadd.f32 %v509, %v528
    %530 = vdwg.mxu0
    %531 = vmatpush.msra.mxu0 %v75
    %532 = vmatpush.msra.mxu0 %v74
    %533 = vmatpush.msra.mxu0 %v73
    %534 = vmatpush.msra.mxu0 %v72
    %535 = vmatpush.msra.mxu0 %v71
    %536 = vmatpush.msra.mxu0 %v70
    %537 = vmatpush.msra.mxu0 %v69
    %538 = vmatpush.msra.mxu0 %v68
    %539 = vmatpush.msra.mxu0 %v67
    %540 = vmatpush.msra.mxu0 %v66
    %541 = vmatpush.msra.mxu0 %v65
    %542 = vmatpush.msra.mxu0 %v64
    %543 = vmatpush.msra.mxu0 %v63
    %544 = vmatpush.msra.mxu0 %v62
    %545 = vmatpush.msra.mxu0 %v61
    %546 = vmatpush.msra.mxu0 %v60
    %547 = vmatmul.f32.gmra.mxu0 %v436
    %v548 = vpop.f32.mrf.mxu0
    %v549 = vadd.f32 %v529, %v548
    %550 = vdwg.mxu0
    %551 = vmatpush.msra.mxu0 %v91
    %552 = vmatpush.msra.mxu0 %v90
    %553 = vmatpush.msra.mxu0 %v89
    %554 = vmatpush.msra.mxu0 %v88
    %555 = vmatpush.msra.mxu0 %v87
    %556 = vmatpush.msra.mxu0 %v86
    %557 = vmatpush.msra.mxu0 %v85
    %558 = vmatpush.msra.mxu0 %v84
    %559 = vmatpush.msra.mxu0 %v83
    %560 = vmatpush.msra.mxu0 %v82
    %561 = vmatpush.msra.mxu0 %v81
    %562 = vmatpush.msra.mxu0 %v80
    %563 = vmatpush.msra.mxu0 %v79
    %564 = vmatpush.msra.mxu0 %v78
    %565 = vmatpush.msra.mxu0 %v77
    %566 = vmatpush.msra.mxu0 %v76
    %567 = vmatmul.f32.gmra.mxu0 %v437
    %v568 = vpop.f32.mrf.mxu0
    %v569 = vadd.f32 %v549, %v568
    %570 = vdwg.mxu0
    %571 = vmatpush.msra.mxu0 %v107
    %572 = vmatpush.msra.mxu0 %v106
    %573 = vmatpush.msra.mxu0 %v105
    %574 = vmatpush.msra.mxu0 %v104
    %575 = vmatpush.msra.mxu0 %v103
    %576 = vmatpush.msra.mxu0 %v102
    %577 = vmatpush.msra.mxu0 %v101
    %578 = vmatpush.msra.mxu0 %v100
    %579 = vmatpush.msra.mxu0 %v99
    %580 = vmatpush.msra.mxu0 %v98
    %581 = vmatpush.msra.mxu0 %v97
    %582 = vmatpush.msra.mxu0 %v96
    %583 = vmatpush.msra.mxu0 %v95
    %584 = vmatpush.msra.mxu0 %v94
    %585 = vmatpush.msra.mxu0 %v93
    %586 = vmatpush.msra.mxu0 %v92
    %587 = vmatmul.f32.gmra.mxu0 %v438
    %v588 = vpop.f32.mrf.mxu0
    %v589 = vadd.f32 %v569, %v588
    %590 = vdwg.mxu0
    %591 = vmatpush.msra.mxu0 %v123
    %592 = vmatpush.msra.mxu0 %v122
    %593 = vmatpush.msra.mxu0 %v121
    %594 = vmatpush.msra.mxu0 %v120
    %595 = vmatpush.msra.mxu0 %v119
    %596 = vmatpush.msra.mxu0 %v118
    %597 = vmatpush.msra.mxu0 %v117
    %598 = vmatpush.msra.mxu0 %v116
    %599 = vmatpush.msra.mxu0 %v115
    %600 = vmatpush.msra.mxu0 %v114
    %601 = vmatpush.msra.mxu0 %v113
    %602 = vmatpush.msra.mxu0 %v112
    %603 = vmatpush.msra.mxu0 %v111
    %604 = vmatpush.msra.mxu0 %v110
    %605 = vmatpush.msra.mxu0 %v109
    %606 = vmatpush.msra.mxu0 %v108
    %607 = vmatmul.f32.gmra.mxu0 %v439
    %v608 = vpop.f32.mrf.mxu0
    %v609 = vadd.f32 %v589, %v608
    %610 = vdwg.mxu0
    %611 = vmatpush.msra.mxu0 %v139
    %612 = vmatpush.msra.mxu0 %v138
    %613 = vmatpush.msra.mxu0 %v137
    %614 = vmatpush.msra.mxu0 %v136
    %615 = vmatpush.msra.mxu0 %v135
    %616 = vmatpush.msra.mxu0 %v134
    %617 = vmatpush.msra.mxu0 %v133
    %618 = vmatpush.msra.mxu0 %v132
    %619 = vmatpush.msra.mxu0 %v131
    %620 = vmatpush.msra.mxu0 %v130
    %621 = vmatpush.msra.mxu0 %v129
    %622 = vmatpush.msra.mxu0 %v128
    %623 = vmatpush.msra.mxu0 %v127
    %624 = vmatpush.msra.mxu0 %v126
    %625 = vmatpush.msra.mxu0 %v125
    %626 = vmatpush.msra.mxu0 %v124
    %627 = vmatmul.f32.gmra.mxu0 %v440
    %v628 = vpop.f32.mrf.mxu0
    %v629 = vadd.f32 %v609, %v628
    %630 = vdwg.mxu0
    %631 = vmatpush.msra.mxu0 %v155
    %632 = vmatpush.msra.mxu0 %v154
    %633 = vmatpush.msra.mxu0 %v153
    %634 = vmatpush.msra.mxu0 %v152
    %635 = vmatpush.msra.mxu0 %v151
    %636 = vmatpush.msra.mxu0 %v150
    %637 = vmatpush.msra.mxu0 %v149
    %638 = vmatpush.msra.mxu0 %v148
    %639 = vmatpush.msra.mxu0 %v147
    %640 = vmatpush.msra.mxu0 %v146
    %641 = vmatpush.msra.mxu0 %v145
    %642 = vmatpush.msra.mxu0 %v144
    %643 = vmatpush.msra.mxu0 %v143
    %644 = vmatpush.msra.mxu0 %v142
    %645 = vmatpush.msra.mxu0 %v141
    %646 = vmatpush.msra.mxu0 %v140
    %647 = vmatmul.f32.gmra.mxu0 %v441
    %v648 = vpop.f32.mrf.mxu0
    %v649 = vadd.f32 %v629, %v648
    %650 = vdwg.mxu0
    %651 = vmatpush.msra.mxu0 %v171
    %652 = vmatpush.msra.mxu0 %v170
    %653 = vmatpush.msra.mxu0 %v169
    %654 = vmatpush.msra.mxu0 %v168
    %655 = vmatpush.msra.mxu0 %v167
    %656 = vmatpush.msra.mxu0 %v166
    %657 = vmatpush.msra.mxu0 %v165
    %658 = vmatpush.msra.mxu0 %v164
    %659 = vmatpush.msra.mxu0 %v163
    %660 = vmatpush.msra.mxu0 %v162
    %661 = vmatpush.msra.mxu0 %v161
    %662 = vmatpush.msra.mxu0 %v160
    %663 = vmatpush.msra.mxu0 %v159
    %664 = vmatpush.msra.mxu0 %v158
    %665 = vmatpush.msra.mxu0 %v157
    %666 = vmatpush.msra.mxu0 %v156
    %667 = vmatmul.f32.gmra.mxu0 %v444
    %v668 = vpop.f32.mrf.mxu0
    %v669 = vadd.f32 %v649, %v668
    %670 = vdwg.mxu0
    %671 = vmatpush.msra.mxu0 %v187
    %672 = vmatpush.msra.mxu0 %v186
    %673 = vmatpush.msra.mxu0 %v185
    %674 = vmatpush.msra.mxu0 %v184
    %675 = vmatpush.msra.mxu0 %v183
    %676 = vmatpush.msra.mxu0 %v182
    %677 = vmatpush.msra.mxu0 %v181
    %678 = vmatpush.msra.mxu0 %v180
    %679 = vmatpush.msra.mxu0 %v179
    %680 = vmatpush.msra.mxu0 %v178
    %681 = vmatpush.msra.mxu0 %v177
    %682 = vmatpush.msra.mxu0 %v176
    %683 = vmatpush.msra.mxu0 %v175
    %684 = vmatpush.msra.mxu0 %v174
    %685 = vmatpush.msra.mxu0 %v173
    %686 = vmatpush.msra.mxu0 %v172
    %687 = vmatmul.f32.gmra.mxu0 %v445
    %v688 = vpop.f32.mrf.mxu0
    %v689 = vadd.f32 %v669, %v688
    %690 = vdwg.mxu0
    %691 = vmatpush.msra.mxu0 %v203
    %692 = vmatpush.msra.mxu0 %v202
    %693 = vmatpush.msra.mxu0 %v201
    %694 = vmatpush.msra.mxu0 %v200
    %695 = vmatpush.msra.mxu0 %v199
    %696 = vmatpush.msra.mxu0 %v198
    %697 = vmatpush.msra.mxu0 %v197
    %698 = vmatpush.msra.mxu0 %v196
    %699 = vmatpush.msra.mxu0 %v195
    %700 = vmatpush.msra.mxu0 %v194
    %701 = vmatpush.msra.mxu0 %v193
    %702 = vmatpush.msra.mxu0 %v192
    %703 = vmatpush.msra.mxu0 %v191
    %704 = vmatpush.msra.mxu0 %v190
    %705 = vmatpush.msra.mxu0 %v189
    %706 = vmatpush.msra.mxu0 %v188
    %707 = vmatmul.f32.gmra.mxu0 %v446
    %v708 = vpop.f32.mrf.mxu0
    %v709 = vadd.f32 %v689, %v708
    %710 = vdwg.mxu0
    %711 = vmatpush.msra.mxu0 %v219
    %712 = vmatpush.msra.mxu0 %v218
    %713 = vmatpush.msra.mxu0 %v217
    %714 = vmatpush.msra.mxu0 %v216
    %715 = vmatpush.msra.mxu0 %v215
    %716 = vmatpush.msra.mxu0 %v214
    %717 = vmatpush.msra.mxu0 %v213
    %718 = vmatpush.msra.mxu0 %v212
    %719 = vmatpush.msra.mxu0 %v211
    %720 = vmatpush.msra.mxu0 %v210
    %721 = vmatpush.msra.mxu0 %v209
    %722 = vmatpush.msra.mxu0 %v208
    %723 = vmatpush.msra.mxu0 %v207
    %724 = vmatpush.msra.mxu0 %v206
    %725 = vmatpush.msra.mxu0 %v205
    %726 = vmatpush.msra.mxu0 %v204
    %727 = vmatmul.f32.gmra.mxu0 %v447
    %v728 = vpop.f32.mrf.mxu0
    %v729 = vadd.f32 %v709, %v728
    %730 = vdwg.mxu0
    %731 = vmatpush.msra.mxu0 %v235
    %732 = vmatpush.msra.mxu0 %v234
    %733 = vmatpush.msra.mxu0 %v233
    %734 = vmatpush.msra.mxu0 %v232
    %735 = vmatpush.msra.mxu0 %v231
    %736 = vmatpush.msra.mxu0 %v230
    %737 = vmatpush.msra.mxu0 %v229
    %738 = vmatpush.msra.mxu0 %v228
    %739 = vmatpush.msra.mxu0 %v227
    %740 = vmatpush.msra.mxu0 %v226
    %741 = vmatpush.msra.mxu0 %v225
    %742 = vmatpush.msra.mxu0 %v224
    %743 = vmatpush.msra.mxu0 %v223
    %744 = vmatpush.msra.mxu0 %v222
    %745 = vmatpush.msra.mxu0 %v221
    %746 = vmatpush.msra.mxu0 %v220
    %747 = vmatmul.f32.gmra.mxu0 %v448
    %v748 = vpop.f32.mrf.mxu0
    %v749 = vadd.f32 %v729, %v748
    %750 = vdwg.mxu0
    %751 = vmatpush.msra.mxu0 %v251
    %752 = vmatpush.msra.mxu0 %v250
    %753 = vmatpush.msra.mxu0 %v249
    %754 = vmatpush.msra.mxu0 %v248
    %755 = vmatpush.msra.mxu0 %v247
    %756 = vmatpush.msra.mxu0 %v246
    %757 = vmatpush.msra.mxu0 %v245
    %758 = vmatpush.msra.mxu0 %v244
    %759 = vmatpush.msra.mxu0 %v243
    %760 = vmatpush.msra.mxu0 %v242
    %761 = vmatpush.msra.mxu0 %v241
    %762 = vmatpush.msra.mxu0 %v240
    %763 = vmatpush.msra.mxu0 %v239
    %764 = vmatpush.msra.mxu0 %v238
    %765 = vmatpush.msra.mxu0 %v237
    %766 = vmatpush.msra.mxu0 %v236
    %767 = vmatmul.f32.gmra.mxu0 %v449
    %v768 = vpop.f32.mrf.mxu0
    %v769 = vadd.f32 %v749, %v768
    %770 = vdwg.mxu0
    %771 = vmatpush.msra.mxu0 %v267
    %772 = vmatpush.msra.mxu0 %v266
    %773 = vmatpush.msra.mxu0 %v265
    %774 = vmatpush.msra.mxu0 %v264
    %775 = vmatpush.msra.mxu0 %v263
    %776 = vmatpush.msra.mxu0 %v262
    %777 = vmatpush.msra.mxu0 %v261
    %778 = vmatpush.msra.mxu0 %v260
    %779 = vmatpush.msra.mxu0 %v259
    %780 = vmatpush.msra.mxu0 %v258
    %781 = vmatpush.msra.mxu0 %v257
    %782 = vmatpush.msra.mxu0 %v256
    %783 = vmatpush.msra.mxu0 %v255
    %784 = vmatpush.msra.mxu0 %v254
    %785 = vmatpush.msra.mxu0 %v253
    %786 = vmatpush.msra.mxu0 %v252
    %787 = vmatmul.f32.gmra.mxu0 %v450
    %v788 = vpop.f32.mrf.mxu0
    %v789 = vadd.f32 %v769, %v788
    %790 = vdwg.mxu0
    %791 = vmatpush.msra.mxu0 %v283
    %792 = vmatpush.msra.mxu0 %v282
    %793 = vmatpush.msra.mxu0 %v281
    %794 = vmatpush.msra.mxu0 %v280
    %795 = vmatpush.msra.mxu0 %v279
    %796 = vmatpush.msra.mxu0 %v278
    %797 = vmatpush.msra.mxu0 %v277
    %798 = vmatpush.msra.mxu0 %v276
    %799 = vmatpush.msra.mxu0 %v275
    %800 = vmatpush.msra.mxu0 %v274
    %801 = vmatpush.msra.mxu0 %v273
    %802 = vmatpush.msra.mxu0 %v272
    %803 = vmatpush.msra.mxu0 %v271
    %804 = vmatpush.msra.mxu0 %v270
    %805 = vmatpush.msra.mxu0 %v269
    %806 = vmatpush.msra.mxu0 %v268
    %807 = vmatmul.f32.gmra.mxu0 %v451
    %v808 = vpop.f32.mrf.mxu0
    %v809 = vadd.f32 %v789, %v808
    %810 = vdwg.mxu0
    %811 = vmatpush.msra.mxu0 %v299
    %812 = vmatpush.msra.mxu0 %v298
    %813 = vmatpush.msra.mxu0 %v297
    %814 = vmatpush.msra.mxu0 %v296
    %815 = vmatpush.msra.mxu0 %v295
    %816 = vmatpush.msra.mxu0 %v294
    %817 = vmatpush.msra.mxu0 %v293
    %818 = vmatpush.msra.mxu0 %v292
    %819 = vmatpush.msra.mxu0 %v291
    %820 = vmatpush.msra.mxu0 %v290
    %821 = vmatpush.msra.mxu0 %v289
    %822 = vmatpush.msra.mxu0 %v288
    %823 = vmatpush.msra.mxu0 %v287
    %824 = vmatpush.msra.mxu0 %v286
    %825 = vmatpush.msra.mxu0 %v285
    %826 = vmatpush.msra.mxu0 %v284
    %827 = vmatmul.f32.gmra.mxu0 %v454
    %v828 = vpop.f32.mrf.mxu0
    %v829 = vadd.f32 %v809, %v828
    %830 = vdwg.mxu0
    %831 = vmatpush.msra.mxu0 %v315
    %832 = vmatpush.msra.mxu0 %v314
    %833 = vmatpush.msra.mxu0 %v313
    %834 = vmatpush.msra.mxu0 %v312
    %835 = vmatpush.msra.mxu0 %v311
    %836 = vmatpush.msra.mxu0 %v310
    %837 = vmatpush.msra.mxu0 %v309
    %838 = vmatpush.msra.mxu0 %v308
    %839 = vmatpush.msra.mxu0 %v307
    %840 = vmatpush.msra.mxu0 %v306
    %841 = vmatpush.msra.mxu0 %v305
    %842 = vmatpush.msra.mxu0 %v304
    %843 = vmatpush.msra.mxu0 %v303
    %844 = vmatpush.msra.mxu0 %v302
    %845 = vmatpush.msra.mxu0 %v301
    %846 = vmatpush.msra.mxu0 %v300
    %847 = vmatmul.f32.gmra.mxu0 %v455
    %v848 = vpop.f32.mrf.mxu0
    %v849 = vadd.f32 %v829, %v848
    %850 = vdwg.mxu0
    %851 = vmatpush.msra.mxu0 %v331
    %852 = vmatpush.msra.mxu0 %v330
    %853 = vmatpush.msra.mxu0 %v329
    %854 = vmatpush.msra.mxu0 %v328
    %855 = vmatpush.msra.mxu0 %v327
    %856 = vmatpush.msra.mxu0 %v326
    %857 = vmatpush.msra.mxu0 %v325
    %858 = vmatpush.msra.mxu0 %v324
    %859 = vmatpush.msra.mxu0 %v323
    %860 = vmatpush.msra.mxu0 %v322
    %861 = vmatpush.msra.mxu0 %v321
    %862 = vmatpush.msra.mxu0 %v320
    %863 = vmatpush.msra.mxu0 %v319
    %864 = vmatpush.msra.mxu0 %v318
    %865 = vmatpush.msra.mxu0 %v317
    %866 = vmatpush.msra.mxu0 %v316
    %867 = vmatmul.f32.gmra.mxu0 %v456
    %v868 = vpop.f32.mrf.mxu0
    %v869 = vadd.f32 %v849, %v868
    %870 = vdwg.mxu0
    %871 = vmatpush.msra.mxu0 %v347
    %872 = vmatpush.msra.mxu0 %v346
    %873 = vmatpush.msra.mxu0 %v345
    %874 = vmatpush.msra.mxu0 %v344
    %875 = vmatpush.msra.mxu0 %v343
    %876 = vmatpush.msra.mxu0 %v342
    %877 = vmatpush.msra.mxu0 %v341
    %878 = vmatpush.msra.mxu0 %v340
    %879 = vmatpush.msra.mxu0 %v339
    %880 = vmatpush.msra.mxu0 %v338
    %881 = vmatpush.msra.mxu0 %v337
    %882 = vmatpush.msra.mxu0 %v336
    %883 = vmatpush.msra.mxu0 %v335
    %884 = vmatpush.msra.mxu0 %v334
    %885 = vmatpush.msra.mxu0 %v333
    %886 = vmatpush.msra.mxu0 %v332
    %887 = vmatmul.f32.gmra.mxu0 %v457
    %v888 = vpop.f32.mrf.mxu0
    %v889 = vadd.f32 %v869, %v888
    %890 = vdwg.mxu0
    %891 = vmatpush.msra.mxu0 %v363
    %892 = vmatpush.msra.mxu0 %v362
    %893 = vmatpush.msra.mxu0 %v361
    %894 = vmatpush.msra.mxu0 %v360
    %895 = vmatpush.msra.mxu0 %v359
    %896 = vmatpush.msra.mxu0 %v358
    %897 = vmatpush.msra.mxu0 %v357
    %898 = vmatpush.msra.mxu0 %v356
    %899 = vmatpush.msra.mxu0 %v355
    %900 = vmatpush.msra.mxu0 %v354
    %901 = vmatpush.msra.mxu0 %v353
    %902 = vmatpush.msra.mxu0 %v352
    %903 = vmatpush.msra.mxu0 %v351
    %904 = vmatpush.msra.mxu0 %v350
    %905 = vmatpush.msra.mxu0 %v349
    %906 = vmatpush.msra.mxu0 %v348
    %907 = vmatmul.f32.gmra.mxu0 %v458
    %v908 = vpop.f32.mrf.mxu0
    %v909 = vadd.f32 %v889, %v908
    %910 = vdwg.mxu0
    %911 = vmatpush.msra.mxu0 %v379
    %912 = vmatpush.msra.mxu0 %v378
    %913 = vmatpush.msra.mxu0 %v377
    %914 = vmatpush.msra.mxu0 %v376
    %915 = vmatpush.msra.mxu0 %v375
    %916 = vmatpush.msra.mxu0 %v374
    %917 = vmatpush.msra.mxu0 %v373
    %918 = vmatpush.msra.mxu0 %v372
    %919 = vmatpush.msra.mxu0 %v371
    %920 = vmatpush.msra.mxu0 %v370
    %921 = vmatpush.msra.mxu0 %v369
    %922 = vmatpush.msra.mxu0 %v368
    %923 = vmatpush.msra.mxu0 %v367
    %924 = vmatpush.msra.mxu0 %v366
    %925 = vmatpush.msra.mxu0 %v365
    %926 = vmatpush.msra.mxu0 %v364
    %927 = vmatmul.f32.gmra.mxu0 %v459
    %v928 = vpop.f32.mrf.mxu0
    %v929 = vadd.f32 %v909, %v928
    %930 = vdwg.mxu0
    %931 = vmatpush.msra.mxu0 %v395
    %932 = vmatpush.msra.mxu0 %v394
    %933 = vmatpush.msra.mxu0 %v393
    %934 = vmatpush.msra.mxu0 %v392
    %935 = vmatpush.msra.mxu0 %v391
    %936 = vmatpush.msra.mxu0 %v390
    %937 = vmatpush.msra.mxu0 %v389
    %938 = vmatpush.msra.mxu0 %v388
    %939 = vmatpush.msra.mxu0 %v387
    %940 = vmatpush.msra.mxu0 %v386
    %941 = vmatpush.msra.mxu0 %v385
    %942 = vmatpush.msra.mxu0 %v384
    %943 = vmatpush.msra.mxu0 %v383
    %944 = vmatpush.msra.mxu0 %v382
    %945 = vmatpush.msra.mxu0 %v381
    %946 = vmatpush.msra.mxu0 %v380
    %947 = vmatmul.f32.gmra.mxu0 %v460
    %v948 = vpop.f32.mrf.mxu0
    %v949 = vadd.f32 %v929, %v948
    %950 = vdwg.mxu0
    %951 = vmatpush.msra.mxu0 %v411
    %952 = vmatpush.msra.mxu0 %v410
    %953 = vmatpush.msra.mxu0 %v409
    %954 = vmatpush.msra.mxu0 %v408
    %955 = vmatpush.msra.mxu0 %v407
    %956 = vmatpush.msra.mxu0 %v406
    %957 = vmatpush.msra.mxu0 %v405
    %958 = vmatpush.msra.mxu0 %v404
    %959 = vmatpush.msra.mxu0 %v403
    %960 = vmatpush.msra.mxu0 %v402
    %961 = vmatpush.msra.mxu0 %v401
    %962 = vmatpush.msra.mxu0 %v400
    %963 = vmatpush.msra.mxu0 %v399
    %964 = vmatpush.msra.mxu0 %v398
    %965 = vmatpush.msra.mxu0 %v397
    %966 = vmatpush.msra.mxu0 %v396
    %967 = vmatmul.f32.gmra.mxu0 %v461
    %v968 = vpop.f32.mrf.mxu0
    %v969 = vadd.f32 %v949, %v968
    %970 = vdwg.mxu0
    %971 = vmatpush.msra.mxu0 0.0
    %972 = vmatpush.msra.mxu0 0.0
    %973 = vmatpush.msra.mxu0 0.0
    %974 = vmatpush.msra.mxu0 0.0
    %975 = vmatpush.msra.mxu0 0.0
    %976 = vmatpush.msra.mxu0 0.0
    %977 = vmatpush.msra.mxu0 0.0
    %978 = vmatpush.msra.mxu0 0.0
    %979 = vmatpush.msra.mxu0 %v419
    %980 = vmatpush.msra.mxu0 %v418
    %981 = vmatpush.msra.mxu0 %v417
    %982 = vmatpush.msra.mxu0 %v416
    %983 = vmatpush.msra.mxu0 %v415
    %984 = vmatpush.msra.mxu0 %v414
    %985 = vmatpush.msra.mxu0 %v413
    %986 = vmatpush.msra.mxu0 %v412
    %987 = vmatmul.f32.gmra.mxu0 %v489
    %v988 = vpop.f32.mrf.mxu0
    %v989 = vadd.f32 %v969, %v988
    %990 = vdwg.mxu0
    %v991 = vmax.f32 %v989, 0.0
    %v992 = vld [vmem:[%s3] sm:$0xff]
    %v993 = vld [vmem:[%s3 + $0x8] sm:$0xff]
    %v994 = vld [vmem:[%s3 + $0x10] sm:$0xff]
    %v995 = vld [vmem:[%s3 + $0x18] sm:$0xff]
    %v996 = vld [vmem:[%s3 + $0x20] sm:$0xff]
    %v997 = vld [vmem:[%s3 + $0x28] sm:$0xff]
    %v998 = vld [vmem:[%s3 + $0x30] sm:$0xff]
    %v999 = vld [vmem:[%s3 + $0x38] sm:$0xff]
    %v1000 = vld [vmem:[%s3 + $0x40] sm:$0xff]
    %v1001 = vld [vmem:[%s3 + $0x48] sm:$0xff]
    %v1002 = vld [vmem:[%s3 + $0x50] sm:$0xff]
    %v1003 = vld [vmem:[%s3 + $0x58] sm:$0xff]
    %v1004 = vld [vmem:[%s3 + $0x60] sm:$0xff]
    %v1005 = vld [vmem:[%s3 + $0x68] sm:$0xff]
    %v1006 = vld [vmem:[%s3 + $0x70] sm:$0xff]
    %v1007 = vld [vmem:[%s3 + $0x78] sm:$0xff]
    %v1008 = vld [vmem:[%s4] sm:$0x1]
    %v1010 = vperm.slane %v1008, 0
    %1012 = vmatpush.msra.mxu0 %v1007
    %1013 = vmatpush.msra.mxu0 %v1006
    %1014 = vmatpush.msra.mxu0 %v1005
    %1015 = vmatpush.msra.mxu0 %v1004
    %1016 = vmatpush.msra.mxu0 %v1003
    %1017 = vmatpush.msra.mxu0 %v1002
    %1018 = vmatpush.msra.mxu0 %v1001
    %1019 = vmatpush.msra.mxu0 %v1000
    %1020 = vmatpush.msra.mxu0 %v999
    %1021 = vmatpush.msra.mxu0 %v998
    %1022 = vmatpush.msra.mxu0 %v997
    %1023 = vmatpush.msra.mxu0 %v996
    %1024 = vmatpush.msra.mxu0 %v995
    %1025 = vmatpush.msra.mxu0 %v994
    %1026 = vmatpush.msra.mxu0 %v993
    %1027 = vmatpush.msra.mxu0 %v992
    %1028 = vmatmul.f32.gmra.mxu0 %v991
    %v1029 = vpop.f32.mrf.mxu0
    %v1030 = vadd.f32 %v1010, %v1029
    %1031 = vdwg.mxu0
    %vm1032 = vcmask 74752
    %1033 = vst.msk [vmem:[#allocation2] sm:$0x3] %vm1032, %v1030
    // Predicated region
    $region22: #{simple_cnn_forward.3} parent=1 // pred_check
      _
    $region23: #{simple_cnn_forward.3} parent=1 // pred_check_branch
      %1035 = sbr.rel (0) target = $region25
    $region24: #{simple_cnn_forward.3} parent=1 // pred_region
      %1037 = vsyncadd [#allocation3], 0
      %s1039 = sshll.u32 [#allocation2], 4
      %s1040 = int_to_ptr.vmem [resolvable:$true] %s1039
      %s1041 = sshll.u32 %s5, 4
      %s1042 = int_to_ptr.hbm [resolvable:$true] %s1041
      %1044 = dma.vmem_to_hbm [thread:$0]  %s1040, 32, %s1042, [#allocation3]
    $region25: #{simple_cnn_forward.3} parent=1 // pred_fallthru
      _
    // Predicated region
    $region26: #{simple_cnn_forward.3} parent=1 // pred_check
      _
    $region27: #{simple_cnn_forward.3} parent=1 // pred_check_branch
      %1046 = sbr.rel (0) target = $region29
    $region28: #{simple_cnn_forward.3} parent=1 // pred_region
      %1048 = dma.done [#allocation3], 32
    $region29: #{simple_cnn_forward.3} parent=1 // pred_fallthru
      _
    %1049 = vsyncpa [#allocation3], 1

// kernel: simple_cnn_forward.2
$region0: #{simple_cnn_forward.2}
  #allocation0 [shape = 'u32[]', space=smem, size = 0x4, offset = 0x4, fixed_abs, tag = 'smem constant byte address 0x4 - core index']
  #allocation1 [shape = 'u32[72,128]{1,0:T(1,128)}', space=vmem, size = 0x9000, scoped, tag = 'internal scratch']
  #allocation2 [shape = 'f32[784,32]{1,0:T(8,128)}', space=vmem, size = 0x62000, scoped, tag = 'scratch operand']
  #allocation3 [shape = 'f32[392,32]{1,0:T(8,128)}', space=vmem, size = 0x31000, scoped, tag = 'scratch operand']
  #allocation4 [shape = 'f32[16,16,32]{2,1,0:T(8,128)}', space=vmem, size = 0x20000, scoped, tag = 'scratch operand']
  #allocation5 [shape = 'f32[196,288]{1,0:T(8,128)}', space=vmem, size = 0x4b000, scoped, tag = 'scratch operand']
  #allocation6 [shape = 'f32[196,64]{1,0:T(8,128)}', space=vmem, size = 0x19000, scoped, tag = 'scratch operand']
  #allocation7 [shape = 'f32[98,64]{1,0:T(8,128)}', space=vmem, size = 0xd000, scoped, tag = 'scratch operand']
  %s0 = inlined_call_operand.vmem [shape: f32[2,784,9], index: 0, kind: input, shape index: {}]
  %s1 = inlined_call_operand.vmem [shape: f32[9,32], index: 1, kind: input, shape index: {}]
  %s2 = inlined_call_operand.vmem [shape: f32[1,32], index: 2, kind: input, shape index: {}]
  %s3 = inlined_call_operand.vmem [shape: f32[288,64], index: 3, kind: input, shape index: {}]
  %s4 = inlined_call_operand.vmem [shape: f32[1,64], index: 4, kind: input, shape index: {}]
  %s5 = inlined_call_operand.vmem [shape: f32[2,49,64], index: 5, kind: output, shape index: {}]
  %s6 = sld [smem:[#allocation0]]
  $region53: #{simple_cnn_forward.2} parent=0
    _
  %s8 = ssub.s32 1, %s6
  %s9 = scalar_select 0, %s8, %s6
  loop: start=0, step=1, limit=4
  $region2: #{simple_cnn_forward.2} parent=0 // loop_pre_header
    _
  $region3: #{simple_cnn_forward.2} parent=0 // loop_header
    %s11 = sphi 0, %s15
    %p12 = scmp.ge.s32.totalorder %s11, 4
    %s21 = sphi 0, %s23
    %s24 = sphi 0, %s21
    %s25 = sphi 0, %s24
    %s41 = sphi 0, %s25
    %s45 = sphi 0, %s45
    %s47 = sphi 0, %s45
    %s48 = sphi 0, %s47
    %s62 = sphi 0, %s48
    %s66 = sphi 0, %s66
    %s68 = sphi 0, %s66
    %s69 = sphi 0, %s68
    %s83 = sphi 0, %s69
    %s87 = sphi 0, %s87
    %s89 = sphi 0, %s87
    %s90 = sphi 0, %s89
    %s104 = sphi 0, %s90
    %s108 = sphi 0, %s108
    %s110 = sphi 0, %s108
    %s111 = sphi 0, %s110
    %s125 = sphi 0, %s111
    %s131 = sphi 0, %s133
    %s134 = sphi 0, %s131
    %s135 = sphi 0, %s134
    %s151 = sphi 0, %s135
  $region4: #{simple_cnn_forward.2} parent=0 // loop_header_branch
    %14 = sbr.rel (%p12) target = $region8
  $region5: #{simple_cnn_forward.2} parent=0 // loop_body
    %s16 = ssub.s32 %s11, 1
    %s17 = ssub.s32 %s11, 2
    %s18 = sadd.s32 %s11, 1
    %s19 = ssub.s32 %s11, %s18
    %p20 = scmp.eq.s32.totalorder %s19, 0
    %s22 = sadd.s32 %s21, 1
    %s23 = scalar_select %p20, %s21, %s22
    %p26 = pneg %p20
    %p27 = scmp.eq.s32.totalorder %s11, 1
    %p28 = por %p26, %p27
    %p29 = scmp.ne.s32.totalorder %s21, %s24
    %p30 = scmp.eq.s32.totalorder %s11, 0
    %p31 = por %p29, %p30
    %p32 = scmp.ne.s32.totalorder %s21, %s24
    %p33 = scmp.eq.s32.totalorder %s16, 1
    %p34 = por %p32, %p33
    %p35 = scmp.ne.s32.totalorder %s24, %s25
    %p36 = scmp.eq.s32.totalorder %s16, 0
    %p37 = por %p35, %p36
    %p38 = scmp.ne.s32.totalorder %s24, %s25
    %p39 = scmp.eq.s32.totalorder %s17, 1
    %p40 = por %p38, %p39
    %p42 = scmp.ne.s32.totalorder %s25, %s41
    %p43 = scmp.eq.s32.totalorder %s17, 0
    %p44 = por %p42, %p43
    %s46 = sadd.s32 %s45, 1
    %p49 = scmp.eq.s32.totalorder %s11, 1
    %p50 = scmp.ne.s32.totalorder %s45, %s47
    %p51 = scmp.eq.s32.totalorder %s11, 0
    %p52 = por %p50, %p51
    %p53 = scmp.ne.s32.totalorder %s45, %s47
    %p54 = scmp.eq.s32.totalorder %s16, 1
    %p55 = por %p53, %p54
    %p56 = scmp.ne.s32.totalorder %s47, %s48
    %p57 = scmp.eq.s32.totalorder %s16, 0
    %p58 = por %p56, %p57
    %p59 = scmp.ne.s32.totalorder %s47, %s48
    %p60 = scmp.eq.s32.totalorder %s17, 1
    %p61 = por %p59, %p60
    %p63 = scmp.ne.s32.totalorder %s48, %s62
    %p64 = scmp.eq.s32.totalorder %s17, 0
    %p65 = por %p63, %p64
    %s67 = sadd.s32 %s66, 1
    %p70 = scmp.eq.s32.totalorder %s11, 1
    %p71 = scmp.ne.s32.totalorder %s66, %s68
    %p72 = scmp.eq.s32.totalorder %s11, 0
    %p73 = por %p71, %p72
    %p74 = scmp.ne.s32.totalorder %s66, %s68
    %p75 = scmp.eq.s32.totalorder %s16, 1
    %p76 = por %p74, %p75
    %p77 = scmp.ne.s32.totalorder %s68, %s69
    %p78 = scmp.eq.s32.totalorder %s16, 0
    %p79 = por %p77, %p78
    %p80 = scmp.ne.s32.totalorder %s68, %s69
    %p81 = scmp.eq.s32.totalorder %s17, 1
    %p82 = por %p80, %p81
    %p84 = scmp.ne.s32.totalorder %s69, %s83
    %p85 = scmp.eq.s32.totalorder %s17, 0
    %p86 = por %p84, %p85
    %s88 = sadd.s32 %s87, 1
    %p91 = scmp.eq.s32.totalorder %s11, 1
    %p92 = scmp.ne.s32.totalorder %s87, %s89
    %p93 = scmp.eq.s32.totalorder %s11, 0
    %p94 = por %p92, %p93
    %p95 = scmp.ne.s32.totalorder %s87, %s89
    %p96 = scmp.eq.s32.totalorder %s16, 1
    %p97 = por %p95, %p96
    %p98 = scmp.ne.s32.totalorder %s89, %s90
    %p99 = scmp.eq.s32.totalorder %s16, 0
    %p100 = por %p98, %p99
    %p101 = scmp.ne.s32.totalorder %s89, %s90
    %p102 = scmp.eq.s32.totalorder %s17, 1
    %p103 = por %p101, %p102
    %p105 = scmp.ne.s32.totalorder %s90, %s104
    %p106 = scmp.eq.s32.totalorder %s17, 0
    %p107 = por %p105, %p106
    %s109 = sadd.s32 %s108, 1
    %p112 = scmp.eq.s32.totalorder %s11, 1
    %p113 = scmp.ne.s32.totalorder %s108, %s110
    %p114 = scmp.eq.s32.totalorder %s11, 0
    %p115 = por %p113, %p114
    %p116 = scmp.ne.s32.totalorder %s108, %s110
    %p117 = scmp.eq.s32.totalorder %s16, 1
    %p118 = por %p116, %p117
    %p119 = scmp.ne.s32.totalorder %s110, %s111
    %p120 = scmp.eq.s32.totalorder %s16, 0
    %p121 = por %p119, %p120
    %p122 = scmp.ne.s32.totalorder %s110, %s111
    %p123 = scmp.eq.s32.totalorder %s17, 1
    %p124 = por %p122, %p123
    %p126 = scmp.ne.s32.totalorder %s111, %s125
    %p127 = scmp.eq.s32.totalorder %s17, 0
    %p128 = por %p126, %p127
    %s129 = ssub.s32 %s11, %s18
    %p130 = scmp.eq.s32.totalorder %s129, 0
    %s132 = sadd.s32 %s131, 1
    %s133 = scalar_select %p130, %s131, %s132
    %p136 = pneg %p130
    %p137 = scmp.eq.s32.totalorder %s11, 1
    %p138 = por %p136, %p137
    %p139 = scmp.ne.s32.totalorder %s131, %s134
    %p140 = scmp.eq.s32.totalorder %s11, 0
    %p141 = por %p139, %p140
    %p142 = scmp.ne.s32.totalorder %s131, %s134
    %p143 = scmp.eq.s32.totalorder %s16, 1
    %p144 = por %p142, %p143
    %p145 = scmp.ne.s32.totalorder %s134, %s135
    %p146 = scmp.eq.s32.totalorder %s16, 0
    %p147 = por %p145, %p146
    %p148 = scmp.ne.s32.totalorder %s134, %s135
    %p149 = scmp.eq.s32.totalorder %s17, 1
    %p150 = por %p148, %p149
    %p152 = scmp.ne.s32.totalorder %s135, %s151
    %p153 = scmp.eq.s32.totalorder %s17, 0
    %p154 = por %p152, %p153
    %p155 = scmp.le.s32.totalorder 1, %s11
    %p156 = scmp.lt.s32.totalorder %s11, 3
    %p157 = pnand %p155, %p156
    %p158 = pneg %p157
    // Predicated region
    $region9: #{simple_cnn_forward.2} parent=5 // pred_check
      _
    $region10: #{simple_cnn_forward.2} parent=5 // pred_check_branch
      %160 = sbr.rel (%p157) target = $region12
    $region11: #{simple_cnn_forward.2} parent=5 // pred_region
      %s161 = ssub.s32 %s11, 1
      // Predicated region
      $region13: #{simple_cnn_forward.2} parent=11 // pred_check
        %p162 = pneg %p58
      $region14: #{simple_cnn_forward.2} parent=11 // pred_check_branch
        %164 = sbr.rel (%p162) target = $region16
      $region15: #{simple_cnn_forward.2} parent=11 // pred_region
        _
      $region16: #{simple_cnn_forward.2} parent=11 // pred_fallthru
        _
      // Predicated region
      $region17: #{simple_cnn_forward.2} parent=11 // pred_check
        %p165 = pneg %p79
      $region18: #{simple_cnn_forward.2} parent=11 // pred_check_branch
        %167 = sbr.rel (%p165) target = $region20
      $region19: #{simple_cnn_forward.2} parent=11 // pred_region
        _
      $region20: #{simple_cnn_forward.2} parent=11 // pred_fallthru
        _
      // Predicated region
      $region21: #{simple_cnn_forward.2} parent=11 // pred_check
        %p168 = pneg %p100
      $region22: #{simple_cnn_forward.2} parent=11 // pred_check_branch
        %170 = sbr.rel (%p168) target = $region24
      $region23: #{simple_cnn_forward.2} parent=11 // pred_region
        _
      $region24: #{simple_cnn_forward.2} parent=11 // pred_fallthru
        _
      // Predicated region
      $region25: #{simple_cnn_forward.2} parent=11 // pred_check
        %p171 = pneg %p121
      $region26: #{simple_cnn_forward.2} parent=11 // pred_check_branch
        %173 = sbr.rel (%p171) target = $region28
      $region27: #{simple_cnn_forward.2} parent=11 // pred_region
        _
      $region28: #{simple_cnn_forward.2} parent=11 // pred_fallthru
        _
    $region12: #{simple_cnn_forward.2} parent=5 // pred_fallthru
      _
    %p174 = scmp.lt.s32.totalorder %s11, 2
    // Predicated region
    $region29: #{simple_cnn_forward.2} parent=5 // pred_check
      %p175 = pneg %p174
    $region30: #{simple_cnn_forward.2} parent=5 // pred_check_branch
      %177 = sbr.rel (%p175) target = $region32
    $region31: #{simple_cnn_forward.2} parent=5 // pred_region
      // Predicated region
      $region33: #{simple_cnn_forward.2} parent=31 // pred_check
        %p178 = pneg %p31
      $region34: #{simple_cnn_forward.2} parent=31 // pred_check_branch
        %180 = sbr.rel (%p178) target = $region36
      $region35: #{simple_cnn_forward.2} parent=31 // pred_region
        %p181 = scmp.lt.s32.totalorder %s11, 1
        %s182 = scalar_select %p181, %s11, 1
        %s183 = smul.addr %s182, 98
        %s184 = smul.addr %s183, 8
        %s185 = scalar_lea.vmem %s0, %s184
      $region36: #{simple_cnn_forward.2} parent=31 // pred_fallthru
        _
    $region32: #{simple_cnn_forward.2} parent=5 // pred_fallthru
      _
    %p186 = scmp.le.s32.totalorder 1, %s11
    %p187 = scmp.lt.s32.totalorder %s11, 3
    %p188 = pnand %p186, %p187
    %p189 = pneg %p188
    // Predicated region
    $region37: #{simple_cnn_forward.2} parent=5 // pred_check
      _
    $region38: #{simple_cnn_forward.2} parent=5 // pred_check_branch
      %191 = sbr.rel (%p188) target = $region40
    $region39: #{simple_cnn_forward.2} parent=5 // pred_region
      %s192 = ssub.s32 %s11, 1
      %p193 = scmp.lt.s32.totalorder %s16, 1
      %s194 = scalar_select %p193, %s16, 1
      %s195 = smul.addr %s194, 98
      %s196 = smul.addr %s195, 8
      %s197 = scalar_lea.vmem %s0, %s196
      %p198 = pneg %p37
      %p199 = pneg %p34
      %p200 = pneg %p58
      %p201 = pneg %p55
      %p202 = pneg %p79
      %p203 = pneg %p76
      %p204 = pneg %p100
      %p205 = pneg %p97
      %p206 = pneg %p121
      %p207 = pneg %p118
      %p208 = pneg %p147
      %p209 = pneg %p144
      %p210 = scmp.lt.s32.totalorder %s16, 1
      %s211 = scalar_select %p210, %s16, 1
      %s212 = smul.addr %s211, 7
      %s213 = smul.addr %s212, 8
      %s214 = scalar_lea.vmem %s5, %s213
      %p215 = scmp.lt.s32.totalorder %s16, 1
      %s216 = scalar_select %p215, %s16, 1
      %s217 = smul.addr %s216, 98
      %s218 = smul.addr %s217, 8
      %s219 = scalar_lea.vmem %s0, %s218
      %p220 = scmp.lt.s32.totalorder %s16, 1
      %s221 = scalar_select %p220, %s16, 1
      %s222 = smul.addr %s221, 7
      %s223 = smul.addr %s222, 8
      %s224 = scalar_lea.vmem %s5, %s223
      %v225 = vld [vmem:[%s219] sm:$0xff]
      %v226 = vld [vmem:[%s219 + $0x8] sm:$0xff]
      %v227 = vld [vmem:[%s219 + $0x10] sm:$0xff]
      %v228 = vld [vmem:[%s219 + $0x18] sm:$0xff]
      %v229 = vld [vmem:[%s219 + $0x20] sm:$0xff]
      %v230 = vld [vmem:[%s219 + $0x28] sm:$0xff]
      %v231 = vld [vmem:[%s219 + $0x30] sm:$0xff]
      %v232 = vld [vmem:[%s219 + $0x38] sm:$0xff]
      %v233 = vld [vmem:[%s219 + $0x40] sm:$0xff]
      %v234 = vld [vmem:[%s219 + $0x48] sm:$0xff]
      %v235 = vld [vmem:[%s219 + $0x50] sm:$0xff]
      %v236 = vld [vmem:[%s219 + $0x58] sm:$0xff]
      %v237 = vld [vmem:[%s219 + $0x60] sm:$0xff]
      %v238 = vld [vmem:[%s219 + $0x68] sm:$0xff]
      %v239 = vld [vmem:[%s219 + $0x70] sm:$0xff]
      %v240 = vld [vmem:[%s219 + $0x78] sm:$0xff]
      %v241 = vld [vmem:[%s219 + $0x80] sm:$0xff]
      %v242 = vld [vmem:[%s219 + $0x88] sm:$0xff]
      %v243 = vld [vmem:[%s219 + $0x90] sm:$0xff]
      %v244 = vld [vmem:[%s219 + $0x98] sm:$0xff]
      %v245 = vld [vmem:[%s219 + $0xa0] sm:$0xff]
      %v246 = vld [vmem:[%s219 + $0xa8] sm:$0xff]
      %v247 = vld [vmem:[%s219 + $0xb0] sm:$0xff]
      %v248 = vld [vmem:[%s219 + $0xb8] sm:$0xff]
      %v249 = vld [vmem:[%s219 + $0xc0] sm:$0xff]
      %v250 = vld [vmem:[%s219 + $0xc8] sm:$0xff]
      %v251 = vld [vmem:[%s219 + $0xd0] sm:$0xff]
      %v252 = vld [vmem:[%s219 + $0xd8] sm:$0xff]
      %v253 = vld [vmem:[%s219 + $0xe0] sm:$0xff]
      %v254 = vld [vmem:[%s219 + $0xe8] sm:$0xff]
      %v255 = vld [vmem:[%s219 + $0xf0] sm:$0xff]
      %v256 = vld [vmem:[%s219 + $0xf8] sm:$0xff]
      %v257 = vld [vmem:[%s219 + $0x100] sm:$0xff]
      %v258 = vld [vmem:[%s219 + $0x108] sm:$0xff]
      %v259 = vld [vmem:[%s219 + $0x110] sm:$0xff]
      %v260 = vld [vmem:[%s219 + $0x118] sm:$0xff]
      %v261 = vld [vmem:[%s219 + $0x120] sm:$0xff]
      %v262 = vld [vmem:[%s219 + $0x128] sm:$0xff]
      %v263 = vld [vmem:[%s219 + $0x130] sm:$0xff]
      %v264 = vld [vmem:[%s219 + $0x138] sm:$0xff]
      %v265 = vld [vmem:[%s219 + $0x140] sm:$0xff]
      %v266 = vld [vmem:[%s219 + $0x148] sm:$0xff]
      %v267 = vld [vmem:[%s219 + $0x150] sm:$0xff]
      %v268 = vld [vmem:[%s219 + $0x158] sm:$0xff]
      %v269 = vld [vmem:[%s219 + $0x160] sm:$0xff]
      %v270 = vld [vmem:[%s219 + $0x168] sm:$0xff]
      %v271 = vld [vmem:[%s219 + $0x170] sm:$0xff]
      %v272 = vld [vmem:[%s219 + $0x178] sm:$0xff]
      %v273 = vld [vmem:[%s219 + $0x180] sm:$0xff]
      %v274 = vld [vmem:[%s219 + $0x188] sm:$0xff]
      %v275 = vld [vmem:[%s219 + $0x190] sm:$0xff]
      %v276 = vld [vmem:[%s219 + $0x198] sm:$0xff]
      %v277 = vld [vmem:[%s219 + $0x1a0] sm:$0xff]
      %v278 = vld [vmem:[%s219 + $0x1a8] sm:$0xff]
      %v279 = vld [vmem:[%s219 + $0x1b0] sm:$0xff]
      %v280 = vld [vmem:[%s219 + $0x1b8] sm:$0xff]
      %v281 = vld [vmem:[%s219 + $0x1c0] sm:$0xff]
      %v282 = vld [vmem:[%s219 + $0x1c8] sm:$0xff]
      %v283 = vld [vmem:[%s219 + $0x1d0] sm:$0xff]
      %v284 = vld [vmem:[%s219 + $0x1d8] sm:$0xff]
      %v285 = vld [vmem:[%s219 + $0x1e0] sm:$0xff]
      %v286 = vld [vmem:[%s219 + $0x1e8] sm:$0xff]
      %v287 = vld [vmem:[%s219 + $0x1f0] sm:$0xff]
      %v288 = vld [vmem:[%s219 + $0x1f8] sm:$0xff]
      %v289 = vld [vmem:[%s219 + $0x200] sm:$0xff]
      %v290 = vld [vmem:[%s219 + $0x208] sm:$0xff]
      %v291 = vld [vmem:[%s219 + $0x210] sm:$0xff]
      %v292 = vld [vmem:[%s219 + $0x218] sm:$0xff]
      %v293 = vld [vmem:[%s219 + $0x220] sm:$0xff]
      %v294 = vld [vmem:[%s219 + $0x228] sm:$0xff]
      %v295 = vld [vmem:[%s219 + $0x230] sm:$0xff]
      %v296 = vld [vmem:[%s219 + $0x238] sm:$0xff]
      %v297 = vld [vmem:[%s219 + $0x240] sm:$0xff]
      %v298 = vld [vmem:[%s219 + $0x248] sm:$0xff]
      %v299 = vld [vmem:[%s219 + $0x250] sm:$0xff]
      %v300 = vld [vmem:[%s219 + $0x258] sm:$0xff]
      %v301 = vld [vmem:[%s219 + $0x260] sm:$0xff]
      %v302 = vld [vmem:[%s219 + $0x268] sm:$0xff]
      %v303 = vld [vmem:[%s219 + $0x270] sm:$0xff]
      %v304 = vld [vmem:[%s219 + $0x278] sm:$0xff]
      %v305 = vld [vmem:[%s219 + $0x280] sm:$0xff]
      %v306 = vld [vmem:[%s219 + $0x288] sm:$0xff]
      %v307 = vld [vmem:[%s219 + $0x290] sm:$0xff]
      %v308 = vld [vmem:[%s219 + $0x298] sm:$0xff]
      %v309 = vld [vmem:[%s219 + $0x2a0] sm:$0xff]
      %v310 = vld [vmem:[%s219 + $0x2a8] sm:$0xff]
      %v311 = vld [vmem:[%s219 + $0x2b0] sm:$0xff]
      %v312 = vld [vmem:[%s219 + $0x2b8] sm:$0xff]
      %v313 = vld [vmem:[%s219 + $0x2c0] sm:$0xff]
      %v314 = vld [vmem:[%s219 + $0x2c8] sm:$0xff]
      %v315 = vld [vmem:[%s219 + $0x2d0] sm:$0xff]
      %v316 = vld [vmem:[%s219 + $0x2d8] sm:$0xff]
      %v317 = vld [vmem:[%s219 + $0x2e0] sm:$0xff]
      %v318 = vld [vmem:[%s219 + $0x2e8] sm:$0xff]
      %v319 = vld [vmem:[%s219 + $0x2f0] sm:$0xff]
      %v320 = vld [vmem:[%s219 + $0x2f8] sm:$0xff]
      %v321 = vld [vmem:[%s219 + $0x300] sm:$0xff]
      %v322 = vld [vmem:[%s219 + $0x308] sm:$0xff]
      %v323 = vld [vmem:[%s1] sm:$0xff]
      %v324 = vld [vmem:[%s1 + $0x8] sm:$0x1]
      %v325 = vld [vmem:[%s2] sm:$0x1]
      %v327 = vperm.slane %v325, 0
      %vm329 = vcmask 72704
      %v331 = vsel %vm329, %v225, 0
      %v334 = vsel %vm329, %v226, 0
      %v337 = vsel %vm329, %v227, 0
      %v340 = vsel %vm329, %v228, 0
      %v343 = vsel %vm329, %v229, 0
      %v346 = vsel %vm329, %v230, 0
      %v349 = vsel %vm329, %v231, 0
      %v352 = vsel %vm329, %v232, 0
      %v355 = vsel %vm329, %v233, 0
      %v358 = vsel %vm329, %v234, 0
      %v361 = vsel %vm329, %v235, 0
      %v364 = vsel %vm329, %v236, 0
      %v367 = vsel %vm329, %v237, 0
      %v370 = vsel %vm329, %v238, 0
      %v373 = vsel %vm329, %v239, 0
      %v376 = vsel %vm329, %v240, 0
      %v379 = vsel %vm329, %v241, 0
      %v382 = vsel %vm329, %v242, 0
      %v385 = vsel %vm329, %v243, 0
      %v388 = vsel %vm329, %v244, 0
      %v391 = vsel %vm329, %v245, 0
      %v394 = vsel %vm329, %v246, 0
      %v397 = vsel %vm329, %v247, 0
      %v400 = vsel %vm329, %v248, 0
      %v403 = vsel %vm329, %v249, 0
      %v406 = vsel %vm329, %v250, 0
      %v409 = vsel %vm329, %v251, 0
      %v412 = vsel %vm329, %v252, 0
      %v415 = vsel %vm329, %v253, 0
      %v418 = vsel %vm329, %v254, 0
      %v421 = vsel %vm329, %v255, 0
      %v424 = vsel %vm329, %v256, 0
      %v427 = vsel %vm329, %v257, 0
      %v430 = vsel %vm329, %v258, 0
      %v433 = vsel %vm329, %v259, 0
      %v436 = vsel %vm329, %v260, 0
      %v439 = vsel %vm329, %v261, 0
      %v442 = vsel %vm329, %v262, 0
      %v445 = vsel %vm329, %v263, 0
      %v448 = vsel %vm329, %v264, 0
      %v451 = vsel %vm329, %v265, 0
      %v454 = vsel %vm329, %v266, 0
      %v457 = vsel %vm329, %v267, 0
      %v460 = vsel %vm329, %v268, 0
      %v463 = vsel %vm329, %v269, 0
      %v466 = vsel %vm329, %v270, 0
      %v469 = vsel %vm329, %v271, 0
      %v472 = vsel %vm329, %v272, 0
      %v475 = vsel %vm329, %v273, 0
      %v478 = vsel %vm329, %v274, 0
      %v481 = vsel %vm329, %v275, 0
      %v484 = vsel %vm329, %v276, 0
      %v487 = vsel %vm329, %v277, 0
      %v490 = vsel %vm329, %v278, 0
      %v493 = vsel %vm329, %v279, 0
      %v496 = vsel %vm329, %v280, 0
      %v499 = vsel %vm329, %v281, 0
      %v502 = vsel %vm329, %v282, 0
      %v505 = vsel %vm329, %v283, 0
      %v508 = vsel %vm329, %v284, 0
      %v511 = vsel %vm329, %v285, 0
      %v514 = vsel %vm329, %v286, 0
      %v517 = vsel %vm329, %v287, 0
      %v520 = vsel %vm329, %v288, 0
      %v523 = vsel %vm329, %v289, 0
      %v526 = vsel %vm329, %v290, 0
      %v529 = vsel %vm329, %v291, 0
      %v532 = vsel %vm329, %v292, 0
      %v535 = vsel %vm329, %v293, 0
      %v538 = vsel %vm329, %v294, 0
      %v541 = vsel %vm329, %v295, 0
      %v544 = vsel %vm329, %v296, 0
      %v547 = vsel %vm329, %v297, 0
      %v550 = vsel %vm329, %v298, 0
      %v553 = vsel %vm329, %v299, 0
      %v556 = vsel %vm329, %v300, 0
      %v559 = vsel %vm329, %v301, 0
      %v562 = vsel %vm329, %v302, 0
      %v565 = vsel %vm329, %v303, 0
      %v568 = vsel %vm329, %v304, 0
      %v571 = vsel %vm329, %v305, 0
      %v574 = vsel %vm329, %v306, 0
      %v577 = vsel %vm329, %v307, 0
      %v580 = vsel %vm329, %v308, 0
      %v583 = vsel %vm329, %v309, 0
      %v586 = vsel %vm329, %v310, 0
      %v589 = vsel %vm329, %v311, 0
      %v592 = vsel %vm329, %v312, 0
      %v595 = vsel %vm329, %v313, 0
      %v598 = vsel %vm329, %v314, 0
      %v601 = vsel %vm329, %v315, 0
      %v604 = vsel %vm329, %v316, 0
      %v607 = vsel %vm329, %v317, 0
      %v610 = vsel %vm329, %v318, 0
      %v613 = vsel %vm329, %v319, 0
      %v616 = vsel %vm329, %v320, 0
      %v619 = vsel %vm329, %v321, 0
      %v622 = vsel %vm329, %v322, 0
      %vm624 = vcmask 1040384
      %v626 = vsel %vm624, %v324, 0
      %628 = vmatpush.msra.mxu0 0.0
      %629 = vmatpush.msra.mxu0 0.0
      %630 = vmatpush.msra.mxu0 0.0
      %631 = vmatpush.msra.mxu0 0.0
      %632 = vmatpush.msra.mxu0 0.0
      %633 = vmatpush.msra.mxu0 0.0
      %634 = vmatpush.msra.mxu0 0.0
      %635 = vmatpush.msra.mxu0 0.0
      %636 = vmatpush.msra.mxu0 0.0
      %637 = vmatpush.msra.mxu0 0.0
      %638 = vmatpush.msra.mxu0 0.0
      %639 = vmatpush.msra.mxu0 0.0
      %640 = vmatpush.msra.mxu0 0.0
      %641 = vmatpush.msra.mxu0 0.0
      %642 = vmatpush.msra.mxu0 %v626
      %643 = vmatpush.msra.mxu0 %v323
      %644 = vmatmul.f32.gmra.mxu0 %v331
      %v645 = vpop.f32.mrf.mxu0
      %v646 = vadd.f32 %v327, %v645
      %647 = vmatmul.f32.gmra.mxu0 %v334
      %v648 = vpop.f32.mrf.mxu0
      %v649 = vadd.f32 %v327, %v648
      %650 = vmatmul.f32.gmra.mxu0 %v337
      %v651 = vpop.f32.mrf.mxu0
      %v652 = vadd.f32 %v327, %v651
      %653 = vmatmul.f32.gmra.mxu0 %v340
      %v654 = vpop.f32.mrf.mxu0
      %v655 = vadd.f32 %v327, %v654
      %656 = vmatmul.f32.gmra.mxu0 %v343
      %v657 = vpop.f32.mrf.mxu0
      %v658 = vadd.f32 %v327, %v657
      %659 = vmatmul.f32.gmra.mxu0 %v346
      %v660 = vpop.f32.mrf.mxu0
      %v661 = vadd.f32 %v327, %v660
      %662 = vmatmul.f32.gmra.mxu0 %v349
      %v663 = vpop.f32.mrf.mxu0
      %v664 = vadd.f32 %v327, %v663
      %665 = vmatmul.f32.gmra.mxu0 %v352
      %v666 = vpop.f32.mrf.mxu0
      %v667 = vadd.f32 %v327, %v666
      %668 = vmatmul.f32.gmra.mxu0 %v355
      %v669 = vpop.f32.mrf.mxu0
      %v670 = vadd.f32 %v327, %v669
      %671 = vmatmul.f32.gmra.mxu0 %v358
      %v672 = vpop.f32.mrf.mxu0
      %v673 = vadd.f32 %v327, %v672
      %674 = vmatmul.f32.gmra.mxu0 %v361
      %v675 = vpop.f32.mrf.mxu0
      %v676 = vadd.f32 %v327, %v675
      %677 = vmatmul.f32.gmra.mxu0 %v364
      %v678 = vpop.f32.mrf.mxu0
      %v679 = vadd.f32 %v327, %v678
      %680 = vmatmul.f32.gmra.mxu0 %v367
      %v681 = vpop.f32.mrf.mxu0
      %v682 = vadd.f32 %v327, %v681
      %683 = vmatmul.f32.gmra.mxu0 %v370
      %v684 = vpop.f32.mrf.mxu0
      %v685 = vadd.f32 %v327, %v684
      %686 = vmatmul.f32.gmra.mxu0 %v373
      %v687 = vpop.f32.mrf.mxu0
      %v688 = vadd.f32 %v327, %v687
      %689 = vmatmul.f32.gmra.mxu0 %v376
      %v690 = vpop.f32.mrf.mxu0
      %v691 = vadd.f32 %v327, %v690
      %692 = vmatmul.f32.gmra.mxu0 %v379
      %v693 = vpop.f32.mrf.mxu0
      %v694 = vadd.f32 %v327, %v693
      %695 = vmatmul.f32.gmra.mxu0 %v382
      %v696 = vpop.f32.mrf.mxu0
      %v697 = vadd.f32 %v327, %v696
      %698 = vmatmul.f32.gmra.mxu0 %v385
      %v699 = vpop.f32.mrf.mxu0
      %v700 = vadd.f32 %v327, %v699
      %701 = vmatmul.f32.gmra.mxu0 %v388
      %v702 = vpop.f32.mrf.mxu0
      %v703 = vadd.f32 %v327, %v702
      %704 = vmatmul.f32.gmra.mxu0 %v391
      %v705 = vpop.f32.mrf.mxu0
      %v706 = vadd.f32 %v327, %v705
      %707 = vmatmul.f32.gmra.mxu0 %v394
      %v708 = vpop.f32.mrf.mxu0
      %v709 = vadd.f32 %v327, %v708
      %710 = vmatmul.f32.gmra.mxu0 %v397
      %v711 = vpop.f32.mrf.mxu0
      %v712 = vadd.f32 %v327, %v711
      %713 = vmatmul.f32.gmra.mxu0 %v400
      %v714 = vpop.f32.mrf.mxu0
      %v715 = vadd.f32 %v327, %v714
      %716 = vmatmul.f32.gmra.mxu0 %v403
      %v717 = vpop.f32.mrf.mxu0
      %v718 = vadd.f32 %v327, %v717
      %719 = vmatmul.f32.gmra.mxu0 %v406
      %v720 = vpop.f32.mrf.mxu0
      %v721 = vadd.f32 %v327, %v720
      %722 = vmatmul.f32.gmra.mxu0 %v409
      %v723 = vpop.f32.mrf.mxu0
      %v724 = vadd.f32 %v327, %v723
      %725 = vmatmul.f32.gmra.mxu0 %v412
      %v726 = vpop.f32.mrf.mxu0
      %v727 = vadd.f32 %v327, %v726
      %728 = vmatmul.f32.gmra.mxu0 %v415
      %v729 = vpop.f32.mrf.mxu0
      %v730 = vadd.f32 %v327, %v729
      %731 = vmatmul.f32.gmra.mxu0 %v418
      %v732 = vpop.f32.mrf.mxu0
      %v733 = vadd.f32 %v327, %v732
      %734 = vmatmul.f32.gmra.mxu0 %v421
      %v735 = vpop.f32.mrf.mxu0
      %v736 = vadd.f32 %v327, %v735
      %737 = vmatmul.f32.gmra.mxu0 %v424
      %v738 = vpop.f32.mrf.mxu0
      %v739 = vadd.f32 %v327, %v738
      %740 = vmatmul.f32.gmra.mxu0 %v427
      %v741 = vpop.f32.mrf.mxu0
      %v742 = vadd.f32 %v327, %v741
      %743 = vmatmul.f32.gmra.mxu0 %v430
      %v744 = vpop.f32.mrf.mxu0
      %v745 = vadd.f32 %v327, %v744
      %746 = vmatmul.f32.gmra.mxu0 %v433
      %v747 = vpop.f32.mrf.mxu0
      %v748 = vadd.f32 %v327, %v747
      %749 = vmatmul.f32.gmra.mxu0 %v436
      %v750 = vpop.f32.mrf.mxu0
      %v751 = vadd.f32 %v327, %v750
      %752 = vmatmul.f32.gmra.mxu0 %v439
      %v753 = vpop.f32.mrf.mxu0
      %v754 = vadd.f32 %v327, %v753
      %755 = vmatmul.f32.gmra.mxu0 %v442
      %v756 = vpop.f32.mrf.mxu0
      %v757 = vadd.f32 %v327, %v756
      %758 = vmatmul.f32.gmra.mxu0 %v445
      %v759 = vpop.f32.mrf.mxu0
      %v760 = vadd.f32 %v327, %v759
      %761 = vmatmul.f32.gmra.mxu0 %v448
      %v762 = vpop.f32.mrf.mxu0
      %v763 = vadd.f32 %v327, %v762
      %764 = vmatmul.f32.gmra.mxu0 %v451
      %v765 = vpop.f32.mrf.mxu0
      %v766 = vadd.f32 %v327, %v765
      %767 = vmatmul.f32.gmra.mxu0 %v454
      %v768 = vpop.f32.mrf.mxu0
      %v769 = vadd.f32 %v327, %v768
      %770 = vmatmul.f32.gmra.mxu0 %v457
      %v771 = vpop.f32.mrf.mxu0
      %v772 = vadd.f32 %v327, %v771
      %773 = vmatmul.f32.gmra.mxu0 %v460
      %v774 = vpop.f32.mrf.mxu0
      %v775 = vadd.f32 %v327, %v774
      %776 = vmatmul.f32.gmra.mxu0 %v463
      %v777 = vpop.f32.mrf.mxu0
      %v778 = vadd.f32 %v327, %v777
      %779 = vmatmul.f32.gmra.mxu0 %v466
      %v780 = vpop.f32.mrf.mxu0
      %v781 = vadd.f32 %v327, %v780
      %782 = vmatmul.f32.gmra.mxu0 %v469
      %v783 = vpop.f32.mrf.mxu0
      %v784 = vadd.f32 %v327, %v783
      %785 = vmatmul.f32.gmra.mxu0 %v472
      %v786 = vpop.f32.mrf.mxu0
      %v787 = vadd.f32 %v327, %v786
      %788 = vmatmul.f32.gmra.mxu0 %v475
      %v789 = vpop.f32.mrf.mxu0
      %v790 = vadd.f32 %v327, %v789
      %791 = vmatmul.f32.gmra.mxu0 %v478
      %v792 = vpop.f32.mrf.mxu0
      %v793 = vadd.f32 %v327, %v792
      %794 = vmatmul.f32.gmra.mxu0 %v481
      %v795 = vpop.f32.mrf.mxu0
      %v796 = vadd.f32 %v327, %v795
      %797 = vmatmul.f32.gmra.mxu0 %v484
      %v798 = vpop.f32.mrf.mxu0
      %v799 = vadd.f32 %v327, %v798
      %800 = vmatmul.f32.gmra.mxu0 %v487
      %v801 = vpop.f32.mrf.mxu0
      %v802 = vadd.f32 %v327, %v801
      %803 = vmatmul.f32.gmra.mxu0 %v490
      %v804 = vpop.f32.mrf.mxu0
      %v805 = vadd.f32 %v327, %v804
      %806 = vmatmul.f32.gmra.mxu0 %v493
      %v807 = vpop.f32.mrf.mxu0
      %v808 = vadd.f32 %v327, %v807
      %809 = vmatmul.f32.gmra.mxu0 %v496
      %v810 = vpop.f32.mrf.mxu0
      %v811 = vadd.f32 %v327, %v810
      %812 = vmatmul.f32.gmra.mxu0 %v499
      %v813 = vpop.f32.mrf.mxu0
      %v814 = vadd.f32 %v327, %v813
      %815 = vmatmul.f32.gmra.mxu0 %v502
      %v816 = vpop.f32.mrf.mxu0
      %v817 = vadd.f32 %v327, %v816
      %818 = vmatmul.f32.gmra.mxu0 %v505
      %v819 = vpop.f32.mrf.mxu0
      %v820 = vadd.f32 %v327, %v819
      %821 = vmatmul.f32.gmra.mxu0 %v508
      %v822 = vpop.f32.mrf.mxu0
      %v823 = vadd.f32 %v327, %v822
      %824 = vmatmul.f32.gmra.mxu0 %v511
      %v825 = vpop.f32.mrf.mxu0
      %v826 = vadd.f32 %v327, %v825
      %827 = vmatmul.f32.gmra.mxu0 %v514
      %v828 = vpop.f32.mrf.mxu0
      %v829 = vadd.f32 %v327, %v828
      %830 = vmatmul.f32.gmra.mxu0 %v517
      %v831 = vpop.f32.mrf.mxu0
      %v832 = vadd.f32 %v327, %v831
      %833 = vmatmul.f32.gmra.mxu0 %v520
      %v834 = vpop.f32.mrf.mxu0
      %v835 = vadd.f32 %v327, %v834
      %836 = vmatmul.f32.gmra.mxu0 %v523
      %v837 = vpop.f32.mrf.mxu0
      %v838 = vadd.f32 %v327, %v837
      %839 = vmatmul.f32.gmra.mxu0 %v526
      %v840 = vpop.f32.mrf.mxu0
      %v841 = vadd.f32 %v327, %v840
      %842 = vmatmul.f32.gmra.mxu0 %v529
      %v843 = vpop.f32.mrf.mxu0
      %v844 = vadd.f32 %v327, %v843
      %845 = vmatmul.f32.gmra.mxu0 %v532
      %v846 = vpop.f32.mrf.mxu0
      %v847 = vadd.f32 %v327, %v846
      %848 = vmatmul.f32.gmra.mxu0 %v535
      %v849 = vpop.f32.mrf.mxu0
      %v850 = vadd.f32 %v327, %v849
      %851 = vmatmul.f32.gmra.mxu0 %v538
      %v852 = vpop.f32.mrf.mxu0
      %v853 = vadd.f32 %v327, %v852
      %854 = vmatmul.f32.gmra.mxu0 %v541
      %v855 = vpop.f32.mrf.mxu0
      %v856 = vadd.f32 %v327, %v855
      %857 = vmatmul.f32.gmra.mxu0 %v544
      %v858 = vpop.f32.mrf.mxu0
      %v859 = vadd.f32 %v327, %v858
      %860 = vmatmul.f32.gmra.mxu0 %v547
      %v861 = vpop.f32.mrf.mxu0
      %v862 = vadd.f32 %v327, %v861
      %863 = vmatmul.f32.gmra.mxu0 %v550
      %v864 = vpop.f32.mrf.mxu0
      %v865 = vadd.f32 %v327, %v864
      %866 = vmatmul.f32.gmra.mxu0 %v553
      %v867 = vpop.f32.mrf.mxu0
      %v868 = vadd.f32 %v327, %v867
      %869 = vmatmul.f32.gmra.mxu0 %v556
      %v870 = vpop.f32.mrf.mxu0
      %v871 = vadd.f32 %v327, %v870
      %872 = vmatmul.f32.gmra.mxu0 %v559
      %v873 = vpop.f32.mrf.mxu0
      %v874 = vadd.f32 %v327, %v873
      %875 = vmatmul.f32.gmra.mxu0 %v562
      %v876 = vpop.f32.mrf.mxu0
      %v877 = vadd.f32 %v327, %v876
      %878 = vmatmul.f32.gmra.mxu0 %v565
      %v879 = vpop.f32.mrf.mxu0
      %v880 = vadd.f32 %v327, %v879
      %881 = vmatmul.f32.gmra.mxu0 %v568
      %v882 = vpop.f32.mrf.mxu0
      %v883 = vadd.f32 %v327, %v882
      %884 = vmatmul.f32.gmra.mxu0 %v571
      %v885 = vpop.f32.mrf.mxu0
      %v886 = vadd.f32 %v327, %v885
      %887 = vmatmul.f32.gmra.mxu0 %v574
      %v888 = vpop.f32.mrf.mxu0
      %v889 = vadd.f32 %v327, %v888
      %890 = vmatmul.f32.gmra.mxu0 %v577
      %v891 = vpop.f32.mrf.mxu0
      %v892 = vadd.f32 %v327, %v891
      %893 = vmatmul.f32.gmra.mxu0 %v580
      %v894 = vpop.f32.mrf.mxu0
      %v895 = vadd.f32 %v327, %v894
      %896 = vmatmul.f32.gmra.mxu0 %v583
      %v897 = vpop.f32.mrf.mxu0
      %v898 = vadd.f32 %v327, %v897
      %899 = vmatmul.f32.gmra.mxu0 %v586
      %v900 = vpop.f32.mrf.mxu0
      %v901 = vadd.f32 %v327, %v900
      %902 = vmatmul.f32.gmra.mxu0 %v589
      %v903 = vpop.f32.mrf.mxu0
      %v904 = vadd.f32 %v327, %v903
      %905 = vmatmul.f32.gmra.mxu0 %v592
      %v906 = vpop.f32.mrf.mxu0
      %v907 = vadd.f32 %v327, %v906
      %908 = vmatmul.f32.gmra.mxu0 %v595
      %v909 = vpop.f32.mrf.mxu0
      %v910 = vadd.f32 %v327, %v909
      %911 = vmatmul.f32.gmra.mxu0 %v598
      %v912 = vpop.f32.mrf.mxu0
      %v913 = vadd.f32 %v327, %v912
      %914 = vmatmul.f32.gmra.mxu0 %v601
      %v915 = vpop.f32.mrf.mxu0
      %v916 = vadd.f32 %v327, %v915
      %917 = vmatmul.f32.gmra.mxu0 %v604
      %v918 = vpop.f32.mrf.mxu0
      %v919 = vadd.f32 %v327, %v918
      %920 = vmatmul.f32.gmra.mxu0 %v607
      %v921 = vpop.f32.mrf.mxu0
      %v922 = vadd.f32 %v327, %v921
      %923 = vmatmul.f32.gmra.mxu0 %v610
      %v924 = vpop.f32.mrf.mxu0
      %v925 = vadd.f32 %v327, %v924
      %926 = vmatmul.f32.gmra.mxu0 %v613
      %v927 = vpop.f32.mrf.mxu0
      %v928 = vadd.f32 %v327, %v927
      %929 = vmatmul.f32.gmra.mxu0 %v616
      %v930 = vpop.f32.mrf.mxu0
      %v931 = vadd.f32 %v327, %v930
      %932 = vmatmul.f32.gmra.mxu0 %v619
      %v933 = vpop.f32.mrf.mxu0
      %v934 = vadd.f32 %v327, %v933
      %935 = vmatmul.f32.gmra.mxu0 %v622
      %v936 = vpop.f32.mrf.mxu0
      %v937 = vadd.f32 %v327, %v936
      %938 = vdwg.mxu0
      %v939 = vmax.f32 %v646, 0.0
      %v940 = vmax.f32 %v649, 0.0
      %v941 = vmax.f32 %v652, 0.0
      %v942 = vmax.f32 %v655, 0.0
      %v943 = vmax.f32 %v658, 0.0
      %v944 = vmax.f32 %v661, 0.0
      %v945 = vmax.f32 %v664, 0.0
      %v946 = vmax.f32 %v667, 0.0
      %v947 = vmax.f32 %v670, 0.0
      %v948 = vmax.f32 %v673, 0.0
      %v949 = vmax.f32 %v676, 0.0
      %v950 = vmax.f32 %v679, 0.0
      %v951 = vmax.f32 %v682, 0.0
      %v952 = vmax.f32 %v685, 0.0
      %v953 = vmax.f32 %v688, 0.0
      %v954 = vmax.f32 %v691, 0.0
      %v955 = vmax.f32 %v694, 0.0
      %v956 = vmax.f32 %v697, 0.0
      %v957 = vmax.f32 %v700, 0.0
      %v958 = vmax.f32 %v703, 0.0
      %v959 = vmax.f32 %v706, 0.0
      %v960 = vmax.f32 %v709, 0.0
      %v961 = vmax.f32 %v712, 0.0
      %v962 = vmax.f32 %v715, 0.0
      %v963 = vmax.f32 %v718, 0.0
      %v964 = vmax.f32 %v721, 0.0
      %v965 = vmax.f32 %v724, 0.0
      %v966 = vmax.f32 %v727, 0.0
      %v967 = vmax.f32 %v730, 0.0
      %v968 = vmax.f32 %v733, 0.0
      %v969 = vmax.f32 %v736, 0.0
      %v970 = vmax.f32 %v739, 0.0
      %v971 = vmax.f32 %v742, 0.0
      %v972 = vmax.f32 %v745, 0.0
      %v973 = vmax.f32 %v748, 0.0
      %v974 = vmax.f32 %v751, 0.0
      %v975 = vmax.f32 %v754, 0.0
      %v976 = vmax.f32 %v757, 0.0
      %v977 = vmax.f32 %v760, 0.0
      %v978 = vmax.f32 %v763, 0.0
      %v979 = vmax.f32 %v766, 0.0
      %v980 = vmax.f32 %v769, 0.0
      %v981 = vmax.f32 %v772, 0.0
      %v982 = vmax.f32 %v775, 0.0
      %v983 = vmax.f32 %v778, 0.0
      %v984 = vmax.f32 %v781, 0.0
      %v985 = vmax.f32 %v784, 0.0
      %v986 = vmax.f32 %v787, 0.0
      %v987 = vmax.f32 %v790, 0.0
      %v988 = vmax.f32 %v793, 0.0
      %v989 = vmax.f32 %v796, 0.0
      %v990 = vmax.f32 %v799, 0.0
      %v991 = vmax.f32 %v802, 0.0
      %v992 = vmax.f32 %v805, 0.0
      %v993 = vmax.f32 %v808, 0.0
      %v994 = vmax.f32 %v811, 0.0
      %v995 = vmax.f32 %v814, 0.0
      %v996 = vmax.f32 %v817, 0.0
      %v997 = vmax.f32 %v820, 0.0
      %v998 = vmax.f32 %v823, 0.0
      %v999 = vmax.f32 %v826, 0.0
      %v1000 = vmax.f32 %v829, 0.0
      %v1001 = vmax.f32 %v832, 0.0
      %v1002 = vmax.f32 %v835, 0.0
      %v1003 = vmax.f32 %v838, 0.0
      %v1004 = vmax.f32 %v841, 0.0
      %v1005 = vmax.f32 %v844, 0.0
      %v1006 = vmax.f32 %v847, 0.0
      %v1007 = vmax.f32 %v850, 0.0
      %v1008 = vmax.f32 %v853, 0.0
      %v1009 = vmax.f32 %v856, 0.0
      %v1010 = vmax.f32 %v859, 0.0
      %v1011 = vmax.f32 %v862, 0.0
      %v1012 = vmax.f32 %v865, 0.0
      %v1013 = vmax.f32 %v868, 0.0
      %v1014 = vmax.f32 %v871, 0.0
      %v1015 = vmax.f32 %v874, 0.0
      %v1016 = vmax.f32 %v877, 0.0
      %v1017 = vmax.f32 %v880, 0.0
      %v1018 = vmax.f32 %v883, 0.0
      %v1019 = vmax.f32 %v886, 0.0
      %v1020 = vmax.f32 %v889, 0.0
      %v1021 = vmax.f32 %v892, 0.0
      %v1022 = vmax.f32 %v895, 0.0
      %v1023 = vmax.f32 %v898, 0.0
      %v1024 = vmax.f32 %v901, 0.0
      %v1025 = vmax.f32 %v904, 0.0
      %v1026 = vmax.f32 %v907, 0.0
      %v1027 = vmax.f32 %v910, 0.0
      %v1028 = vmax.f32 %v913, 0.0
      %v1029 = vmax.f32 %v916, 0.0
      %v1030 = vmax.f32 %v919, 0.0
      %v1031 = vmax.f32 %v922, 0.0
      %v1032 = vmax.f32 %v925, 0.0
      %v1033 = vmax.f32 %v928, 0.0
      %v1034 = vmax.f32 %v931, 0.0
      %v1035 = vmax.f32 %v934, 0.0
      %v1036 = vmax.f32 %v937, 0.0
      %vm1037 = vcmask 261120
      %1038 = vst.msk [vmem:[#allocation2] sm:$0xff] %vm1037, %v939
      %1039 = vst.msk [vmem:[#allocation2 + $0x8] sm:$0xff] %vm1037, %v940
      %1040 = vst.msk [vmem:[#allocation2 + $0x10] sm:$0xff] %vm1037, %v941
      %1041 = vst.msk [vmem:[#allocation2 + $0x18] sm:$0xff] %vm1037, %v942
      %1042 = vst.msk [vmem:[#allocation2 + $0x20] sm:$0xff] %vm1037, %v943
      %1043 = vst.msk [vmem:[#allocation2 + $0x28] sm:$0xff] %vm1037, %v944
      %1044 = vst.msk [vmem:[#allocation2 + $0x30] sm:$0xff] %vm1037, %v945
      %1045 = vst.msk [vmem:[#allocation2 + $0x38] sm:$0xff] %vm1037, %v946
      %1046 = vst.msk [vmem:[#allocation2 + $0x40] sm:$0xff] %vm1037, %v947
      %1047 = vst.msk [vmem:[#allocation2 + $0x48] sm:$0xff] %vm1037, %v948
      %1048 = vst.msk [vmem:[#allocation2 + $0x50] sm:$0xff] %vm1037, %v949
      %1049 = vst.msk [vmem:[#allocation2 + $0x58] sm:$0xff] %vm1037, %v950
      %1050 = vst.msk [vmem:[#allocation2 + $0x60] sm:$0xff] %vm1037, %v951
      %1051 = vst.msk [vmem:[#allocation2 + $0x68] sm:$0xff] %vm1037, %v952
      %1052 = vst.msk [vmem:[#allocation2 + $0x70] sm:$0xff] %vm1037, %v953
      %1053 = vst.msk [vmem:[#allocation2 + $0x78] sm:$0xff] %vm1037, %v954
      %1054 = vst.msk [vmem:[#allocation2 + $0x80] sm:$0xff] %vm1037, %v955
      %1055 = vst.msk [vmem:[#allocation2 + $0x88] sm:$0xff] %vm1037, %v956
      %1056 = vst.msk [vmem:[#allocation2 + $0x90] sm:$0xff] %vm1037, %v957
      %1057 = vst.msk [vmem:[#allocation2 + $0x98] sm:$0xff] %vm1037, %v958
      %1058 = vst.msk [vmem:[#allocation2 + $0xa0] sm:$0xff] %vm1037, %v959
      %1059 = vst.msk [vmem:[#allocation2 + $0xa8] sm:$0xff] %vm1037, %v960
      %1060 = vst.msk [vmem:[#allocation2 + $0xb0] sm:$0xff] %vm1037, %v961
      %1061 = vst.msk [vmem:[#allocation2 + $0xb8] sm:$0xff] %vm1037, %v962
      %1062 = vst.msk [vmem:[#allocation2 + $0xc0] sm:$0xff] %vm1037, %v963
      %1063 = vst.msk [vmem:[#allocation2 + $0xc8] sm:$0xff] %vm1037, %v964
      %1064 = vst.msk [vmem:[#allocation2 + $0xd0] sm:$0xff] %vm1037, %v965
      %1065 = vst.msk [vmem:[#allocation2 + $0xd8] sm:$0xff] %vm1037, %v966
      %1066 = vst.msk [vmem:[#allocation2 + $0xe0] sm:$0xff] %vm1037, %v967
      %1067 = vst.msk [vmem:[#allocation2 + $0xe8] sm:$0xff] %vm1037, %v968
      %1068 = vst.msk [vmem:[#allocation2 + $0xf0] sm:$0xff] %vm1037, %v969
      %1069 = vst.msk [vmem:[#allocation2 + $0xf8] sm:$0xff] %vm1037, %v970
      %1070 = vst.msk [vmem:[#allocation2 + $0x100] sm:$0xff] %vm1037, %v971
      %1071 = vst.msk [vmem:[#allocation2 + $0x108] sm:$0xff] %vm1037, %v972
      %1072 = vst.msk [vmem:[#allocation2 + $0x110] sm:$0xff] %vm1037, %v973
      %1073 = vst.msk [vmem:[#allocation2 + $0x118] sm:$0xff] %vm1037, %v974
      %1074 = vst.msk [vmem:[#allocation2 + $0x120] sm:$0xff] %vm1037, %v975
      %1075 = vst.msk [vmem:[#allocation2 + $0x128] sm:$0xff] %vm1037, %v976
      %1076 = vst.msk [vmem:[#allocation2 + $0x130] sm:$0xff] %vm1037, %v977
      %1077 = vst.msk [vmem:[#allocation2 + $0x138] sm:$0xff] %vm1037, %v978
      %1078 = vst.msk [vmem:[#allocation2 + $0x140] sm:$0xff] %vm1037, %v979
      %1079 = vst.msk [vmem:[#allocation2 + $0x148] sm:$0xff] %vm1037, %v980
      %1080 = vst.msk [vmem:[#allocation2 + $0x150] sm:$0xff] %vm1037, %v981
      %1081 = vst.msk [vmem:[#allocation2 + $0x158] sm:$0xff] %vm1037, %v982
      %1082 = vst.msk [vmem:[#allocation2 + $0x160] sm:$0xff] %vm1037, %v983
      %1083 = vst.msk [vmem:[#allocation2 + $0x168] sm:$0xff] %vm1037, %v984
      %1084 = vst.msk [vmem:[#allocation2 + $0x170] sm:$0xff] %vm1037, %v985
      %1085 = vst.msk [vmem:[#allocation2 + $0x178] sm:$0xff] %vm1037, %v986
      %1086 = vst.msk [vmem:[#allocation2 + $0x180] sm:$0xff] %vm1037, %v987
      %1087 = vst.msk [vmem:[#allocation2 + $0x188] sm:$0xff] %vm1037, %v988
      %1088 = vst.msk [vmem:[#allocation2 + $0x190] sm:$0xff] %vm1037, %v989
      %1089 = vst.msk [vmem:[#allocation2 + $0x198] sm:$0xff] %vm1037, %v990
      %1090 = vst.msk [vmem:[#allocation2 + $0x1a0] sm:$0xff] %vm1037, %v991
      %1091 = vst.msk [vmem:[#allocation2 + $0x1a8] sm:$0xff] %vm1037, %v992
      %1092 = vst.msk [vmem:[#allocation2 + $0x1b0] sm:$0xff] %vm1037, %v993
      %1093 = vst.msk [vmem:[#allocation2 + $0x1b8] sm:$0xff] %vm1037, %v994
      %1094 = vst.msk [vmem:[#allocation2 + $0x1c0] sm:$0xff] %vm1037, %v995
      %1095 = vst.msk [vmem:[#allocation2 + $0x1c8] sm:$0xff] %vm1037, %v996
      %1096 = vst.msk [vmem:[#allocation2 + $0x1d0] sm:$0xff] %vm1037, %v997
      %1097 = vst.msk [vmem:[#allocation2 + $0x1d8] sm:$0xff] %vm1037, %v998
      %1098 = vst.msk [vmem:[#allocation2 + $0x1e0] sm:$0xff] %vm1037, %v999
      %1099 = vst.msk [vmem:[#allocation2 + $0x1e8] sm:$0xff] %vm1037, %v1000
      %1100 = vst.msk [vmem:[#allocation2 + $0x1f0] sm:$0xff] %vm1037, %v1001
      %1101 = vst.msk [vmem:[#allocation2 + $0x1f8] sm:$0xff] %vm1037, %v1002
      %1102 = vst.msk [vmem:[#allocation2 + $0x200] sm:$0xff] %vm1037, %v1003
      %1103 = vst.msk [vmem:[#allocation2 + $0x208] sm:$0xff] %vm1037, %v1004
      %1104 = vst.msk [vmem:[#allocation2 + $0x210] sm:$0xff] %vm1037, %v1005
      %1105 = vst.msk [vmem:[#allocation2 + $0x218] sm:$0xff] %vm1037, %v1006
      %1106 = vst.msk [vmem:[#allocation2 + $0x220] sm:$0xff] %vm1037, %v1007
      %1107 = vst.msk [vmem:[#allocation2 + $0x228] sm:$0xff] %vm1037, %v1008
      %1108 = vst.msk [vmem:[#allocation2 + $0x230] sm:$0xff] %vm1037, %v1009
      %1109 = vst.msk [vmem:[#allocation2 + $0x238] sm:$0xff] %vm1037, %v1010
      %1110 = vst.msk [vmem:[#allocation2 + $0x240] sm:$0xff] %vm1037, %v1011
      %1111 = vst.msk [vmem:[#allocation2 + $0x248] sm:$0xff] %vm1037, %v1012
      %1112 = vst.msk [vmem:[#allocation2 + $0x250] sm:$0xff] %vm1037, %v1013
      %1113 = vst.msk [vmem:[#allocation2 + $0x258] sm:$0xff] %vm1037, %v1014
      %1114 = vst.msk [vmem:[#allocation2 + $0x260] sm:$0xff] %vm1037, %v1015
      %1115 = vst.msk [vmem:[#allocation2 + $0x268] sm:$0xff] %vm1037, %v1016
      %1116 = vst.msk [vmem:[#allocation2 + $0x270] sm:$0xff] %vm1037, %v1017
      %1117 = vst.msk [vmem:[#allocation2 + $0x278] sm:$0xff] %vm1037, %v1018
      %1118 = vst.msk [vmem:[#allocation2 + $0x280] sm:$0xff] %vm1037, %v1019
      %1119 = vst.msk [vmem:[#allocation2 + $0x288] sm:$0xff] %vm1037, %v1020
      %1120 = vst.msk [vmem:[#allocation2 + $0x290] sm:$0xff] %vm1037, %v1021
      %1121 = vst.msk [vmem:[#allocation2 + $0x298] sm:$0xff] %vm1037, %v1022
      %1122 = vst.msk [vmem:[#allocation2 + $0x2a0] sm:$0xff] %vm1037, %v1023
      %1123 = vst.msk [vmem:[#allocation2 + $0x2a8] sm:$0xff] %vm1037, %v1024
      %1124 = vst.msk [vmem:[#allocation2 + $0x2b0] sm:$0xff] %vm1037, %v1025
      %1125 = vst.msk [vmem:[#allocation2 + $0x2b8] sm:$0xff] %vm1037, %v1026
      %1126 = vst.msk [vmem:[#allocation2 + $0x2c0] sm:$0xff] %vm1037, %v1027
      %1127 = vst.msk [vmem:[#allocation2 + $0x2c8] sm:$0xff] %vm1037, %v1028
      %1128 = vst.msk [vmem:[#allocation2 + $0x2d0] sm:$0xff] %vm1037, %v1029
      %1129 = vst.msk [vmem:[#allocation2 + $0x2d8] sm:$0xff] %vm1037, %v1030
      %1130 = vst.msk [vmem:[#allocation2 + $0x2e0] sm:$0xff] %vm1037, %v1031
      %1131 = vst.msk [vmem:[#allocation2 + $0x2e8] sm:$0xff] %vm1037, %v1032
      %1132 = vst.msk [vmem:[#allocation2 + $0x2f0] sm:$0xff] %vm1037, %v1033
      %1133 = vst.msk [vmem:[#allocation2 + $0x2f8] sm:$0xff] %vm1037, %v1034
      %1134 = vst.msk [vmem:[#allocation2 + $0x300] sm:$0xff] %vm1037, %v1035
      %1135 = vst.msk [vmem:[#allocation2 + $0x308] sm:$0xff] %vm1037, %v1036
      %v1136 = vld [vmem:[#allocation2] ss:$2 sm:$0xff]
      %s1137 = scalar_lea.vmem [#allocation2], 16
      %v1138 = vld [vmem:[%s1137] ss:$2 sm:$0xff]
      %s1139 = scalar_lea.vmem [#allocation2], 32
      %v1140 = vld [vmem:[%s1139] ss:$2 sm:$0xff]
      %s1141 = scalar_lea.vmem [#allocation2], 48
      %v1142 = vld [vmem:[%s1141] ss:$2 sm:$0xff]
      %s1143 = scalar_lea.vmem [#allocation2], 64
      %v1144 = vld [vmem:[%s1143] ss:$2 sm:$0xff]
      %s1145 = scalar_lea.vmem [#allocation2], 80
      %v1146 = vld [vmem:[%s1145] ss:$2 sm:$0xff]
      %s1147 = scalar_lea.vmem [#allocation2], 96
      %v1148 = vld [vmem:[%s1147] ss:$2 sm:$0xff]
      %s1149 = scalar_lea.vmem [#allocation2], 112
      %v1150 = vld [vmem:[%s1149] ss:$2 sm:$0xff]
      %s1151 = scalar_lea.vmem [#allocation2], 128
      %v1152 = vld [vmem:[%s1151] ss:$2 sm:$0xff]
      %s1153 = scalar_lea.vmem [#allocation2], 144
      %v1154 = vld [vmem:[%s1153] ss:$2 sm:$0xff]
      %s1155 = scalar_lea.vmem [#allocation2], 160
      %v1156 = vld [vmem:[%s1155] ss:$2 sm:$0xff]
      %s1157 = scalar_lea.vmem [#allocation2], 176
      %v1158 = vld [vmem:[%s1157] ss:$2 sm:$0xff]
      %s1159 = scalar_lea.vmem [#allocation2], 192
      %v1160 = vld [vmem:[%s1159] ss:$2 sm:$0xff]
      %s1161 = scalar_lea.vmem [#allocation2], 208
      %v1162 = vld [vmem:[%s1161] ss:$2 sm:$0xff]
      %s1163 = scalar_lea.vmem [#allocation2], 224
      %v1164 = vld [vmem:[%s1163] ss:$2 sm:$0xff]
      %s1165 = scalar_lea.vmem [#allocation2], 240
      %v1166 = vld [vmem:[%s1165] ss:$2 sm:$0xff]
      %s1167 = scalar_lea.vmem [#allocation2], 256
      %v1168 = vld [vmem:[%s1167] ss:$2 sm:$0xff]
      %s1169 = scalar_lea.vmem [#allocation2], 272
      %v1170 = vld [vmem:[%s1169] ss:$2 sm:$0xff]
      %s1171 = scalar_lea.vmem [#allocation2], 288
      %v1172 = vld [vmem:[%s1171] ss:$2 sm:$0xff]
      %s1173 = scalar_lea.vmem [#allocation2], 304
      %v1174 = vld [vmem:[%s1173] ss:$2 sm:$0xff]
      %s1175 = scalar_lea.vmem [#allocation2], 320
      %v1176 = vld [vmem:[%s1175] ss:$2 sm:$0xff]
      %s1177 = scalar_lea.vmem [#allocation2], 336
      %v1178 = vld [vmem:[%s1177] ss:$2 sm:$0xff]
      %s1179 = scalar_lea.vmem [#allocation2], 352
      %v1180 = vld [vmem:[%s1179] ss:$2 sm:$0xff]
      %s1181 = scalar_lea.vmem [#allocation2], 368
      %v1182 = vld [vmem:[%s1181] ss:$2 sm:$0xff]
      %s1183 = scalar_lea.vmem [#allocation2], 384
      %v1184 = vld [vmem:[%s1183] ss:$2 sm:$0xff]
      %s1185 = scalar_lea.vmem [#allocation2], 400
      %v1186 = vld [vmem:[%s1185] ss:$2 sm:$0xff]
      %s1187 = scalar_lea.vmem [#allocation2], 416
      %v1188 = vld [vmem:[%s1187] ss:$2 sm:$0xff]
      %s1189 = scalar_lea.vmem [#allocation2], 432
      %v1190 = vld [vmem:[%s1189] ss:$2 sm:$0xff]
      %s1191 = scalar_lea.vmem [#allocation2], 448
      %v1192 = vld [vmem:[%s1191] ss:$2 sm:$0xff]
      %s1193 = scalar_lea.vmem [#allocation2], 464
      %v1194 = vld [vmem:[%s1193] ss:$2 sm:$0xff]
      %s1195 = scalar_lea.vmem [#allocation2], 480
      %v1196 = vld [vmem:[%s1195] ss:$2 sm:$0xff]
      %s1197 = scalar_lea.vmem [#allocation2], 496
      %v1198 = vld [vmem:[%s1197] ss:$2 sm:$0xff]
      %s1199 = scalar_lea.vmem [#allocation2], 512
      %v1200 = vld [vmem:[%s1199] ss:$2 sm:$0xff]
      %s1201 = scalar_lea.vmem [#allocation2], 528
      %v1202 = vld [vmem:[%s1201] ss:$2 sm:$0xff]
      %s1203 = scalar_lea.vmem [#allocation2], 544
      %v1204 = vld [vmem:[%s1203] ss:$2 sm:$0xff]
      %s1205 = scalar_lea.vmem [#allocation2], 560
      %v1206 = vld [vmem:[%s1205] ss:$2 sm:$0xff]
      %s1207 = scalar_lea.vmem [#allocation2], 576
      %v1208 = vld [vmem:[%s1207] ss:$2 sm:$0xff]
      %s1209 = scalar_lea.vmem [#allocation2], 592
      %v1210 = vld [vmem:[%s1209] ss:$2 sm:$0xff]
      %s1211 = scalar_lea.vmem [#allocation2], 608
      %v1212 = vld [vmem:[%s1211] ss:$2 sm:$0xff]
      %s1213 = scalar_lea.vmem [#allocation2], 624
      %v1214 = vld [vmem:[%s1213] ss:$2 sm:$0xff]
      %s1215 = scalar_lea.vmem [#allocation2], 640
      %v1216 = vld [vmem:[%s1215] ss:$2 sm:$0xff]
      %s1217 = scalar_lea.vmem [#allocation2], 656
      %v1218 = vld [vmem:[%s1217] ss:$2 sm:$0xff]
      %s1219 = scalar_lea.vmem [#allocation2], 672
      %v1220 = vld [vmem:[%s1219] ss:$2 sm:$0xff]
      %s1221 = scalar_lea.vmem [#allocation2], 688
      %v1222 = vld [vmem:[%s1221] ss:$2 sm:$0xff]
      %s1223 = scalar_lea.vmem [#allocation2], 704
      %v1224 = vld [vmem:[%s1223] ss:$2 sm:$0xff]
      %s1225 = scalar_lea.vmem [#allocation2], 720
      %v1226 = vld [vmem:[%s1225] ss:$2 sm:$0xff]
      %s1227 = scalar_lea.vmem [#allocation2], 736
      %v1228 = vld [vmem:[%s1227] ss:$2 sm:$0xff]
      %s1229 = scalar_lea.vmem [#allocation2], 752
      %v1230 = vld [vmem:[%s1229] ss:$2 sm:$0xff]
      %s1231 = scalar_lea.vmem [#allocation2], 768
      %v1232 = vld [vmem:[%s1231] ss:$2 sm:$0xff]
      %s1233 = scalar_lea.vmem [#allocation2], 1
      %v1234 = vld [vmem:[%s1233] ss:$2 sm:$0xff]
      %s1235 = scalar_lea.vmem [#allocation2], 17
      %v1236 = vld [vmem:[%s1235] ss:$2 sm:$0xff]
      %s1237 = scalar_lea.vmem [#allocation2], 33
      %v1238 = vld [vmem:[%s1237] ss:$2 sm:$0xff]
      %s1239 = scalar_lea.vmem [#allocation2], 49
      %v1240 = vld [vmem:[%s1239] ss:$2 sm:$0xff]
      %s1241 = scalar_lea.vmem [#allocation2], 65
      %v1242 = vld [vmem:[%s1241] ss:$2 sm:$0xff]
      %s1243 = scalar_lea.vmem [#allocation2], 81
      %v1244 = vld [vmem:[%s1243] ss:$2 sm:$0xff]
      %s1245 = scalar_lea.vmem [#allocation2], 97
      %v1246 = vld [vmem:[%s1245] ss:$2 sm:$0xff]
      %s1247 = scalar_lea.vmem [#allocation2], 113
      %v1248 = vld [vmem:[%s1247] ss:$2 sm:$0xff]
      %s1249 = scalar_lea.vmem [#allocation2], 129
      %v1250 = vld [vmem:[%s1249] ss:$2 sm:$0xff]
      %s1251 = scalar_lea.vmem [#allocation2], 145
      %v1252 = vld [vmem:[%s1251] ss:$2 sm:$0xff]
      %s1253 = scalar_lea.vmem [#allocation2], 161
      %v1254 = vld [vmem:[%s1253] ss:$2 sm:$0xff]
      %s1255 = scalar_lea.vmem [#allocation2], 177
      %v1256 = vld [vmem:[%s1255] ss:$2 sm:$0xff]
      %s1257 = scalar_lea.vmem [#allocation2], 193
      %v1258 = vld [vmem:[%s1257] ss:$2 sm:$0xff]
      %s1259 = scalar_lea.vmem [#allocation2], 209
      %v1260 = vld [vmem:[%s1259] ss:$2 sm:$0xff]
      %s1261 = scalar_lea.vmem [#allocation2], 225
      %v1262 = vld [vmem:[%s1261] ss:$2 sm:$0xff]
      %s1263 = scalar_lea.vmem [#allocation2], 241
      %v1264 = vld [vmem:[%s1263] ss:$2 sm:$0xff]
      %s1265 = scalar_lea.vmem [#allocation2], 257
      %v1266 = vld [vmem:[%s1265] ss:$2 sm:$0xff]
      %s1267 = scalar_lea.vmem [#allocation2], 273
      %v1268 = vld [vmem:[%s1267] ss:$2 sm:$0xff]
      %s1269 = scalar_lea.vmem [#allocation2], 289
      %v1270 = vld [vmem:[%s1269] ss:$2 sm:$0xff]
      %s1271 = scalar_lea.vmem [#allocation2], 305
      %v1272 = vld [vmem:[%s1271] ss:$2 sm:$0xff]
      %s1273 = scalar_lea.vmem [#allocation2], 321
      %v1274 = vld [vmem:[%s1273] ss:$2 sm:$0xff]
      %s1275 = scalar_lea.vmem [#allocation2], 337
      %v1276 = vld [vmem:[%s1275] ss:$2 sm:$0xff]
      %s1277 = scalar_lea.vmem [#allocation2], 353
      %v1278 = vld [vmem:[%s1277] ss:$2 sm:$0xff]
      %s1279 = scalar_lea.vmem [#allocation2], 369
      %v1280 = vld [vmem:[%s1279] ss:$2 sm:$0xff]
      %s1281 = scalar_lea.vmem [#allocation2], 385
      %v1282 = vld [vmem:[%s1281] ss:$2 sm:$0xff]
      %s1283 = scalar_lea.vmem [#allocation2], 401
      %v1284 = vld [vmem:[%s1283] ss:$2 sm:$0xff]
      %s1285 = scalar_lea.vmem [#allocation2], 417
      %v1286 = vld [vmem:[%s1285] ss:$2 sm:$0xff]
      %s1287 = scalar_lea.vmem [#allocation2], 433
      %v1288 = vld [vmem:[%s1287] ss:$2 sm:$0xff]
      %s1289 = scalar_lea.vmem [#allocation2], 449
      %v1290 = vld [vmem:[%s1289] ss:$2 sm:$0xff]
      %s1291 = scalar_lea.vmem [#allocation2], 465
      %v1292 = vld [vmem:[%s1291] ss:$2 sm:$0xff]
      %s1293 = scalar_lea.vmem [#allocation2], 481
      %v1294 = vld [vmem:[%s1293] ss:$2 sm:$0xff]
      %s1295 = scalar_lea.vmem [#allocation2], 497
      %v1296 = vld [vmem:[%s1295] ss:$2 sm:$0xff]
      %s1297 = scalar_lea.vmem [#allocation2], 513
      %v1298 = vld [vmem:[%s1297] ss:$2 sm:$0xff]
      %s1299 = scalar_lea.vmem [#allocation2], 529
      %v1300 = vld [vmem:[%s1299] ss:$2 sm:$0xff]
      %s1301 = scalar_lea.vmem [#allocation2], 545
      %v1302 = vld [vmem:[%s1301] ss:$2 sm:$0xff]
      %s1303 = scalar_lea.vmem [#allocation2], 561
      %v1304 = vld [vmem:[%s1303] ss:$2 sm:$0xff]
      %s1305 = scalar_lea.vmem [#allocation2], 577
      %v1306 = vld [vmem:[%s1305] ss:$2 sm:$0xff]
      %s1307 = scalar_lea.vmem [#allocation2], 593
      %v1308 = vld [vmem:[%s1307] ss:$2 sm:$0xff]
      %s1309 = scalar_lea.vmem [#allocation2], 609
      %v1310 = vld [vmem:[%s1309] ss:$2 sm:$0xff]
      %s1311 = scalar_lea.vmem [#allocation2], 625
      %v1312 = vld [vmem:[%s1311] ss:$2 sm:$0xff]
      %s1313 = scalar_lea.vmem [#allocation2], 641
      %v1314 = vld [vmem:[%s1313] ss:$2 sm:$0xff]
      %s1315 = scalar_lea.vmem [#allocation2], 657
      %v1316 = vld [vmem:[%s1315] ss:$2 sm:$0xff]
      %s1317 = scalar_lea.vmem [#allocation2], 673
      %v1318 = vld [vmem:[%s1317] ss:$2 sm:$0xff]
      %s1319 = scalar_lea.vmem [#allocation2], 689
      %v1320 = vld [vmem:[%s1319] ss:$2 sm:$0xff]
      %s1321 = scalar_lea.vmem [#allocation2], 705
      %v1322 = vld [vmem:[%s1321] ss:$2 sm:$0xff]
      %s1323 = scalar_lea.vmem [#allocation2], 721
      %v1324 = vld [vmem:[%s1323] ss:$2 sm:$0xff]
      %s1325 = scalar_lea.vmem [#allocation2], 737
      %v1326 = vld [vmem:[%s1325] ss:$2 sm:$0xff]
      %s1327 = scalar_lea.vmem [#allocation2], 753
      %v1328 = vld [vmem:[%s1327] ss:$2 sm:$0xff]
      %s1329 = scalar_lea.vmem [#allocation2], 769
      %v1330 = vld [vmem:[%s1329] ss:$2 sm:$0xff]
      %v1331 = vmax.f32 %v1136, %v1234
      %v1332 = vmax.f32 %v1138, %v1236
      %v1333 = vmax.f32 %v1140, %v1238
      %v1334 = vmax.f32 %v1142, %v1240
      %v1335 = vmax.f32 %v1144, %v1242
      %v1336 = vmax.f32 %v1146, %v1244
      %v1337 = vmax.f32 %v1148, %v1246
      %v1338 = vmax.f32 %v1150, %v1248
      %v1339 = vmax.f32 %v1152, %v1250
      %v1340 = vmax.f32 %v1154, %v1252
      %v1341 = vmax.f32 %v1156, %v1254
      %v1342 = vmax.f32 %v1158, %v1256
      %v1343 = vmax.f32 %v1160, %v1258
      %v1344 = vmax.f32 %v1162, %v1260
      %v1345 = vmax.f32 %v1164, %v1262
      %v1346 = vmax.f32 %v1166, %v1264
      %v1347 = vmax.f32 %v1168, %v1266
      %v1348 = vmax.f32 %v1170, %v1268
      %v1349 = vmax.f32 %v1172, %v1270
      %v1350 = vmax.f32 %v1174, %v1272
      %v1351 = vmax.f32 %v1176, %v1274
      %v1352 = vmax.f32 %v1178, %v1276
      %v1353 = vmax.f32 %v1180, %v1278
      %v1354 = vmax.f32 %v1182, %v1280
      %v1355 = vmax.f32 %v1184, %v1282
      %v1356 = vmax.f32 %v1186, %v1284
      %v1357 = vmax.f32 %v1188, %v1286
      %v1358 = vmax.f32 %v1190, %v1288
      %v1359 = vmax.f32 %v1192, %v1290
      %v1360 = vmax.f32 %v1194, %v1292
      %v1361 = vmax.f32 %v1196, %v1294
      %v1362 = vmax.f32 %v1198, %v1296
      %v1363 = vmax.f32 %v1200, %v1298
      %v1364 = vmax.f32 %v1202, %v1300
      %v1365 = vmax.f32 %v1204, %v1302
      %v1366 = vmax.f32 %v1206, %v1304
      %v1367 = vmax.f32 %v1208, %v1306
      %v1368 = vmax.f32 %v1210, %v1308
      %v1369 = vmax.f32 %v1212, %v1310
      %v1370 = vmax.f32 %v1214, %v1312
      %v1371 = vmax.f32 %v1216, %v1314
      %v1372 = vmax.f32 %v1218, %v1316
      %v1373 = vmax.f32 %v1220, %v1318
      %v1374 = vmax.f32 %v1222, %v1320
      %v1375 = vmax.f32 %v1224, %v1322
      %v1376 = vmax.f32 %v1226, %v1324
      %v1377 = vmax.f32 %v1228, %v1326
      %v1378 = vmax.f32 %v1230, %v1328
      %v1379 = vmax.f32 %v1232, %v1330
      %1380 = vst.msk [vmem:[#allocation3] sm:$0xff] %vm1037, %v1331
      %1381 = vst.msk [vmem:[#allocation3 + $0x8] sm:$0xff] %vm1037, %v1332
      %1382 = vst.msk [vmem:[#allocation3 + $0x10] sm:$0xff] %vm1037, %v1333
      %1383 = vst.msk [vmem:[#allocation3 + $0x18] sm:$0xff] %vm1037, %v1334
      %1384 = vst.msk [vmem:[#allocation3 + $0x20] sm:$0xff] %vm1037, %v1335
      %1385 = vst.msk [vmem:[#allocation3 + $0x28] sm:$0xff] %vm1037, %v1336
      %1386 = vst.msk [vmem:[#allocation3 + $0x30] sm:$0xff] %vm1037, %v1337
      %1387 = vst.msk [vmem:[#allocation3 + $0x38] sm:$0xff] %vm1037, %v1338
      %1388 = vst.msk [vmem:[#allocation3 + $0x40] sm:$0xff] %vm1037, %v1339
      %1389 = vst.msk [vmem:[#allocation3 + $0x48] sm:$0xff] %vm1037, %v1340
      %1390 = vst.msk [vmem:[#allocation3 + $0x50] sm:$0xff] %vm1037, %v1341
      %1391 = vst.msk [vmem:[#allocation3 + $0x58] sm:$0xff] %vm1037, %v1342
      %1392 = vst.msk [vmem:[#allocation3 + $0x60] sm:$0xff] %vm1037, %v1343
      %1393 = vst.msk [vmem:[#allocation3 + $0x68] sm:$0xff] %vm1037, %v1344
      %1394 = vst.msk [vmem:[#allocation3 + $0x70] sm:$0xff] %vm1037, %v1345
      %1395 = vst.msk [vmem:[#allocation3 + $0x78] sm:$0xff] %vm1037, %v1346
      %1396 = vst.msk [vmem:[#allocation3 + $0x80] sm:$0xff] %vm1037, %v1347
      %1397 = vst.msk [vmem:[#allocation3 + $0x88] sm:$0xff] %vm1037, %v1348
      %1398 = vst.msk [vmem:[#allocation3 + $0x90] sm:$0xff] %vm1037, %v1349
      %1399 = vst.msk [vmem:[#allocation3 + $0x98] sm:$0xff] %vm1037, %v1350
      %1400 = vst.msk [vmem:[#allocation3 + $0xa0] sm:$0xff] %vm1037, %v1351
      %1401 = vst.msk [vmem:[#allocation3 + $0xa8] sm:$0xff] %vm1037, %v1352
      %1402 = vst.msk [vmem:[#allocation3 + $0xb0] sm:$0xff] %vm1037, %v1353
      %1403 = vst.msk [vmem:[#allocation3 + $0xb8] sm:$0xff] %vm1037, %v1354
      %1404 = vst.msk [vmem:[#allocation3 + $0xc0] sm:$0xff] %vm1037, %v1355
      %1405 = vst.msk [vmem:[#allocation3 + $0xc8] sm:$0xff] %vm1037, %v1356
      %1406 = vst.msk [vmem:[#allocation3 + $0xd0] sm:$0xff] %vm1037, %v1357
      %1407 = vst.msk [vmem:[#allocation3 + $0xd8] sm:$0xff] %vm1037, %v1358
      %1408 = vst.msk [vmem:[#allocation3 + $0xe0] sm:$0xff] %vm1037, %v1359
      %1409 = vst.msk [vmem:[#allocation3 + $0xe8] sm:$0xff] %vm1037, %v1360
      %1410 = vst.msk [vmem:[#allocation3 + $0xf0] sm:$0xff] %vm1037, %v1361
      %1411 = vst.msk [vmem:[#allocation3 + $0xf8] sm:$0xff] %vm1037, %v1362
      %1412 = vst.msk [vmem:[#allocation3 + $0x100] sm:$0xff] %vm1037, %v1363
      %1413 = vst.msk [vmem:[#allocation3 + $0x108] sm:$0xff] %vm1037, %v1364
      %1414 = vst.msk [vmem:[#allocation3 + $0x110] sm:$0xff] %vm1037, %v1365
      %1415 = vst.msk [vmem:[#allocation3 + $0x118] sm:$0xff] %vm1037, %v1366
      %1416 = vst.msk [vmem:[#allocation3 + $0x120] sm:$0xff] %vm1037, %v1367
      %1417 = vst.msk [vmem:[#allocation3 + $0x128] sm:$0xff] %vm1037, %v1368
      %1418 = vst.msk [vmem:[#allocation3 + $0x130] sm:$0xff] %vm1037, %v1369
      %1419 = vst.msk [vmem:[#allocation3 + $0x138] sm:$0xff] %vm1037, %v1370
      %1420 = vst.msk [vmem:[#allocation3 + $0x140] sm:$0xff] %vm1037, %v1371
      %1421 = vst.msk [vmem:[#allocation3 + $0x148] sm:$0xff] %vm1037, %v1372
      %1422 = vst.msk [vmem:[#allocation3 + $0x150] sm:$0xff] %vm1037, %v1373
      %1423 = vst.msk [vmem:[#allocation3 + $0x158] sm:$0xff] %vm1037, %v1374
      %1424 = vst.msk [vmem:[#allocation3 + $0x160] sm:$0xff] %vm1037, %v1375
      %1425 = vst.msk [vmem:[#allocation3 + $0x168] sm:$0xff] %vm1037, %v1376
      %1426 = vst.msk [vmem:[#allocation3 + $0x170] sm:$0xff] %vm1037, %v1377
      %1427 = vst.msk [vmem:[#allocation3 + $0x178] sm:$0xff] %vm1037, %v1378
      %1428 = vst.msk [vmem:[#allocation3 + $0x180] sm:$0xff] %vm1037, %v1379
      %1429 = vst.msk [vmem:[#allocation4] sm:$0xff] %vm1037, 0.0
      %1430 = vst.msk [vmem:[#allocation4 + $0x8] sm:$0xff] %vm1037, 0.0
      %1431 = vst.msk [vmem:[#allocation4 + $0x10] sm:$0xff] %vm1037, 0.0
      %1432 = vst.msk [vmem:[#allocation4 + $0x18] sm:$0xff] %vm1037, 0.0
      %1433 = vst.msk [vmem:[#allocation4 + $0x20] sm:$0xff] %vm1037, 0.0
      %1434 = vst.msk [vmem:[#allocation4 + $0x28] sm:$0xff] %vm1037, 0.0
      %1435 = vst.msk [vmem:[#allocation4 + $0x30] sm:$0xff] %vm1037, 0.0
      %1436 = vst.msk [vmem:[#allocation4 + $0x38] sm:$0xff] %vm1037, 0.0
      %1437 = vst.msk [vmem:[#allocation4 + $0x40] sm:$0xff] %vm1037, 0.0
      %1438 = vst.msk [vmem:[#allocation4 + $0x48] sm:$0xff] %vm1037, 0.0
      %1439 = vst.msk [vmem:[#allocation4 + $0x50] sm:$0xff] %vm1037, 0.0
      %1440 = vst.msk [vmem:[#allocation4 + $0x58] sm:$0xff] %vm1037, 0.0
      %1441 = vst.msk [vmem:[#allocation4 + $0x60] sm:$0xff] %vm1037, 0.0
      %1442 = vst.msk [vmem:[#allocation4 + $0x68] sm:$0xff] %vm1037, 0.0
      %1443 = vst.msk [vmem:[#allocation4 + $0x70] sm:$0xff] %vm1037, 0.0
      %1444 = vst.msk [vmem:[#allocation4 + $0x78] sm:$0xff] %vm1037, 0.0
      %1445 = vst.msk [vmem:[#allocation4 + $0x80] sm:$0xff] %vm1037, 0.0
      %1446 = vst.msk [vmem:[#allocation4 + $0x88] sm:$0xff] %vm1037, 0.0
      %1447 = vst.msk [vmem:[#allocation4 + $0x90] sm:$0xff] %vm1037, 0.0
      %1448 = vst.msk [vmem:[#allocation4 + $0x98] sm:$0xff] %vm1037, 0.0
      %1449 = vst.msk [vmem:[#allocation4 + $0xa0] sm:$0xff] %vm1037, 0.0
      %1450 = vst.msk [vmem:[#allocation4 + $0xa8] sm:$0xff] %vm1037, 0.0
      %1451 = vst.msk [vmem:[#allocation4 + $0xb0] sm:$0xff] %vm1037, 0.0
      %1452 = vst.msk [vmem:[#allocation4 + $0xb8] sm:$0xff] %vm1037, 0.0
      %1453 = vst.msk [vmem:[#allocation4 + $0xc0] sm:$0xff] %vm1037, 0.0
      %1454 = vst.msk [vmem:[#allocation4 + $0xc8] sm:$0xff] %vm1037, 0.0
      %1455 = vst.msk [vmem:[#allocation4 + $0xd0] sm:$0xff] %vm1037, 0.0
      %1456 = vst.msk [vmem:[#allocation4 + $0xd8] sm:$0xff] %vm1037, 0.0
      %1457 = vst.msk [vmem:[#allocation4 + $0xe0] sm:$0xff] %vm1037, 0.0
      %1458 = vst.msk [vmem:[#allocation4 + $0xe8] sm:$0xff] %vm1037, 0.0
      %1459 = vst.msk [vmem:[#allocation4 + $0xf0] sm:$0xff] %vm1037, 0.0
      %1460 = vst.msk [vmem:[#allocation4 + $0xf8] sm:$0xff] %vm1037, 0.0
      %v1461 = vld [vmem:[#allocation3] sm:$0xff]
      %v1462 = vld [vmem:[#allocation3 + $0x8] sm:$0x3f]
      %v1463 = vld [vmem:[#allocation3 + $0xe] sm:$0xff]
      %v1464 = vld [vmem:[#allocation3 + $0x16] sm:$0x3f]
      %v1465 = vmax.f32 %v1461, %v1463
      %v1466 = vmax.f32 %v1462, %v1464
      %s1467 = scalar_lea.vmem [#allocation4], 16
      %1468 = vst.msk [vmem:[%s1467 + $0x1] sm:$0xff] %vm1037, %v1465
      %vm1469 = vcmask 259072
      %1470 = vst.msk [vmem:[%s1467 + $0x9] sm:$0x3f] %vm1469, %v1466
      %v1471 = vld [vmem:[#allocation3 + $0x1c] sm:$0xff]
      %v1472 = vld [vmem:[#allocation3 + $0x24] sm:$0x3f]
      %v1473 = vld [vmem:[#allocation3 + $0x2a] sm:$0xff]
      %v1474 = vld [vmem:[#allocation3 + $0x32] sm:$0x3f]
      %v1475 = vmax.f32 %v1471, %v1473
      %v1476 = vmax.f32 %v1472, %v1474
      %s1477 = scalar_lea.vmem [#allocation4], 32
      %1478 = vst.msk [vmem:[%s1477 + $0x1] sm:$0xff] %vm1037, %v1475
      %1479 = vst.msk [vmem:[%s1477 + $0x9] sm:$0x3f] %vm1469, %v1476
      %v1480 = vld [vmem:[#allocation3 + $0x38] sm:$0xff]
      %v1481 = vld [vmem:[#allocation3 + $0x40] sm:$0x3f]
      %v1482 = vld [vmem:[#allocation3 + $0x46] sm:$0xff]
      %v1483 = vld [vmem:[#allocation3 + $0x4e] sm:$0x3f]
      %v1484 = vmax.f32 %v1480, %v1482
      %v1485 = vmax.f32 %v1481, %v1483
      %s1486 = scalar_lea.vmem [#allocation4], 48
      %1487 = vst.msk [vmem:[%s1486 + $0x1] sm:$0xff] %vm1037, %v1484
      %1488 = vst.msk [vmem:[%s1486 + $0x9] sm:$0x3f] %vm1469, %v1485
      %v1489 = vld [vmem:[#allocation3 + $0x54] sm:$0xff]
      %v1490 = vld [vmem:[#allocation3 + $0x5c] sm:$0x3f]
      %v1491 = vld [vmem:[#allocation3 + $0x62] sm:$0xff]
      %v1492 = vld [vmem:[#allocation3 + $0x6a] sm:$0x3f]
      %v1493 = vmax.f32 %v1489, %v1491
      %v1494 = vmax.f32 %v1490, %v1492
      %s1495 = scalar_lea.vmem [#allocation4], 64
      %1496 = vst.msk [vmem:[%s1495 + $0x1] sm:$0xff] %vm1037, %v1493
      %1497 = vst.msk [vmem:[%s1495 + $0x9] sm:$0x3f] %vm1469, %v1494
      %v1498 = vld [vmem:[#allocation3 + $0x70] sm:$0xff]
      %v1499 = vld [vmem:[#allocation3 + $0x78] sm:$0x3f]
      %v1500 = vld [vmem:[#allocation3 + $0x7e] sm:$0xff]
      %v1501 = vld [vmem:[#allocation3 + $0x86] sm:$0x3f]
      %v1502 = vmax.f32 %v1498, %v1500
      %v1503 = vmax.f32 %v1499, %v1501
      %s1504 = scalar_lea.vmem [#allocation4], 80
      %1505 = vst.msk [vmem:[%s1504 + $0x1] sm:$0xff] %vm1037, %v1502
      %1506 = vst.msk [vmem:[%s1504 + $0x9] sm:$0x3f] %vm1469, %v1503
      %v1507 = vld [vmem:[#allocation3 + $0x8c] sm:$0xff]
      %v1508 = vld [vmem:[#allocation3 + $0x94] sm:$0x3f]
      %v1509 = vld [vmem:[#allocation3 + $0x9a] sm:$0xff]
      %v1510 = vld [vmem:[#allocation3 + $0xa2] sm:$0x3f]
      %v1511 = vmax.f32 %v1507, %v1509
      %v1512 = vmax.f32 %v1508, %v1510
      %s1513 = scalar_lea.vmem [#allocation4], 96
      %1514 = vst.msk [vmem:[%s1513 + $0x1] sm:$0xff] %vm1037, %v1511
      %1515 = vst.msk [vmem:[%s1513 + $0x9] sm:$0x3f] %vm1469, %v1512
      %v1516 = vld [vmem:[#allocation3 + $0xa8] sm:$0xff]
      %v1517 = vld [vmem:[#allocation3 + $0xb0] sm:$0x3f]
      %v1518 = vld [vmem:[#allocation3 + $0xb6] sm:$0xff]
      %v1519 = vld [vmem:[#allocation3 + $0xbe] sm:$0x3f]
      %v1520 = vmax.f32 %v1516, %v1518
      %v1521 = vmax.f32 %v1517, %v1519
      %s1522 = scalar_lea.vmem [#allocation4], 112
      %1523 = vst.msk [vmem:[%s1522 + $0x1] sm:$0xff] %vm1037, %v1520
      %1524 = vst.msk [vmem:[%s1522 + $0x9] sm:$0x3f] %vm1469, %v1521
      %v1525 = vld [vmem:[#allocation3 + $0xc4] sm:$0xff]
      %v1526 = vld [vmem:[#allocation3 + $0xcc] sm:$0x3f]
      %v1527 = vld [vmem:[#allocation3 + $0xd2] sm:$0xff]
      %v1528 = vld [vmem:[#allocation3 + $0xda] sm:$0x3f]
      %v1529 = vmax.f32 %v1525, %v1527
      %v1530 = vmax.f32 %v1526, %v1528
      %s1531 = scalar_lea.vmem [#allocation4], 128
      %1532 = vst.msk [vmem:[%s1531 + $0x1] sm:$0xff] %vm1037, %v1529
      %1533 = vst.msk [vmem:[%s1531 + $0x9] sm:$0x3f] %vm1469, %v1530
      %v1534 = vld [vmem:[#allocation3 + $0xe0] sm:$0xff]
      %v1535 = vld [vmem:[#allocation3 + $0xe8] sm:$0x3f]
      %v1536 = vld [vmem:[#allocation3 + $0xee] sm:$0xff]
      %v1537 = vld [vmem:[#allocation3 + $0xf6] sm:$0x3f]
      %v1538 = vmax.f32 %v1534, %v1536
      %v1539 = vmax.f32 %v1535, %v1537
      %s1540 = scalar_lea.vmem [#allocation4], 144
      %1541 = vst.msk [vmem:[%s1540 + $0x1] sm:$0xff] %vm1037, %v1538
      %1542 = vst.msk [vmem:[%s1540 + $0x9] sm:$0x3f] %vm1469, %v1539
      %v1543 = vld [vmem:[#allocation3 + $0xfc] sm:$0xff]
      %v1544 = vld [vmem:[#allocation3 + $0x104] sm:$0x3f]
      %v1545 = vld [vmem:[#allocation3 + $0x10a] sm:$0xff]
      %v1546 = vld [vmem:[#allocation3 + $0x112] sm:$0x3f]
      %v1547 = vmax.f32 %v1543, %v1545
      %v1548 = vmax.f32 %v1544, %v1546
      %s1549 = scalar_lea.vmem [#allocation4], 160
      %1550 = vst.msk [vmem:[%s1549 + $0x1] sm:$0xff] %vm1037, %v1547
      %1551 = vst.msk [vmem:[%s1549 + $0x9] sm:$0x3f] %vm1469, %v1548
      %v1552 = vld [vmem:[#allocation3 + $0x118] sm:$0xff]
      %v1553 = vld [vmem:[#allocation3 + $0x120] sm:$0x3f]
      %v1554 = vld [vmem:[#allocation3 + $0x126] sm:$0xff]
      %v1555 = vld [vmem:[#allocation3 + $0x12e] sm:$0x3f]
      %v1556 = vmax.f32 %v1552, %v1554
      %v1557 = vmax.f32 %v1553, %v1555
      %s1558 = scalar_lea.vmem [#allocation4], 176
      %1559 = vst.msk [vmem:[%s1558 + $0x1] sm:$0xff] %vm1037, %v1556
      %1560 = vst.msk [vmem:[%s1558 + $0x9] sm:$0x3f] %vm1469, %v1557
      %v1561 = vld [vmem:[#allocation3 + $0x134] sm:$0xff]
      %v1562 = vld [vmem:[#allocation3 + $0x13c] sm:$0x3f]
      %v1563 = vld [vmem:[#allocation3 + $0x142] sm:$0xff]
      %v1564 = vld [vmem:[#allocation3 + $0x14a] sm:$0x3f]
      %v1565 = vmax.f32 %v1561, %v1563
      %v1566 = vmax.f32 %v1562, %v1564
      %s1567 = scalar_lea.vmem [#allocation4], 192
      %1568 = vst.msk [vmem:[%s1567 + $0x1] sm:$0xff] %vm1037, %v1565
      %1569 = vst.msk [vmem:[%s1567 + $0x9] sm:$0x3f] %vm1469, %v1566
      %v1570 = vld [vmem:[#allocation3 + $0x150] sm:$0xff]
      %v1571 = vld [vmem:[#allocation3 + $0x158] sm:$0x3f]
      %v1572 = vld [vmem:[#allocation3 + $0x15e] sm:$0xff]
      %v1573 = vld [vmem:[#allocation3 + $0x166] sm:$0x3f]
      %v1574 = vmax.f32 %v1570, %v1572
      %v1575 = vmax.f32 %v1571, %v1573
      %s1576 = scalar_lea.vmem [#allocation4], 208
      %1577 = vst.msk [vmem:[%s1576 + $0x1] sm:$0xff] %vm1037, %v1574
      %1578 = vst.msk [vmem:[%s1576 + $0x9] sm:$0x3f] %vm1469, %v1575
      %v1579 = vld [vmem:[#allocation3 + $0x16c] sm:$0xff]
      %v1580 = vld [vmem:[#allocation3 + $0x174] sm:$0x3f]
      %v1581 = vld [vmem:[#allocation3 + $0x17a] sm:$0xff]
      %v1582 = vld [vmem:[#allocation3 + $0x182] sm:$0x3f]
      %v1583 = vmax.f32 %v1579, %v1581
      %v1584 = vmax.f32 %v1580, %v1582
      %s1585 = scalar_lea.vmem [#allocation4], 224
      %1586 = vst.msk [vmem:[%s1585 + $0x1] sm:$0xff] %vm1037, %v1583
      %1587 = vst.msk [vmem:[%s1585 + $0x9] sm:$0x3f] %vm1469, %v1584
      %v1588 = vld [vmem:[#allocation4] sm:$0xff]
      %v1589 = vld [vmem:[#allocation4 + $0x8] sm:$0x3f]
      %v1590 = vld [vmem:[#allocation4 + $0x1] sm:$0xff]
      %v1591 = vld [vmem:[#allocation4 + $0x9] sm:$0x3f]
      %v1592 = vld [vmem:[#allocation4 + $0x2] sm:$0xff]
      %v1593 = vld [vmem:[#allocation4 + $0xa] sm:$0x3f]
      %v1594 = vld [vmem:[%s1467] sm:$0xff]
      %v1595 = vld [vmem:[%s1467 + $0x8] sm:$0x3f]
      %v1596 = vld [vmem:[%s1467 + $0x1] sm:$0xff]
      %v1597 = vld [vmem:[%s1467 + $0x9] sm:$0x3f]
      %v1598 = vld [vmem:[%s1467 + $0x2] sm:$0xff]
      %v1599 = vld [vmem:[%s1467 + $0xa] sm:$0x3f]
      %v1600 = vld [vmem:[%s1477] sm:$0xff]
      %v1601 = vld [vmem:[%s1477 + $0x8] sm:$0x3f]
      %v1602 = vld [vmem:[%s1477 + $0x1] sm:$0xff]
      %v1603 = vld [vmem:[%s1477 + $0x9] sm:$0x3f]
      %v1604 = vld [vmem:[%s1477 + $0x2] sm:$0xff]
      %v1605 = vld [vmem:[%s1477 + $0xa] sm:$0x3f]
      %1608 = vrot.lane.b32.xlu0 %v1590, 32
      %v1609 = vpop.permute.xlu0 %1608
      %1610 = vrot.lane.b32.xlu0 %v1591, 32
      %v1611 = vpop.permute.xlu0 %1610
      %1616 = vrot.lane.b32.xlu0 %v1592, 64
      %v1617 = vpop.permute.xlu0 %1616
      %1618 = vrot.lane.b32.xlu0 %v1593, 64
      %v1619 = vpop.permute.xlu0 %1618
      %1624 = vrot.lane.b32.xlu0 %v1594, 96
      %v1625 = vpop.permute.xlu0 %1624
      %1626 = vrot.lane.b32.xlu0 %v1595, 96
      %v1627 = vpop.permute.xlu0 %1626
      %1632 = vrot.lane.b32.xlu0 %v1598, 32
      %v1633 = vpop.permute.xlu0 %1632
      %1634 = vrot.lane.b32.xlu0 %v1599, 32
      %v1635 = vpop.permute.xlu0 %1634
      %1640 = vrot.lane.b32.xlu0 %v1600, 64
      %v1641 = vpop.permute.xlu0 %1640
      %1642 = vrot.lane.b32.xlu0 %v1601, 64
      %v1643 = vpop.permute.xlu0 %1642
      %1648 = vrot.lane.b32.xlu0 %v1602, 96
      %v1649 = vpop.permute.xlu0 %1648
      %1650 = vrot.lane.b32.xlu0 %v1603, 96
      %v1651 = vpop.permute.xlu0 %1650
      %v1654 = vsel %vm1037, %v1588, %v1609
      %v1655 = vsel %vm1037, %v1589, %v1611
      %vm1656 = vcmask 523264
      %v1657 = vsel %vm1656, %v1654, %v1617
      %v1658 = vsel %vm1656, %v1655, %v1619
      %vm1659 = vcmask 785408
      %v1660 = vsel %vm1659, %v1657, %v1625
      %v1661 = vsel %vm1659, %v1658, %v1627
      %v1662 = vsel %vm1037, %v1596, %v1633
      %v1663 = vsel %vm1037, %v1597, %v1635
      %v1664 = vsel %vm1656, %v1662, %v1641
      %v1665 = vsel %vm1656, %v1663, %v1643
      %v1666 = vsel %vm1659, %v1664, %v1649
      %v1667 = vsel %vm1659, %v1665, %v1651
      %1668 = vst [vmem:[#allocation5] sm:$0xff] %v1660
      %1669 = vst [vmem:[#allocation5 + $0x8] sm:$0xff] %v1666
      %1670 = vst.msk [vmem:[#allocation5 + $0x10] sm:$0xff] %vm1037, %v1604
      %1671 = vst [vmem:[#allocation5 + $0x18] sm:$0x3f] %v1661
      %1672 = vst [vmem:[#allocation5 + $0x20] sm:$0x3f] %v1667
      %1673 = vst.msk [vmem:[#allocation5 + $0x28] sm:$0x3f] %vm1469, %v1605
      %v1674 = vld [vmem:[%s1467] sm:$0xff]
      %v1675 = vld [vmem:[%s1467 + $0x8] sm:$0x3f]
      %v1676 = vld [vmem:[%s1467 + $0x1] sm:$0xff]
      %v1677 = vld [vmem:[%s1467 + $0x9] sm:$0x3f]
      %v1678 = vld [vmem:[%s1467 + $0x2] sm:$0xff]
      %v1679 = vld [vmem:[%s1467 + $0xa] sm:$0x3f]
      %v1680 = vld [vmem:[%s1477] sm:$0xff]
      %v1681 = vld [vmem:[%s1477 + $0x8] sm:$0x3f]
      %v1682 = vld [vmem:[%s1477 + $0x1] sm:$0xff]
      %v1683 = vld [vmem:[%s1477 + $0x9] sm:$0x3f]
      %v1684 = vld [vmem:[%s1477 + $0x2] sm:$0xff]
      %v1685 = vld [vmem:[%s1477 + $0xa] sm:$0x3f]
      %v1686 = vld [vmem:[%s1486] sm:$0xff]
      %v1687 = vld [vmem:[%s1486 + $0x8] sm:$0x3f]
      %v1688 = vld [vmem:[%s1486 + $0x1] sm:$0xff]
      %v1689 = vld [vmem:[%s1486 + $0x9] sm:$0x3f]
      %v1690 = vld [vmem:[%s1486 + $0x2] sm:$0xff]
      %v1691 = vld [vmem:[%s1486 + $0xa] sm:$0x3f]
      %1694 = vrot.lane.b32.xlu0 %v1676, 32
      %v1695 = vpop.permute.xlu0 %1694
      %1696 = vrot.lane.b32.xlu0 %v1677, 32
      %v1697 = vpop.permute.xlu0 %1696
      %1702 = vrot.lane.b32.xlu0 %v1678, 64
      %v1703 = vpop.permute.xlu0 %1702
      %1704 = vrot.lane.b32.xlu0 %v1679, 64
      %v1705 = vpop.permute.xlu0 %1704
      %1710 = vrot.lane.b32.xlu0 %v1680, 96
      %v1711 = vpop.permute.xlu0 %1710
      %1712 = vrot.lane.b32.xlu0 %v1681, 96
      %v1713 = vpop.permute.xlu0 %1712
      %1718 = vrot.lane.b32.xlu0 %v1684, 32
      %v1719 = vpop.permute.xlu0 %1718
      %1720 = vrot.lane.b32.xlu0 %v1685, 32
      %v1721 = vpop.permute.xlu0 %1720
      %1726 = vrot.lane.b32.xlu0 %v1686, 64
      %v1727 = vpop.permute.xlu0 %1726
      %1728 = vrot.lane.b32.xlu0 %v1687, 64
      %v1729 = vpop.permute.xlu0 %1728
      %1734 = vrot.lane.b32.xlu0 %v1688, 96
      %v1735 = vpop.permute.xlu0 %1734
      %1736 = vrot.lane.b32.xlu0 %v1689, 96
      %v1737 = vpop.permute.xlu0 %1736
      %v1740 = vsel %vm1037, %v1674, %v1695
      %v1741 = vsel %vm1037, %v1675, %v1697
      %v1742 = vsel %vm1656, %v1740, %v1703
      %v1743 = vsel %vm1656, %v1741, %v1705
      %v1744 = vsel %vm1659, %v1742, %v1711
      %v1745 = vsel %vm1659, %v1743, %v1713
      %v1746 = vsel %vm1037, %v1682, %v1719
      %v1747 = vsel %vm1037, %v1683, %v1721
      %v1748 = vsel %vm1656, %v1746, %v1727
      %v1749 = vsel %vm1656, %v1747, %v1729
      %v1750 = vsel %vm1659, %v1748, %v1735
      %v1751 = vsel %vm1659, %v1749, %v1737
      %vm1758 = vcmask 1045504
      %v1759 = vrot.slane %v1744, 2
      %v1760 = vrot.slane %v1750, 2
      %v1761 = vrot.slane %v1690, 2
      %v1762 = vrot.slane %v1745, 2
      %v1763 = vsel %vm1758, %v1759, %v1762
      %v1764 = vrot.slane %v1751, 2
      %v1765 = vsel %vm1758, %v1760, %v1764
      %v1766 = vrot.slane %v1691, 2
      %v1767 = vsel %vm1758, %v1761, %v1766
      %1777 = vst [vmem:[#allocation5 + $0x18] sm:$0xc0] %v1759
      %1778 = vst [vmem:[#allocation5 + $0x20] sm:$0xc0] %v1760
      %vm1779 = vcmask 261126
      %1780 = vst.msk [vmem:[#allocation5 + $0x28] sm:$0xc0] %vm1779, %v1761
      %1781 = vst [vmem:[#allocation5 + $0x30] sm:$0xff] %v1763
      %1782 = vst [vmem:[#allocation5 + $0x38] sm:$0xff] %v1765
      %1783 = vst.msk [vmem:[#allocation5 + $0x40] sm:$0xff] %vm1037, %v1767
      %1784 = vst [vmem:[#allocation5 + $0x48] sm:$0xf] %v1762
      %1785 = vst [vmem:[#allocation5 + $0x50] sm:$0xf] %v1764
      %vm1786 = vcmask 257024
      %1787 = vst.msk [vmem:[#allocation5 + $0x58] sm:$0xf] %vm1786, %v1766
      %v1788 = vld [vmem:[%s1477] sm:$0xff]
      %v1789 = vld [vmem:[%s1477 + $0x8] sm:$0x3f]
      %v1790 = vld [vmem:[%s1477 + $0x1] sm:$0xff]
      %v1791 = vld [vmem:[%s1477 + $0x9] sm:$0x3f]
      %v1792 = vld [vmem:[%s1477 + $0x2] sm:$0xff]
      %v1793 = vld [vmem:[%s1477 + $0xa] sm:$0x3f]
      %v1794 = vld [vmem:[%s1486] sm:$0xff]
      %v1795 = vld [vmem:[%s1486 + $0x8] sm:$0x3f]
      %v1796 = vld [vmem:[%s1486 + $0x1] sm:$0xff]
      %v1797 = vld [vmem:[%s1486 + $0x9] sm:$0x3f]
      %v1798 = vld [vmem:[%s1486 + $0x2] sm:$0xff]
      %v1799 = vld [vmem:[%s1486 + $0xa] sm:$0x3f]
      %v1800 = vld [vmem:[%s1495] sm:$0xff]
      %v1801 = vld [vmem:[%s1495 + $0x8] sm:$0x3f]
      %v1802 = vld [vmem:[%s1495 + $0x1] sm:$0xff]
      %v1803 = vld [vmem:[%s1495 + $0x9] sm:$0x3f]
      %v1804 = vld [vmem:[%s1495 + $0x2] sm:$0xff]
      %v1805 = vld [vmem:[%s1495 + $0xa] sm:$0x3f]
      %1808 = vrot.lane.b32.xlu0 %v1790, 32
      %v1809 = vpop.permute.xlu0 %1808
      %1810 = vrot.lane.b32.xlu0 %v1791, 32
      %v1811 = vpop.permute.xlu0 %1810
      %1816 = vrot.lane.b32.xlu0 %v1792, 64
      %v1817 = vpop.permute.xlu0 %1816
      %1818 = vrot.lane.b32.xlu0 %v1793, 64
      %v1819 = vpop.permute.xlu0 %1818
      %1824 = vrot.lane.b32.xlu0 %v1794, 96
      %v1825 = vpop.permute.xlu0 %1824
      %1826 = vrot.lane.b32.xlu0 %v1795, 96
      %v1827 = vpop.permute.xlu0 %1826
      %1832 = vrot.lane.b32.xlu0 %v1798, 32
      %v1833 = vpop.permute.xlu0 %1832
      %1834 = vrot.lane.b32.xlu0 %v1799, 32
      %v1835 = vpop.permute.xlu0 %1834
      %1840 = vrot.lane.b32.xlu0 %v1800, 64
      %v1841 = vpop.permute.xlu0 %1840
      %1842 = vrot.lane.b32.xlu0 %v1801, 64
      %v1843 = vpop.permute.xlu0 %1842
      %1848 = vrot.lane.b32.xlu0 %v1802, 96
      %v1849 = vpop.permute.xlu0 %1848
      %1850 = vrot.lane.b32.xlu0 %v1803, 96
      %v1851 = vpop.permute.xlu0 %1850
      %v1854 = vsel %vm1037, %v1788, %v1809
      %v1855 = vsel %vm1037, %v1789, %v1811
      %v1856 = vsel %vm1656, %v1854, %v1817
      %v1857 = vsel %vm1656, %v1855, %v1819
      %v1858 = vsel %vm1659, %v1856, %v1825
      %v1859 = vsel %vm1659, %v1857, %v1827
      %v1860 = vsel %vm1037, %v1796, %v1833
      %v1861 = vsel %vm1037, %v1797, %v1835
      %v1862 = vsel %vm1656, %v1860, %v1841
      %v1863 = vsel %vm1656, %v1861, %v1843
      %v1864 = vsel %vm1659, %v1862, %v1849
      %v1865 = vsel %vm1659, %v1863, %v1851
      %vm1872 = vcmask 1043456
      %v1873 = vrot.slane %v1858, 4
      %v1874 = vrot.slane %v1864, 4
      %v1875 = vrot.slane %v1804, 4
      %v1876 = vrot.slane %v1859, 4
      %v1877 = vsel %vm1872, %v1873, %v1876
      %v1878 = vrot.slane %v1865, 4
      %v1879 = vsel %vm1872, %v1874, %v1878
      %v1880 = vrot.slane %v1805, 4
      %v1881 = vsel %vm1872, %v1875, %v1880
      %1891 = vst [vmem:[#allocation5 + $0x48] sm:$0xf0] %v1873
      %1892 = vst [vmem:[#allocation5 + $0x50] sm:$0xf0] %v1874
      %vm1893 = vcmask 261124
      %1894 = vst.msk [vmem:[#allocation5 + $0x58] sm:$0xf0] %vm1893, %v1875
      %1895 = vst [vmem:[#allocation5 + $0x60] sm:$0xff] %v1877
      %1896 = vst [vmem:[#allocation5 + $0x68] sm:$0xff] %v1879
      %1897 = vst.msk [vmem:[#allocation5 + $0x70] sm:$0xff] %vm1037, %v1881
      %1898 = vst [vmem:[#allocation5 + $0x78] sm:$0x3] %v1876
      %1899 = vst [vmem:[#allocation5 + $0x80] sm:$0x3] %v1878
      %vm1900 = vcmask 254976
      %1901 = vst.msk [vmem:[#allocation5 + $0x88] sm:$0x3] %vm1900, %v1880
      %v1902 = vld [vmem:[%s1486] sm:$0xff]
      %v1903 = vld [vmem:[%s1486 + $0x8] sm:$0x3f]
      %v1904 = vld [vmem:[%s1486 + $0x1] sm:$0xff]
      %v1905 = vld [vmem:[%s1486 + $0x9] sm:$0x3f]
      %v1906 = vld [vmem:[%s1486 + $0x2] sm:$0xff]
      %v1907 = vld [vmem:[%s1486 + $0xa] sm:$0x3f]
      %v1908 = vld [vmem:[%s1495] sm:$0xff]
      %v1909 = vld [vmem:[%s1495 + $0x8] sm:$0x3f]
      %v1910 = vld [vmem:[%s1495 + $0x1] sm:$0xff]
      %v1911 = vld [vmem:[%s1495 + $0x9] sm:$0x3f]
      %v1912 = vld [vmem:[%s1495 + $0x2] sm:$0xff]
      %v1913 = vld [vmem:[%s1495 + $0xa] sm:$0x3f]
      %v1914 = vld [vmem:[%s1504] sm:$0xff]
      %v1915 = vld [vmem:[%s1504 + $0x8] sm:$0x3f]
      %v1916 = vld [vmem:[%s1504 + $0x1] sm:$0xff]
      %v1917 = vld [vmem:[%s1504 + $0x9] sm:$0x3f]
      %v1918 = vld [vmem:[%s1504 + $0x2] sm:$0xff]
      %v1919 = vld [vmem:[%s1504 + $0xa] sm:$0x3f]
      %1922 = vrot.lane.b32.xlu0 %v1904, 32
      %v1923 = vpop.permute.xlu0 %1922
      %1924 = vrot.lane.b32.xlu0 %v1905, 32
      %v1925 = vpop.permute.xlu0 %1924
      %1930 = vrot.lane.b32.xlu0 %v1906, 64
      %v1931 = vpop.permute.xlu0 %1930
      %1932 = vrot.lane.b32.xlu0 %v1907, 64
      %v1933 = vpop.permute.xlu0 %1932
      %1938 = vrot.lane.b32.xlu0 %v1908, 96
      %v1939 = vpop.permute.xlu0 %1938
      %1940 = vrot.lane.b32.xlu0 %v1909, 96
      %v1941 = vpop.permute.xlu0 %1940
      %1946 = vrot.lane.b32.xlu0 %v1912, 32
      %v1947 = vpop.permute.xlu0 %1946
      %1948 = vrot.lane.b32.xlu0 %v1913, 32
      %v1949 = vpop.permute.xlu0 %1948
      %1954 = vrot.lane.b32.xlu0 %v1914, 64
      %v1955 = vpop.permute.xlu0 %1954
      %1956 = vrot.lane.b32.xlu0 %v1915, 64
      %v1957 = vpop.permute.xlu0 %1956
      %1962 = vrot.lane.b32.xlu0 %v1916, 96
      %v1963 = vpop.permute.xlu0 %1962
      %1964 = vrot.lane.b32.xlu0 %v1917, 96
      %v1965 = vpop.permute.xlu0 %1964
      %v1968 = vsel %vm1037, %v1902, %v1923
      %v1969 = vsel %vm1037, %v1903, %v1925
      %v1970 = vsel %vm1656, %v1968, %v1931
      %v1971 = vsel %vm1656, %v1969, %v1933
      %v1972 = vsel %vm1659, %v1970, %v1939
      %v1973 = vsel %vm1659, %v1971, %v1941
      %v1974 = vsel %vm1037, %v1910, %v1947
      %v1975 = vsel %vm1037, %v1911, %v1949
      %v1976 = vsel %vm1656, %v1974, %v1955
      %v1977 = vsel %vm1656, %v1975, %v1957
      %v1978 = vsel %vm1659, %v1976, %v1963
      %v1979 = vsel %vm1659, %v1977, %v1965
      %vm1986 = vcmask 1041408
      %v1987 = vrot.slane %v1972, 6
      %v1988 = vrot.slane %v1978, 6
      %v1989 = vrot.slane %v1918, 6
      %v1990 = vrot.slane %v1973, 6
      %v1991 = vsel %vm1986, %v1987, %v1990
      %v1992 = vrot.slane %v1979, 6
      %v1993 = vsel %vm1986, %v1988, %v1992
      %v1994 = vrot.slane %v1919, 6
      %v1995 = vsel %vm1986, %v1989, %v1994
      %2002 = vst [vmem:[#allocation5 + $0x78] sm:$0xfc] %v1987
      %2003 = vst [vmem:[#allocation5 + $0x80] sm:$0xfc] %v1988
      %vm2004 = vcmask 261122
      %2005 = vst.msk [vmem:[#allocation5 + $0x88] sm:$0xfc] %vm2004, %v1989
      %2006 = vst [vmem:[#allocation5 + $0x90] sm:$0xff] %v1991
      %2007 = vst [vmem:[#allocation5 + $0x98] sm:$0xff] %v1993
      %2008 = vst.msk [vmem:[#allocation5 + $0xa0] sm:$0xff] %vm1037, %v1995
      %v2009 = vld [vmem:[%s1495] sm:$0xff]
      %v2010 = vld [vmem:[%s1495 + $0x8] sm:$0x3f]
      %v2011 = vld [vmem:[%s1495 + $0x1] sm:$0xff]
      %v2012 = vld [vmem:[%s1495 + $0x9] sm:$0x3f]
      %v2013 = vld [vmem:[%s1495 + $0x2] sm:$0xff]
      %v2014 = vld [vmem:[%s1495 + $0xa] sm:$0x3f]
      %v2015 = vld [vmem:[%s1504] sm:$0xff]
      %v2016 = vld [vmem:[%s1504 + $0x8] sm:$0x3f]
      %v2017 = vld [vmem:[%s1504 + $0x1] sm:$0xff]
      %v2018 = vld [vmem:[%s1504 + $0x9] sm:$0x3f]
      %v2019 = vld [vmem:[%s1504 + $0x2] sm:$0xff]
      %v2020 = vld [vmem:[%s1504 + $0xa] sm:$0x3f]
      %v2021 = vld [vmem:[%s1513] sm:$0xff]
      %v2022 = vld [vmem:[%s1513 + $0x8] sm:$0x3f]
      %v2023 = vld [vmem:[%s1513 + $0x1] sm:$0xff]
      %v2024 = vld [vmem:[%s1513 + $0x9] sm:$0x3f]
      %v2025 = vld [vmem:[%s1513 + $0x2] sm:$0xff]
      %v2026 = vld [vmem:[%s1513 + $0xa] sm:$0x3f]
      %2029 = vrot.lane.b32.xlu0 %v2011, 32
      %v2030 = vpop.permute.xlu0 %2029
      %2031 = vrot.lane.b32.xlu0 %v2012, 32
      %v2032 = vpop.permute.xlu0 %2031
      %2037 = vrot.lane.b32.xlu0 %v2013, 64
      %v2038 = vpop.permute.xlu0 %2037
      %2039 = vrot.lane.b32.xlu0 %v2014, 64
      %v2040 = vpop.permute.xlu0 %2039
      %2045 = vrot.lane.b32.xlu0 %v2015, 96
      %v2046 = vpop.permute.xlu0 %2045
      %2047 = vrot.lane.b32.xlu0 %v2016, 96
      %v2048 = vpop.permute.xlu0 %2047
      %2053 = vrot.lane.b32.xlu0 %v2019, 32
      %v2054 = vpop.permute.xlu0 %2053
      %2055 = vrot.lane.b32.xlu0 %v2020, 32
      %v2056 = vpop.permute.xlu0 %2055
      %2061 = vrot.lane.b32.xlu0 %v2021, 64
      %v2062 = vpop.permute.xlu0 %2061
      %2063 = vrot.lane.b32.xlu0 %v2022, 64
      %v2064 = vpop.permute.xlu0 %2063
      %2069 = vrot.lane.b32.xlu0 %v2023, 96
      %v2070 = vpop.permute.xlu0 %2069
      %2071 = vrot.lane.b32.xlu0 %v2024, 96
      %v2072 = vpop.permute.xlu0 %2071
      %v2075 = vsel %vm1037, %v2009, %v2030
      %v2076 = vsel %vm1037, %v2010, %v2032
      %v2077 = vsel %vm1656, %v2075, %v2038
      %v2078 = vsel %vm1656, %v2076, %v2040
      %v2079 = vsel %vm1659, %v2077, %v2046
      %v2080 = vsel %vm1659, %v2078, %v2048
      %v2081 = vsel %vm1037, %v2017, %v2054
      %v2082 = vsel %vm1037, %v2018, %v2056
      %v2083 = vsel %vm1656, %v2081, %v2062
      %v2084 = vsel %vm1656, %v2082, %v2064
      %v2085 = vsel %vm1659, %v2083, %v2070
      %v2086 = vsel %vm1659, %v2084, %v2072
      %2087 = vst [vmem:[#allocation5 + $0xa8] sm:$0xff] %v2079
      %2088 = vst [vmem:[#allocation5 + $0xb0] sm:$0xff] %v2085
      %2089 = vst.msk [vmem:[#allocation5 + $0xb8] sm:$0xff] %vm1037, %v2025
      %2090 = vst [vmem:[#allocation5 + $0xc0] sm:$0x3f] %v2080
      %2091 = vst [vmem:[#allocation5 + $0xc8] sm:$0x3f] %v2086
      %2092 = vst.msk [vmem:[#allocation5 + $0xd0] sm:$0x3f] %vm1469, %v2026
      %v2093 = vld [vmem:[%s1504] sm:$0xff]
      %v2094 = vld [vmem:[%s1504 + $0x8] sm:$0x3f]
      %v2095 = vld [vmem:[%s1504 + $0x1] sm:$0xff]
      %v2096 = vld [vmem:[%s1504 + $0x9] sm:$0x3f]
      %v2097 = vld [vmem:[%s1504 + $0x2] sm:$0xff]
      %v2098 = vld [vmem:[%s1504 + $0xa] sm:$0x3f]
      %v2099 = vld [vmem:[%s1513] sm:$0xff]
      %v2100 = vld [vmem:[%s1513 + $0x8] sm:$0x3f]
      %v2101 = vld [vmem:[%s1513 + $0x1] sm:$0xff]
      %v2102 = vld [vmem:[%s1513 + $0x9] sm:$0x3f]
      %v2103 = vld [vmem:[%s1513 + $0x2] sm:$0xff]
      %v2104 = vld [vmem:[%s1513 + $0xa] sm:$0x3f]
      %v2105 = vld [vmem:[%s1522] sm:$0xff]
      %v2106 = vld [vmem:[%s1522 + $0x8] sm:$0x3f]
      %v2107 = vld [vmem:[%s1522 + $0x1] sm:$0xff]
      %v2108 = vld [vmem:[%s1522 + $0x9] sm:$0x3f]
      %v2109 = vld [vmem:[%s1522 + $0x2] sm:$0xff]
      %v2110 = vld [vmem:[%s1522 + $0xa] sm:$0x3f]
      %2113 = vrot.lane.b32.xlu0 %v2095, 32
      %v2114 = vpop.permute.xlu0 %2113
      %2115 = vrot.lane.b32.xlu0 %v2096, 32
      %v2116 = vpop.permute.xlu0 %2115
      %2121 = vrot.lane.b32.xlu0 %v2097, 64
      %v2122 = vpop.permute.xlu0 %2121
      %2123 = vrot.lane.b32.xlu0 %v2098, 64
      %v2124 = vpop.permute.xlu0 %2123
      %2129 = vrot.lane.b32.xlu0 %v2099, 96
      %v2130 = vpop.permute.xlu0 %2129
      %2131 = vrot.lane.b32.xlu0 %v2100, 96
      %v2132 = vpop.permute.xlu0 %2131
      %2137 = vrot.lane.b32.xlu0 %v2103, 32
      %v2138 = vpop.permute.xlu0 %2137
      %2139 = vrot.lane.b32.xlu0 %v2104, 32
      %v2140 = vpop.permute.xlu0 %2139
      %2145 = vrot.lane.b32.xlu0 %v2105, 64
      %v2146 = vpop.permute.xlu0 %2145
      %2147 = vrot.lane.b32.xlu0 %v2106, 64
      %v2148 = vpop.permute.xlu0 %2147
      %2153 = vrot.lane.b32.xlu0 %v2107, 96
      %v2154 = vpop.permute.xlu0 %2153
      %2155 = vrot.lane.b32.xlu0 %v2108, 96
      %v2156 = vpop.permute.xlu0 %2155
      %v2159 = vsel %vm1037, %v2093, %v2114
      %v2160 = vsel %vm1037, %v2094, %v2116
      %v2161 = vsel %vm1656, %v2159, %v2122
      %v2162 = vsel %vm1656, %v2160, %v2124
      %v2163 = vsel %vm1659, %v2161, %v2130
      %v2164 = vsel %vm1659, %v2162, %v2132
      %v2165 = vsel %vm1037, %v2101, %v2138
      %v2166 = vsel %vm1037, %v2102, %v2140
      %v2167 = vsel %vm1656, %v2165, %v2146
      %v2168 = vsel %vm1656, %v2166, %v2148
      %v2169 = vsel %vm1659, %v2167, %v2154
      %v2170 = vsel %vm1659, %v2168, %v2156
      %v2177 = vrot.slane %v2163, 2
      %v2178 = vrot.slane %v2169, 2
      %v2179 = vrot.slane %v2109, 2
      %v2180 = vrot.slane %v2164, 2
      %v2181 = vsel %vm1758, %v2177, %v2180
      %v2182 = vrot.slane %v2170, 2
      %v2183 = vsel %vm1758, %v2178, %v2182
      %v2184 = vrot.slane %v2110, 2
      %v2185 = vsel %vm1758, %v2179, %v2184
      %2195 = vst [vmem:[#allocation5 + $0xc0] sm:$0xc0] %v2177
      %2196 = vst [vmem:[#allocation5 + $0xc8] sm:$0xc0] %v2178
      %2197 = vst.msk [vmem:[#allocation5 + $0xd0] sm:$0xc0] %vm1779, %v2179
      %2198 = vst [vmem:[#allocation5 + $0xd8] sm:$0xff] %v2181
      %2199 = vst [vmem:[#allocation5 + $0xe0] sm:$0xff] %v2183
      %2200 = vst.msk [vmem:[#allocation5 + $0xe8] sm:$0xff] %vm1037, %v2185
      %2201 = vst [vmem:[#allocation5 + $0xf0] sm:$0xf] %v2180
      %2202 = vst [vmem:[#allocation5 + $0xf8] sm:$0xf] %v2182
      %2203 = vst.msk [vmem:[#allocation5 + $0x100] sm:$0xf] %vm1786, %v2184
      %v2204 = vld [vmem:[%s1513] sm:$0xff]
      %v2205 = vld [vmem:[%s1513 + $0x8] sm:$0x3f]
      %v2206 = vld [vmem:[%s1513 + $0x1] sm:$0xff]
      %v2207 = vld [vmem:[%s1513 + $0x9] sm:$0x3f]
      %v2208 = vld [vmem:[%s1513 + $0x2] sm:$0xff]
      %v2209 = vld [vmem:[%s1513 + $0xa] sm:$0x3f]
      %v2210 = vld [vmem:[%s1522] sm:$0xff]
      %v2211 = vld [vmem:[%s1522 + $0x8] sm:$0x3f]
      %v2212 = vld [vmem:[%s1522 + $0x1] sm:$0xff]
      %v2213 = vld [vmem:[%s1522 + $0x9] sm:$0x3f]
      %v2214 = vld [vmem:[%s1522 + $0x2] sm:$0xff]
      %v2215 = vld [vmem:[%s1522 + $0xa] sm:$0x3f]
      %v2216 = vld [vmem:[%s1531] sm:$0xff]
      %v2217 = vld [vmem:[%s1531 + $0x8] sm:$0x3f]
      %v2218 = vld [vmem:[%s1531 + $0x1] sm:$0xff]
      %v2219 = vld [vmem:[%s1531 + $0x9] sm:$0x3f]
      %v2220 = vld [vmem:[%s1531 + $0x2] sm:$0xff]
      %v2221 = vld [vmem:[%s1531 + $0xa] sm:$0x3f]
      %2224 = vrot.lane.b32.xlu0 %v2206, 32
      %v2225 = vpop.permute.xlu0 %2224
      %2226 = vrot.lane.b32.xlu0 %v2207, 32
      %v2227 = vpop.permute.xlu0 %2226
      %2232 = vrot.lane.b32.xlu0 %v2208, 64
      %v2233 = vpop.permute.xlu0 %2232
      %2234 = vrot.lane.b32.xlu0 %v2209, 64
      %v2235 = vpop.permute.xlu0 %2234
      %2240 = vrot.lane.b32.xlu0 %v2210, 96
      %v2241 = vpop.permute.xlu0 %2240
      %2242 = vrot.lane.b32.xlu0 %v2211, 96
      %v2243 = vpop.permute.xlu0 %2242
      %2248 = vrot.lane.b32.xlu0 %v2214, 32
      %v2249 = vpop.permute.xlu0 %2248
      %2250 = vrot.lane.b32.xlu0 %v2215, 32
      %v2251 = vpop.permute.xlu0 %2250
      %2256 = vrot.lane.b32.xlu0 %v2216, 64
      %v2257 = vpop.permute.xlu0 %2256
      %2258 = vrot.lane.b32.xlu0 %v2217, 64
      %v2259 = vpop.permute.xlu0 %2258
      %2264 = vrot.lane.b32.xlu0 %v2218, 96
      %v2265 = vpop.permute.xlu0 %2264
      %2266 = vrot.lane.b32.xlu0 %v2219, 96
      %v2267 = vpop.permute.xlu0 %2266
      %v2270 = vsel %vm1037, %v2204, %v2225
      %v2271 = vsel %vm1037, %v2205, %v2227
      %v2272 = vsel %vm1656, %v2270, %v2233
      %v2273 = vsel %vm1656, %v2271, %v2235
      %v2274 = vsel %vm1659, %v2272, %v2241
      %v2275 = vsel %vm1659, %v2273, %v2243
      %v2276 = vsel %vm1037, %v2212, %v2249
      %v2277 = vsel %vm1037, %v2213, %v2251
      %v2278 = vsel %vm1656, %v2276, %v2257
      %v2279 = vsel %vm1656, %v2277, %v2259
      %v2280 = vsel %vm1659, %v2278, %v2265
      %v2281 = vsel %vm1659, %v2279, %v2267
      %v2288 = vrot.slane %v2274, 4
      %v2289 = vrot.slane %v2280, 4
      %v2290 = vrot.slane %v2220, 4
      %v2291 = vrot.slane %v2275, 4
      %v2292 = vsel %vm1872, %v2288, %v2291
      %v2293 = vrot.slane %v2281, 4
      %v2294 = vsel %vm1872, %v2289, %v2293
      %v2295 = vrot.slane %v2221, 4
      %v2296 = vsel %vm1872, %v2290, %v2295
      %2306 = vst [vmem:[#allocation5 + $0xf0] sm:$0xf0] %v2288
      %2307 = vst [vmem:[#allocation5 + $0xf8] sm:$0xf0] %v2289
      %2308 = vst.msk [vmem:[#allocation5 + $0x100] sm:$0xf0] %vm1893, %v2290
      %2309 = vst [vmem:[#allocation5 + $0x108] sm:$0xff] %v2292
      %2310 = vst [vmem:[#allocation5 + $0x110] sm:$0xff] %v2294
      %2311 = vst.msk [vmem:[#allocation5 + $0x118] sm:$0xff] %vm1037, %v2296
      %2312 = vst [vmem:[#allocation5 + $0x120] sm:$0x3] %v2291
      %2313 = vst [vmem:[#allocation5 + $0x128] sm:$0x3] %v2293
      %2314 = vst.msk [vmem:[#allocation5 + $0x130] sm:$0x3] %vm1900, %v2295
      %v2315 = vld [vmem:[%s1522] sm:$0xff]
      %v2316 = vld [vmem:[%s1522 + $0x8] sm:$0x3f]
      %v2317 = vld [vmem:[%s1522 + $0x1] sm:$0xff]
      %v2318 = vld [vmem:[%s1522 + $0x9] sm:$0x3f]
      %v2319 = vld [vmem:[%s1522 + $0x2] sm:$0xff]
      %v2320 = vld [vmem:[%s1522 + $0xa] sm:$0x3f]
      %v2321 = vld [vmem:[%s1531] sm:$0xff]
      %v2322 = vld [vmem:[%s1531 + $0x8] sm:$0x3f]
      %v2323 = vld [vmem:[%s1531 + $0x1] sm:$0xff]
      %v2324 = vld [vmem:[%s1531 + $0x9] sm:$0x3f]
      %v2325 = vld [vmem:[%s1531 + $0x2] sm:$0xff]
      %v2326 = vld [vmem:[%s1531 + $0xa] sm:$0x3f]
      %v2327 = vld [vmem:[%s1540] sm:$0xff]
      %v2328 = vld [vmem:[%s1540 + $0x8] sm:$0x3f]
      %v2329 = vld [vmem:[%s1540 + $0x1] sm:$0xff]
      %v2330 = vld [vmem:[%s1540 + $0x9] sm:$0x3f]
      %v2331 = vld [vmem:[%s1540 + $0x2] sm:$0xff]
      %v2332 = vld [vmem:[%s1540 + $0xa] sm:$0x3f]
      %2335 = vrot.lane.b32.xlu0 %v2317, 32
      %v2336 = vpop.permute.xlu0 %2335
      %2337 = vrot.lane.b32.xlu0 %v2318, 32
      %v2338 = vpop.permute.xlu0 %2337
      %2343 = vrot.lane.b32.xlu0 %v2319, 64
      %v2344 = vpop.permute.xlu0 %2343
      %2345 = vrot.lane.b32.xlu0 %v2320, 64
      %v2346 = vpop.permute.xlu0 %2345
      %2351 = vrot.lane.b32.xlu0 %v2321, 96
      %v2352 = vpop.permute.xlu0 %2351
      %2353 = vrot.lane.b32.xlu0 %v2322, 96
      %v2354 = vpop.permute.xlu0 %2353
      %2359 = vrot.lane.b32.xlu0 %v2325, 32
      %v2360 = vpop.permute.xlu0 %2359
      %2361 = vrot.lane.b32.xlu0 %v2326, 32
      %v2362 = vpop.permute.xlu0 %2361
      %2367 = vrot.lane.b32.xlu0 %v2327, 64
      %v2368 = vpop.permute.xlu0 %2367
      %2369 = vrot.lane.b32.xlu0 %v2328, 64
      %v2370 = vpop.permute.xlu0 %2369
      %2375 = vrot.lane.b32.xlu0 %v2329, 96
      %v2376 = vpop.permute.xlu0 %2375
      %2377 = vrot.lane.b32.xlu0 %v2330, 96
      %v2378 = vpop.permute.xlu0 %2377
      %v2381 = vsel %vm1037, %v2315, %v2336
      %v2382 = vsel %vm1037, %v2316, %v2338
      %v2383 = vsel %vm1656, %v2381, %v2344
      %v2384 = vsel %vm1656, %v2382, %v2346
      %v2385 = vsel %vm1659, %v2383, %v2352
      %v2386 = vsel %vm1659, %v2384, %v2354
      %v2387 = vsel %vm1037, %v2323, %v2360
      %v2388 = vsel %vm1037, %v2324, %v2362
      %v2389 = vsel %vm1656, %v2387, %v2368
      %v2390 = vsel %vm1656, %v2388, %v2370
      %v2391 = vsel %vm1659, %v2389, %v2376
      %v2392 = vsel %vm1659, %v2390, %v2378
      %v2399 = vrot.slane %v2385, 6
      %v2400 = vrot.slane %v2391, 6
      %v2401 = vrot.slane %v2331, 6
      %v2402 = vrot.slane %v2386, 6
      %v2403 = vsel %vm1986, %v2399, %v2402
      %v2404 = vrot.slane %v2392, 6
      %v2405 = vsel %vm1986, %v2400, %v2404
      %v2406 = vrot.slane %v2332, 6
      %v2407 = vsel %vm1986, %v2401, %v2406
      %2414 = vst [vmem:[#allocation5 + $0x120] sm:$0xfc] %v2399
      %2415 = vst [vmem:[#allocation5 + $0x128] sm:$0xfc] %v2400
      %2416 = vst.msk [vmem:[#allocation5 + $0x130] sm:$0xfc] %vm2004, %v2401
      %2417 = vst [vmem:[#allocation5 + $0x138] sm:$0xff] %v2403
      %2418 = vst [vmem:[#allocation5 + $0x140] sm:$0xff] %v2405
      %2419 = vst.msk [vmem:[#allocation5 + $0x148] sm:$0xff] %vm1037, %v2407
      %v2420 = vld [vmem:[%s1531] sm:$0xff]
      %v2421 = vld [vmem:[%s1531 + $0x8] sm:$0x3f]
      %v2422 = vld [vmem:[%s1531 + $0x1] sm:$0xff]
      %v2423 = vld [vmem:[%s1531 + $0x9] sm:$0x3f]
      %v2424 = vld [vmem:[%s1531 + $0x2] sm:$0xff]
      %v2425 = vld [vmem:[%s1531 + $0xa] sm:$0x3f]
      %v2426 = vld [vmem:[%s1540] sm:$0xff]
      %v2427 = vld [vmem:[%s1540 + $0x8] sm:$0x3f]
      %v2428 = vld [vmem:[%s1540 + $0x1] sm:$0xff]
      %v2429 = vld [vmem:[%s1540 + $0x9] sm:$0x3f]
      %v2430 = vld [vmem:[%s1540 + $0x2] sm:$0xff]
      %v2431 = vld [vmem:[%s1540 + $0xa] sm:$0x3f]
      %v2432 = vld [vmem:[%s1549] sm:$0xff]
      %v2433 = vld [vmem:[%s1549 + $0x8] sm:$0x3f]
      %v2434 = vld [vmem:[%s1549 + $0x1] sm:$0xff]
      %v2435 = vld [vmem:[%s1549 + $0x9] sm:$0x3f]
      %v2436 = vld [vmem:[%s1549 + $0x2] sm:$0xff]
      %v2437 = vld [vmem:[%s1549 + $0xa] sm:$0x3f]
      %2440 = vrot.lane.b32.xlu0 %v2422, 32
      %v2441 = vpop.permute.xlu0 %2440
      %2442 = vrot.lane.b32.xlu0 %v2423, 32
      %v2443 = vpop.permute.xlu0 %2442
      %2448 = vrot.lane.b32.xlu0 %v2424, 64
      %v2449 = vpop.permute.xlu0 %2448
      %2450 = vrot.lane.b32.xlu0 %v2425, 64
      %v2451 = vpop.permute.xlu0 %2450
      %2456 = vrot.lane.b32.xlu0 %v2426, 96
      %v2457 = vpop.permute.xlu0 %2456
      %2458 = vrot.lane.b32.xlu0 %v2427, 96
      %v2459 = vpop.permute.xlu0 %2458
      %2464 = vrot.lane.b32.xlu0 %v2430, 32
      %v2465 = vpop.permute.xlu0 %2464
      %2466 = vrot.lane.b32.xlu0 %v2431, 32
      %v2467 = vpop.permute.xlu0 %2466
      %2472 = vrot.lane.b32.xlu0 %v2432, 64
      %v2473 = vpop.permute.xlu0 %2472
      %2474 = vrot.lane.b32.xlu0 %v2433, 64
      %v2475 = vpop.permute.xlu0 %2474
      %2480 = vrot.lane.b32.xlu0 %v2434, 96
      %v2481 = vpop.permute.xlu0 %2480
      %2482 = vrot.lane.b32.xlu0 %v2435, 96
      %v2483 = vpop.permute.xlu0 %2482
      %v2486 = vsel %vm1037, %v2420, %v2441
      %v2487 = vsel %vm1037, %v2421, %v2443
      %v2488 = vsel %vm1656, %v2486, %v2449
      %v2489 = vsel %vm1656, %v2487, %v2451
      %v2490 = vsel %vm1659, %v2488, %v2457
      %v2491 = vsel %vm1659, %v2489, %v2459
      %v2492 = vsel %vm1037, %v2428, %v2465
      %v2493 = vsel %vm1037, %v2429, %v2467
      %v2494 = vsel %vm1656, %v2492, %v2473
      %v2495 = vsel %vm1656, %v2493, %v2475
      %v2496 = vsel %vm1659, %v2494, %v2481
      %v2497 = vsel %vm1659, %v2495, %v2483
      %2498 = vst [vmem:[#allocation5 + $0x150] sm:$0xff] %v2490
      %2499 = vst [vmem:[#allocation5 + $0x158] sm:$0xff] %v2496
      %2500 = vst.msk [vmem:[#allocation5 + $0x160] sm:$0xff] %vm1037, %v2436
      %2501 = vst [vmem:[#allocation5 + $0x168] sm:$0x3f] %v2491
      %2502 = vst [vmem:[#allocation5 + $0x170] sm:$0x3f] %v2497
      %2503 = vst.msk [vmem:[#allocation5 + $0x178] sm:$0x3f] %vm1469, %v2437
      %v2504 = vld [vmem:[%s1540] sm:$0xff]
      %v2505 = vld [vmem:[%s1540 + $0x8] sm:$0x3f]
      %v2506 = vld [vmem:[%s1540 + $0x1] sm:$0xff]
      %v2507 = vld [vmem:[%s1540 + $0x9] sm:$0x3f]
      %v2508 = vld [vmem:[%s1540 + $0x2] sm:$0xff]
      %v2509 = vld [vmem:[%s1540 + $0xa] sm:$0x3f]
      %v2510 = vld [vmem:[%s1549] sm:$0xff]
      %v2511 = vld [vmem:[%s1549 + $0x8] sm:$0x3f]
      %v2512 = vld [vmem:[%s1549 + $0x1] sm:$0xff]
      %v2513 = vld [vmem:[%s1549 + $0x9] sm:$0x3f]
      %v2514 = vld [vmem:[%s1549 + $0x2] sm:$0xff]
      %v2515 = vld [vmem:[%s1549 + $0xa] sm:$0x3f]
      %v2516 = vld [vmem:[%s1558] sm:$0xff]
      %v2517 = vld [vmem:[%s1558 + $0x8] sm:$0x3f]
      %v2518 = vld [vmem:[%s1558 + $0x1] sm:$0xff]
      %v2519 = vld [vmem:[%s1558 + $0x9] sm:$0x3f]
      %v2520 = vld [vmem:[%s1558 + $0x2] sm:$0xff]
      %v2521 = vld [vmem:[%s1558 + $0xa] sm:$0x3f]
      %2524 = vrot.lane.b32.xlu0 %v2506, 32
      %v2525 = vpop.permute.xlu0 %2524
      %2526 = vrot.lane.b32.xlu0 %v2507, 32
      %v2527 = vpop.permute.xlu0 %2526
      %2532 = vrot.lane.b32.xlu0 %v2508, 64
      %v2533 = vpop.permute.xlu0 %2532
      %2534 = vrot.lane.b32.xlu0 %v2509, 64
      %v2535 = vpop.permute.xlu0 %2534
      %2540 = vrot.lane.b32.xlu0 %v2510, 96
      %v2541 = vpop.permute.xlu0 %2540
      %2542 = vrot.lane.b32.xlu0 %v2511, 96
      %v2543 = vpop.permute.xlu0 %2542
      %2548 = vrot.lane.b32.xlu0 %v2514, 32
      %v2549 = vpop.permute.xlu0 %2548
      %2550 = vrot.lane.b32.xlu0 %v2515, 32
      %v2551 = vpop.permute.xlu0 %2550
      %2556 = vrot.lane.b32.xlu0 %v2516, 64
      %v2557 = vpop.permute.xlu0 %2556
      %2558 = vrot.lane.b32.xlu0 %v2517, 64
      %v2559 = vpop.permute.xlu0 %2558
      %2564 = vrot.lane.b32.xlu0 %v2518, 96
      %v2565 = vpop.permute.xlu0 %2564
      %2566 = vrot.lane.b32.xlu0 %v2519, 96
      %v2567 = vpop.permute.xlu0 %2566
      %v2570 = vsel %vm1037, %v2504, %v2525
      %v2571 = vsel %vm1037, %v2505, %v2527
      %v2572 = vsel %vm1656, %v2570, %v2533
      %v2573 = vsel %vm1656, %v2571, %v2535
      %v2574 = vsel %vm1659, %v2572, %v2541
      %v2575 = vsel %vm1659, %v2573, %v2543
      %v2576 = vsel %vm1037, %v2512, %v2549
      %v2577 = vsel %vm1037, %v2513, %v2551
      %v2578 = vsel %vm1656, %v2576, %v2557
      %v2579 = vsel %vm1656, %v2577, %v2559
      %v2580 = vsel %vm1659, %v2578, %v2565
      %v2581 = vsel %vm1659, %v2579, %v2567
      %v2588 = vrot.slane %v2574, 2
      %v2589 = vrot.slane %v2580, 2
      %v2590 = vrot.slane %v2520, 2
      %v2591 = vrot.slane %v2575, 2
      %v2592 = vsel %vm1758, %v2588, %v2591
      %v2593 = vrot.slane %v2581, 2
      %v2594 = vsel %vm1758, %v2589, %v2593
      %v2595 = vrot.slane %v2521, 2
      %v2596 = vsel %vm1758, %v2590, %v2595
      %2606 = vst [vmem:[#allocation5 + $0x168] sm:$0xc0] %v2588
      %2607 = vst [vmem:[#allocation5 + $0x170] sm:$0xc0] %v2589
      %2608 = vst.msk [vmem:[#allocation5 + $0x178] sm:$0xc0] %vm1779, %v2590
      %2609 = vst [vmem:[#allocation5 + $0x180] sm:$0xff] %v2592
      %2610 = vst [vmem:[#allocation5 + $0x188] sm:$0xff] %v2594
      %2611 = vst.msk [vmem:[#allocation5 + $0x190] sm:$0xff] %vm1037, %v2596
      %2612 = vst [vmem:[#allocation5 + $0x198] sm:$0xf] %v2591
      %2613 = vst [vmem:[#allocation5 + $0x1a0] sm:$0xf] %v2593
      %2614 = vst.msk [vmem:[#allocation5 + $0x1a8] sm:$0xf] %vm1786, %v2595
      %v2615 = vld [vmem:[%s1549] sm:$0xff]
      %v2616 = vld [vmem:[%s1549 + $0x8] sm:$0x3f]
      %v2617 = vld [vmem:[%s1549 + $0x1] sm:$0xff]
      %v2618 = vld [vmem:[%s1549 + $0x9] sm:$0x3f]
      %v2619 = vld [vmem:[%s1549 + $0x2] sm:$0xff]
      %v2620 = vld [vmem:[%s1549 + $0xa] sm:$0x3f]
      %v2621 = vld [vmem:[%s1558] sm:$0xff]
      %v2622 = vld [vmem:[%s1558 + $0x8] sm:$0x3f]
      %v2623 = vld [vmem:[%s1558 + $0x1] sm:$0xff]
      %v2624 = vld [vmem:[%s1558 + $0x9] sm:$0x3f]
      %v2625 = vld [vmem:[%s1558 + $0x2] sm:$0xff]
      %v2626 = vld [vmem:[%s1558 + $0xa] sm:$0x3f]
      %v2627 = vld [vmem:[%s1567] sm:$0xff]
      %v2628 = vld [vmem:[%s1567 + $0x8] sm:$0x3f]
      %v2629 = vld [vmem:[%s1567 + $0x1] sm:$0xff]
      %v2630 = vld [vmem:[%s1567 + $0x9] sm:$0x3f]
      %v2631 = vld [vmem:[%s1567 + $0x2] sm:$0xff]
      %v2632 = vld [vmem:[%s1567 + $0xa] sm:$0x3f]
      %2635 = vrot.lane.b32.xlu0 %v2617, 32
      %v2636 = vpop.permute.xlu0 %2635
      %2637 = vrot.lane.b32.xlu0 %v2618, 32
      %v2638 = vpop.permute.xlu0 %2637
      %2643 = vrot.lane.b32.xlu0 %v2619, 64
      %v2644 = vpop.permute.xlu0 %2643
      %2645 = vrot.lane.b32.xlu0 %v2620, 64
      %v2646 = vpop.permute.xlu0 %2645
      %2651 = vrot.lane.b32.xlu0 %v2621, 96
      %v2652 = vpop.permute.xlu0 %2651
      %2653 = vrot.lane.b32.xlu0 %v2622, 96
      %v2654 = vpop.permute.xlu0 %2653
      %2659 = vrot.lane.b32.xlu0 %v2625, 32
      %v2660 = vpop.permute.xlu0 %2659
      %2661 = vrot.lane.b32.xlu0 %v2626, 32
      %v2662 = vpop.permute.xlu0 %2661
      %2667 = vrot.lane.b32.xlu0 %v2627, 64
      %v2668 = vpop.permute.xlu0 %2667
      %2669 = vrot.lane.b32.xlu0 %v2628, 64
      %v2670 = vpop.permute.xlu0 %2669
      %2675 = vrot.lane.b32.xlu0 %v2629, 96
      %v2676 = vpop.permute.xlu0 %2675
      %2677 = vrot.lane.b32.xlu0 %v2630, 96
      %v2678 = vpop.permute.xlu0 %2677
      %v2681 = vsel %vm1037, %v2615, %v2636
      %v2682 = vsel %vm1037, %v2616, %v2638
      %v2683 = vsel %vm1656, %v2681, %v2644
      %v2684 = vsel %vm1656, %v2682, %v2646
      %v2685 = vsel %vm1659, %v2683, %v2652
      %v2686 = vsel %vm1659, %v2684, %v2654
      %v2687 = vsel %vm1037, %v2623, %v2660
      %v2688 = vsel %vm1037, %v2624, %v2662
      %v2689 = vsel %vm1656, %v2687, %v2668
      %v2690 = vsel %vm1656, %v2688, %v2670
      %v2691 = vsel %vm1659, %v2689, %v2676
      %v2692 = vsel %vm1659, %v2690, %v2678
      %v2699 = vrot.slane %v2685, 4
      %v2700 = vrot.slane %v2691, 4
      %v2701 = vrot.slane %v2631, 4
      %v2702 = vrot.slane %v2686, 4
      %v2703 = vsel %vm1872, %v2699, %v2702
      %v2704 = vrot.slane %v2692, 4
      %v2705 = vsel %vm1872, %v2700, %v2704
      %v2706 = vrot.slane %v2632, 4
      %v2707 = vsel %vm1872, %v2701, %v2706
      %2717 = vst [vmem:[#allocation5 + $0x198] sm:$0xf0] %v2699
      %2718 = vst [vmem:[#allocation5 + $0x1a0] sm:$0xf0] %v2700
      %2719 = vst.msk [vmem:[#allocation5 + $0x1a8] sm:$0xf0] %vm1893, %v2701
      %2720 = vst [vmem:[#allocation5 + $0x1b0] sm:$0xff] %v2703
      %2721 = vst [vmem:[#allocation5 + $0x1b8] sm:$0xff] %v2705
      %2722 = vst.msk [vmem:[#allocation5 + $0x1c0] sm:$0xff] %vm1037, %v2707
      %2723 = vst [vmem:[#allocation5 + $0x1c8] sm:$0x3] %v2702
      %2724 = vst [vmem:[#allocation5 + $0x1d0] sm:$0x3] %v2704
      %2725 = vst.msk [vmem:[#allocation5 + $0x1d8] sm:$0x3] %vm1900, %v2706
      %v2726 = vld [vmem:[%s1558] sm:$0xff]
      %v2727 = vld [vmem:[%s1558 + $0x8] sm:$0x3f]
      %v2728 = vld [vmem:[%s1558 + $0x1] sm:$0xff]
      %v2729 = vld [vmem:[%s1558 + $0x9] sm:$0x3f]
      %v2730 = vld [vmem:[%s1558 + $0x2] sm:$0xff]
      %v2731 = vld [vmem:[%s1558 + $0xa] sm:$0x3f]
      %v2732 = vld [vmem:[%s1567] sm:$0xff]
      %v2733 = vld [vmem:[%s1567 + $0x8] sm:$0x3f]
      %v2734 = vld [vmem:[%s1567 + $0x1] sm:$0xff]
      %v2735 = vld [vmem:[%s1567 + $0x9] sm:$0x3f]
      %v2736 = vld [vmem:[%s1567 + $0x2] sm:$0xff]
      %v2737 = vld [vmem:[%s1567 + $0xa] sm:$0x3f]
      %v2738 = vld [vmem:[%s1576] sm:$0xff]
      %v2739 = vld [vmem:[%s1576 + $0x8] sm:$0x3f]
      %v2740 = vld [vmem:[%s1576 + $0x1] sm:$0xff]
      %v2741 = vld [vmem:[%s1576 + $0x9] sm:$0x3f]
      %v2742 = vld [vmem:[%s1576 + $0x2] sm:$0xff]
      %v2743 = vld [vmem:[%s1576 + $0xa] sm:$0x3f]
      %2746 = vrot.lane.b32.xlu0 %v2728, 32
      %v2747 = vpop.permute.xlu0 %2746
      %2748 = vrot.lane.b32.xlu0 %v2729, 32
      %v2749 = vpop.permute.xlu0 %2748
      %2754 = vrot.lane.b32.xlu0 %v2730, 64
      %v2755 = vpop.permute.xlu0 %2754
      %2756 = vrot.lane.b32.xlu0 %v2731, 64
      %v2757 = vpop.permute.xlu0 %2756
      %2762 = vrot.lane.b32.xlu0 %v2732, 96
      %v2763 = vpop.permute.xlu0 %2762
      %2764 = vrot.lane.b32.xlu0 %v2733, 96
      %v2765 = vpop.permute.xlu0 %2764
      %2770 = vrot.lane.b32.xlu0 %v2736, 32
      %v2771 = vpop.permute.xlu0 %2770
      %2772 = vrot.lane.b32.xlu0 %v2737, 32
      %v2773 = vpop.permute.xlu0 %2772
      %2778 = vrot.lane.b32.xlu0 %v2738, 64
      %v2779 = vpop.permute.xlu0 %2778
      %2780 = vrot.lane.b32.xlu0 %v2739, 64
      %v2781 = vpop.permute.xlu0 %2780
      %2786 = vrot.lane.b32.xlu0 %v2740, 96
      %v2787 = vpop.permute.xlu0 %2786
      %2788 = vrot.lane.b32.xlu0 %v2741, 96
      %v2789 = vpop.permute.xlu0 %2788
      %v2792 = vsel %vm1037, %v2726, %v2747
      %v2793 = vsel %vm1037, %v2727, %v2749
      %v2794 = vsel %vm1656, %v2792, %v2755
      %v2795 = vsel %vm1656, %v2793, %v2757
      %v2796 = vsel %vm1659, %v2794, %v2763
      %v2797 = vsel %vm1659, %v2795, %v2765
      %v2798 = vsel %vm1037, %v2734, %v2771
      %v2799 = vsel %vm1037, %v2735, %v2773
      %v2800 = vsel %vm1656, %v2798, %v2779
      %v2801 = vsel %vm1656, %v2799, %v2781
      %v2802 = vsel %vm1659, %v2800, %v2787
      %v2803 = vsel %vm1659, %v2801, %v2789
      %v2810 = vrot.slane %v2796, 6
      %v2811 = vrot.slane %v2802, 6
      %v2812 = vrot.slane %v2742, 6
      %v2813 = vrot.slane %v2797, 6
      %v2814 = vsel %vm1986, %v2810, %v2813
      %v2815 = vrot.slane %v2803, 6
      %v2816 = vsel %vm1986, %v2811, %v2815
      %v2817 = vrot.slane %v2743, 6
      %v2818 = vsel %vm1986, %v2812, %v2817
      %2825 = vst [vmem:[#allocation5 + $0x1c8] sm:$0xfc] %v2810
      %2826 = vst [vmem:[#allocation5 + $0x1d0] sm:$0xfc] %v2811
      %2827 = vst.msk [vmem:[#allocation5 + $0x1d8] sm:$0xfc] %vm2004, %v2812
      %2828 = vst [vmem:[#allocation5 + $0x1e0] sm:$0xff] %v2814
      %2829 = vst [vmem:[#allocation5 + $0x1e8] sm:$0xff] %v2816
      %2830 = vst.msk [vmem:[#allocation5 + $0x1f0] sm:$0xff] %vm1037, %v2818
      %v2831 = vld [vmem:[%s1567] sm:$0xff]
      %v2832 = vld [vmem:[%s1567 + $0x8] sm:$0x3f]
      %v2833 = vld [vmem:[%s1567 + $0x1] sm:$0xff]
      %v2834 = vld [vmem:[%s1567 + $0x9] sm:$0x3f]
      %v2835 = vld [vmem:[%s1567 + $0x2] sm:$0xff]
      %v2836 = vld [vmem:[%s1567 + $0xa] sm:$0x3f]
      %v2837 = vld [vmem:[%s1576] sm:$0xff]
      %v2838 = vld [vmem:[%s1576 + $0x8] sm:$0x3f]
      %v2839 = vld [vmem:[%s1576 + $0x1] sm:$0xff]
      %v2840 = vld [vmem:[%s1576 + $0x9] sm:$0x3f]
      %v2841 = vld [vmem:[%s1576 + $0x2] sm:$0xff]
      %v2842 = vld [vmem:[%s1576 + $0xa] sm:$0x3f]
      %v2843 = vld [vmem:[%s1585] sm:$0xff]
      %v2844 = vld [vmem:[%s1585 + $0x8] sm:$0x3f]
      %v2845 = vld [vmem:[%s1585 + $0x1] sm:$0xff]
      %v2846 = vld [vmem:[%s1585 + $0x9] sm:$0x3f]
      %v2847 = vld [vmem:[%s1585 + $0x2] sm:$0xff]
      %v2848 = vld [vmem:[%s1585 + $0xa] sm:$0x3f]
      %2851 = vrot.lane.b32.xlu0 %v2833, 32
      %v2852 = vpop.permute.xlu0 %2851
      %2853 = vrot.lane.b32.xlu0 %v2834, 32
      %v2854 = vpop.permute.xlu0 %2853
      %2859 = vrot.lane.b32.xlu0 %v2835, 64
      %v2860 = vpop.permute.xlu0 %2859
      %2861 = vrot.lane.b32.xlu0 %v2836, 64
      %v2862 = vpop.permute.xlu0 %2861
      %2867 = vrot.lane.b32.xlu0 %v2837, 96
      %v2868 = vpop.permute.xlu0 %2867
      %2869 = vrot.lane.b32.xlu0 %v2838, 96
      %v2870 = vpop.permute.xlu0 %2869
      %2875 = vrot.lane.b32.xlu0 %v2841, 32
      %v2876 = vpop.permute.xlu0 %2875
      %2877 = vrot.lane.b32.xlu0 %v2842, 32
      %v2878 = vpop.permute.xlu0 %2877
      %2883 = vrot.lane.b32.xlu0 %v2843, 64
      %v2884 = vpop.permute.xlu0 %2883
      %2885 = vrot.lane.b32.xlu0 %v2844, 64
      %v2886 = vpop.permute.xlu0 %2885
      %2891 = vrot.lane.b32.xlu0 %v2845, 96
      %v2892 = vpop.permute.xlu0 %2891
      %2893 = vrot.lane.b32.xlu0 %v2846, 96
      %v2894 = vpop.permute.xlu0 %2893
      %v2897 = vsel %vm1037, %v2831, %v2852
      %v2898 = vsel %vm1037, %v2832, %v2854
      %v2899 = vsel %vm1656, %v2897, %v2860
      %v2900 = vsel %vm1656, %v2898, %v2862
      %v2901 = vsel %vm1659, %v2899, %v2868
      %v2902 = vsel %vm1659, %v2900, %v2870
      %v2903 = vsel %vm1037, %v2839, %v2876
      %v2904 = vsel %vm1037, %v2840, %v2878
      %v2905 = vsel %vm1656, %v2903, %v2884
      %v2906 = vsel %vm1656, %v2904, %v2886
      %v2907 = vsel %vm1659, %v2905, %v2892
      %v2908 = vsel %vm1659, %v2906, %v2894
      %2909 = vst [vmem:[#allocation5 + $0x1f8] sm:$0xff] %v2901
      %2910 = vst [vmem:[#allocation5 + $0x200] sm:$0xff] %v2907
      %2911 = vst.msk [vmem:[#allocation5 + $0x208] sm:$0xff] %vm1037, %v2847
      %2912 = vst [vmem:[#allocation5 + $0x210] sm:$0x3f] %v2902
      %2913 = vst [vmem:[#allocation5 + $0x218] sm:$0x3f] %v2908
      %2914 = vst.msk [vmem:[#allocation5 + $0x220] sm:$0x3f] %vm1469, %v2848
      %v2915 = vld [vmem:[%s1576] sm:$0xff]
      %v2916 = vld [vmem:[%s1576 + $0x8] sm:$0x3f]
      %v2917 = vld [vmem:[%s1576 + $0x1] sm:$0xff]
      %v2918 = vld [vmem:[%s1576 + $0x9] sm:$0x3f]
      %v2919 = vld [vmem:[%s1576 + $0x2] sm:$0xff]
      %v2920 = vld [vmem:[%s1576 + $0xa] sm:$0x3f]
      %v2921 = vld [vmem:[%s1585] sm:$0xff]
      %v2922 = vld [vmem:[%s1585 + $0x8] sm:$0x3f]
      %v2923 = vld [vmem:[%s1585 + $0x1] sm:$0xff]
      %v2924 = vld [vmem:[%s1585 + $0x9] sm:$0x3f]
      %v2925 = vld [vmem:[%s1585 + $0x2] sm:$0xff]
      %v2926 = vld [vmem:[%s1585 + $0xa] sm:$0x3f]
      %s2927 = scalar_lea.vmem [#allocation4], 240
      %v2928 = vld [vmem:[%s2927] sm:$0xff]
      %v2929 = vld [vmem:[%s2927 + $0x8] sm:$0x3f]
      %v2930 = vld [vmem:[%s2927 + $0x1] sm:$0xff]
      %v2931 = vld [vmem:[%s2927 + $0x9] sm:$0x3f]
      %v2932 = vld [vmem:[%s2927 + $0x2] sm:$0xff]
      %v2933 = vld [vmem:[%s2927 + $0xa] sm:$0x3f]
      %2936 = vrot.lane.b32.xlu0 %v2917, 32
      %v2937 = vpop.permute.xlu0 %2936
      %2938 = vrot.lane.b32.xlu0 %v2918, 32
      %v2939 = vpop.permute.xlu0 %2938
      %2944 = vrot.lane.b32.xlu0 %v2919, 64
      %v2945 = vpop.permute.xlu0 %2944
      %2946 = vrot.lane.b32.xlu0 %v2920, 64
      %v2947 = vpop.permute.xlu0 %2946
      %2952 = vrot.lane.b32.xlu0 %v2921, 96
      %v2953 = vpop.permute.xlu0 %2952
      %2954 = vrot.lane.b32.xlu0 %v2922, 96
      %v2955 = vpop.permute.xlu0 %2954
      %2960 = vrot.lane.b32.xlu0 %v2925, 32
      %v2961 = vpop.permute.xlu0 %2960
      %2962 = vrot.lane.b32.xlu0 %v2926, 32
      %v2963 = vpop.permute.xlu0 %2962
      %2968 = vrot.lane.b32.xlu0 %v2928, 64
      %v2969 = vpop.permute.xlu0 %2968
      %2970 = vrot.lane.b32.xlu0 %v2929, 64
      %v2971 = vpop.permute.xlu0 %2970
      %2976 = vrot.lane.b32.xlu0 %v2930, 96
      %v2977 = vpop.permute.xlu0 %2976
      %2978 = vrot.lane.b32.xlu0 %v2931, 96
      %v2979 = vpop.permute.xlu0 %2978
      %v2982 = vsel %vm1037, %v2915, %v2937
      %v2983 = vsel %vm1037, %v2916, %v2939
      %v2984 = vsel %vm1656, %v2982, %v2945
      %v2985 = vsel %vm1656, %v2983, %v2947
      %v2986 = vsel %vm1659, %v2984, %v2953
      %v2987 = vsel %vm1659, %v2985, %v2955
      %v2988 = vsel %vm1037, %v2923, %v2961
      %v2989 = vsel %vm1037, %v2924, %v2963
      %v2990 = vsel %vm1656, %v2988, %v2969
      %v2991 = vsel %vm1656, %v2989, %v2971
      %v2992 = vsel %vm1659, %v2990, %v2977
      %v2993 = vsel %vm1659, %v2991, %v2979
      %v3000 = vrot.slane %v2986, 2
      %v3001 = vrot.slane %v2992, 2
      %v3002 = vrot.slane %v2932, 2
      %v3003 = vrot.slane %v2987, 2
      %v3004 = vsel %vm1758, %v3000, %v3003
      %v3005 = vrot.slane %v2993, 2
      %v3006 = vsel %vm1758, %v3001, %v3005
      %v3007 = vrot.slane %v2933, 2
      %v3008 = vsel %vm1758, %v3002, %v3007
      %3018 = vst [vmem:[#allocation5 + $0x210] sm:$0xc0] %v3000
      %3019 = vst [vmem:[#allocation5 + $0x218] sm:$0xc0] %v3001
      %3020 = vst.msk [vmem:[#allocation5 + $0x220] sm:$0xc0] %vm1779, %v3002
      %3021 = vst [vmem:[#allocation5 + $0x228] sm:$0xff] %v3004
      %3022 = vst [vmem:[#allocation5 + $0x230] sm:$0xff] %v3006
      %3023 = vst.msk [vmem:[#allocation5 + $0x238] sm:$0xff] %vm1037, %v3008
      %3024 = vst [vmem:[#allocation5 + $0x240] sm:$0xf] %v3003
      %3025 = vst [vmem:[#allocation5 + $0x248] sm:$0xf] %v3005
      %3026 = vst.msk [vmem:[#allocation5 + $0x250] sm:$0xf] %vm1786, %v3007
      %v3027 = vld [vmem:[#allocation5] sm:$0xff]
      %v3028 = vld [vmem:[#allocation5 + $0x8] sm:$0xff]
      %v3029 = vld [vmem:[#allocation5 + $0x10] sm:$0xff]
      %v3030 = vld [vmem:[#allocation5 + $0x18] sm:$0xff]
      %v3031 = vld [vmem:[#allocation5 + $0x20] sm:$0xff]
      %v3032 = vld [vmem:[#allocation5 + $0x28] sm:$0xff]
      %v3033 = vld [vmem:[#allocation5 + $0x30] sm:$0xff]
      %v3034 = vld [vmem:[#allocation5 + $0x38] sm:$0xff]
      %v3035 = vld [vmem:[#allocation5 + $0x40] sm:$0xff]
      %v3036 = vld [vmem:[#allocation5 + $0x48] sm:$0xff]
      %v3037 = vld [vmem:[#allocation5 + $0x50] sm:$0xff]
      %v3038 = vld [vmem:[#allocation5 + $0x58] sm:$0xff]
      %v3039 = vld [vmem:[#allocation5 + $0x60] sm:$0xff]
      %v3040 = vld [vmem:[#allocation5 + $0x68] sm:$0xff]
      %v3041 = vld [vmem:[#allocation5 + $0x70] sm:$0xff]
      %v3042 = vld [vmem:[#allocation5 + $0x78] sm:$0xff]
      %v3043 = vld [vmem:[#allocation5 + $0x80] sm:$0xff]
      %v3044 = vld [vmem:[#allocation5 + $0x88] sm:$0xff]
      %v3045 = vld [vmem:[#allocation5 + $0x90] sm:$0xff]
      %v3046 = vld [vmem:[#allocation5 + $0x98] sm:$0xff]
      %v3047 = vld [vmem:[#allocation5 + $0xa0] sm:$0xff]
      %v3048 = vld [vmem:[#allocation5 + $0xa8] sm:$0xff]
      %v3049 = vld [vmem:[#allocation5 + $0xb0] sm:$0xff]
      %v3050 = vld [vmem:[#allocation5 + $0xb8] sm:$0xff]
      %v3051 = vld [vmem:[#allocation5 + $0xc0] sm:$0xff]
      %v3052 = vld [vmem:[#allocation5 + $0xc8] sm:$0xff]
      %v3053 = vld [vmem:[#allocation5 + $0xd0] sm:$0xff]
      %v3054 = vld [vmem:[#allocation5 + $0xd8] sm:$0xff]
      %v3055 = vld [vmem:[#allocation5 + $0xe0] sm:$0xff]
      %v3056 = vld [vmem:[#allocation5 + $0xe8] sm:$0xff]
      %v3057 = vld [vmem:[#allocation5 + $0xf0] sm:$0xff]
      %v3058 = vld [vmem:[#allocation5 + $0xf8] sm:$0xff]
      %v3059 = vld [vmem:[#allocation5 + $0x100] sm:$0xff]
      %v3060 = vld [vmem:[#allocation5 + $0x108] sm:$0xff]
      %v3061 = vld [vmem:[#allocation5 + $0x110] sm:$0xff]
      %v3062 = vld [vmem:[#allocation5 + $0x118] sm:$0xff]
      %v3063 = vld [vmem:[#allocation5 + $0x120] sm:$0xff]
      %v3064 = vld [vmem:[#allocation5 + $0x128] sm:$0xff]
      %v3065 = vld [vmem:[#allocation5 + $0x130] sm:$0xff]
      %v3066 = vld [vmem:[#allocation5 + $0x138] sm:$0xff]
      %v3067 = vld [vmem:[#allocation5 + $0x140] sm:$0xff]
      %v3068 = vld [vmem:[#allocation5 + $0x148] sm:$0xff]
      %v3069 = vld [vmem:[#allocation5 + $0x150] sm:$0xff]
      %v3070 = vld [vmem:[#allocation5 + $0x158] sm:$0xff]
      %v3071 = vld [vmem:[#allocation5 + $0x160] sm:$0xff]
      %v3072 = vld [vmem:[#allocation5 + $0x168] sm:$0xff]
      %v3073 = vld [vmem:[#allocation5 + $0x170] sm:$0xff]
      %v3074 = vld [vmem:[#allocation5 + $0x178] sm:$0xff]
      %v3075 = vld [vmem:[#allocation5 + $0x180] sm:$0xff]
      %v3076 = vld [vmem:[#allocation5 + $0x188] sm:$0xff]
      %v3077 = vld [vmem:[#allocation5 + $0x190] sm:$0xff]
      %v3078 = vld [vmem:[#allocation5 + $0x198] sm:$0xff]
      %v3079 = vld [vmem:[#allocation5 + $0x1a0] sm:$0xff]
      %v3080 = vld [vmem:[#allocation5 + $0x1a8] sm:$0xff]
      %v3081 = vld [vmem:[#allocation5 + $0x1b0] sm:$0xff]
      %v3082 = vld [vmem:[#allocation5 + $0x1b8] sm:$0xff]
      %v3083 = vld [vmem:[#allocation5 + $0x1c0] sm:$0xff]
      %v3084 = vld [vmem:[#allocation5 + $0x1c8] sm:$0xff]
      %v3085 = vld [vmem:[#allocation5 + $0x1d0] sm:$0xff]
      %v3086 = vld [vmem:[#allocation5 + $0x1d8] sm:$0xff]
      %v3087 = vld [vmem:[#allocation5 + $0x1e0] sm:$0xff]
      %v3088 = vld [vmem:[#allocation5 + $0x1e8] sm:$0xff]
      %v3089 = vld [vmem:[#allocation5 + $0x1f0] sm:$0xff]
      %v3090 = vld [vmem:[#allocation5 + $0x1f8] sm:$0xff]
      %v3091 = vld [vmem:[#allocation5 + $0x200] sm:$0xff]
      %v3092 = vld [vmem:[#allocation5 + $0x208] sm:$0xff]
      %v3093 = vld [vmem:[#allocation5 + $0x210] sm:$0xff]
      %v3094 = vld [vmem:[#allocation5 + $0x218] sm:$0xff]
      %v3095 = vld [vmem:[#allocation5 + $0x220] sm:$0xff]
      %v3096 = vld [vmem:[#allocation5 + $0x228] sm:$0xff]
      %v3097 = vld [vmem:[#allocation5 + $0x230] sm:$0xff]
      %v3098 = vld [vmem:[#allocation5 + $0x238] sm:$0xff]
      %v3099 = vld [vmem:[#allocation5 + $0x240] sm:$0xf]
      %v3100 = vld [vmem:[#allocation5 + $0x248] sm:$0xf]
      %v3101 = vld [vmem:[#allocation5 + $0x250] sm:$0xf]
      %v3102 = vld [vmem:[%s3] sm:$0xff]
      %v3103 = vld [vmem:[%s3 + $0x8] sm:$0xff]
      %v3104 = vld [vmem:[%s3 + $0x10] sm:$0xff]
      %v3105 = vld [vmem:[%s3 + $0x18] sm:$0xff]
      %v3106 = vld [vmem:[%s3 + $0x20] sm:$0xff]
      %v3107 = vld [vmem:[%s3 + $0x28] sm:$0xff]
      %v3108 = vld [vmem:[%s3 + $0x30] sm:$0xff]
      %v3109 = vld [vmem:[%s3 + $0x38] sm:$0xff]
      %v3110 = vld [vmem:[%s3 + $0x40] sm:$0xff]
      %v3111 = vld [vmem:[%s3 + $0x48] sm:$0xff]
      %v3112 = vld [vmem:[%s3 + $0x50] sm:$0xff]
      %v3113 = vld [vmem:[%s3 + $0x58] sm:$0xff]
      %v3114 = vld [vmem:[%s3 + $0x60] sm:$0xff]
      %v3115 = vld [vmem:[%s3 + $0x68] sm:$0xff]
      %v3116 = vld [vmem:[%s3 + $0x70] sm:$0xff]
      %v3117 = vld [vmem:[%s3 + $0x78] sm:$0xff]
      %v3118 = vld [vmem:[%s3 + $0x80] sm:$0xff]
      %v3119 = vld [vmem:[%s3 + $0x88] sm:$0xff]
      %v3120 = vld [vmem:[%s3 + $0x90] sm:$0xff]
      %v3121 = vld [vmem:[%s3 + $0x98] sm:$0xff]
      %v3122 = vld [vmem:[%s3 + $0xa0] sm:$0xff]
      %v3123 = vld [vmem:[%s3 + $0xa8] sm:$0xff]
      %v3124 = vld [vmem:[%s3 + $0xb0] sm:$0xff]
      %v3125 = vld [vmem:[%s3 + $0xb8] sm:$0xff]
      %v3126 = vld [vmem:[%s3 + $0xc0] sm:$0xff]
      %v3127 = vld [vmem:[%s3 + $0xc8] sm:$0xff]
      %v3128 = vld [vmem:[%s3 + $0xd0] sm:$0xff]
      %v3129 = vld [vmem:[%s3 + $0xd8] sm:$0xff]
      %v3130 = vld [vmem:[%s3 + $0xe0] sm:$0xff]
      %v3131 = vld [vmem:[%s3 + $0xe8] sm:$0xff]
      %v3132 = vld [vmem:[%s3 + $0xf0] sm:$0xff]
      %v3133 = vld [vmem:[%s3 + $0xf8] sm:$0xff]
      %v3134 = vld [vmem:[%s3 + $0x100] sm:$0xff]
      %v3135 = vld [vmem:[%s3 + $0x108] sm:$0xff]
      %v3136 = vld [vmem:[%s3 + $0x110] sm:$0xff]
      %v3137 = vld [vmem:[%s3 + $0x118] sm:$0xff]
      %v3138 = vld [vmem:[%s4] sm:$0x1]
      %v3140 = vperm.slane %v3138, 0
      %v3143 = vsel %vm1037, %v3029, 0
      %v3146 = vsel %vm1037, %v3032, 0
      %v3149 = vsel %vm1037, %v3035, 0
      %v3152 = vsel %vm1037, %v3038, 0
      %v3155 = vsel %vm1037, %v3041, 0
      %v3158 = vsel %vm1037, %v3044, 0
      %v3161 = vsel %vm1037, %v3047, 0
      %v3164 = vsel %vm1037, %v3050, 0
      %v3167 = vsel %vm1037, %v3053, 0
      %v3170 = vsel %vm1037, %v3056, 0
      %v3173 = vsel %vm1037, %v3059, 0
      %v3176 = vsel %vm1037, %v3062, 0
      %v3179 = vsel %vm1037, %v3065, 0
      %v3182 = vsel %vm1037, %v3068, 0
      %v3185 = vsel %vm1037, %v3071, 0
      %v3188 = vsel %vm1037, %v3074, 0
      %v3191 = vsel %vm1037, %v3077, 0
      %v3194 = vsel %vm1037, %v3080, 0
      %v3197 = vsel %vm1037, %v3083, 0
      %v3200 = vsel %vm1037, %v3086, 0
      %v3203 = vsel %vm1037, %v3089, 0
      %v3206 = vsel %vm1037, %v3092, 0
      %v3209 = vsel %vm1037, %v3095, 0
      %v3212 = vsel %vm1037, %v3098, 0
      %v3215 = vsel %vm1037, %v3101, 0
      %3217 = vmatpush.msra.mxu0 %v3117
      %3218 = vmatpush.msra.mxu0 %v3116
      %3219 = vmatpush.msra.mxu0 %v3115
      %3220 = vmatpush.msra.mxu0 %v3114
      %3221 = vmatpush.msra.mxu0 %v3113
      %3222 = vmatpush.msra.mxu0 %v3112
      %3223 = vmatpush.msra.mxu0 %v3111
      %3224 = vmatpush.msra.mxu0 %v3110
      %3225 = vmatpush.msra.mxu0 %v3109
      %3226 = vmatpush.msra.mxu0 %v3108
      %3227 = vmatpush.msra.mxu0 %v3107
      %3228 = vmatpush.msra.mxu0 %v3106
      %3229 = vmatpush.msra.mxu0 %v3105
      %3230 = vmatpush.msra.mxu0 %v3104
      %3231 = vmatpush.msra.mxu0 %v3103
      %3232 = vmatpush.msra.mxu0 %v3102
      %3233 = vmatmul.f32.gmra.mxu0 %v3027
      %v3234 = vpop.f32.mrf.mxu0
      %v3235 = vadd.f32 %v3140, %v3234
      %3236 = vmatmul.f32.gmra.mxu0 %v3030
      %v3237 = vpop.f32.mrf.mxu0
      %v3238 = vadd.f32 %v3140, %v3237
      %3239 = vmatmul.f32.gmra.mxu0 %v3033
      %v3240 = vpop.f32.mrf.mxu0
      %v3241 = vadd.f32 %v3140, %v3240
      %3242 = vmatmul.f32.gmra.mxu0 %v3036
      %v3243 = vpop.f32.mrf.mxu0
      %v3244 = vadd.f32 %v3140, %v3243
      %3245 = vmatmul.f32.gmra.mxu0 %v3039
      %v3246 = vpop.f32.mrf.mxu0
      %v3247 = vadd.f32 %v3140, %v3246
      %3248 = vmatmul.f32.gmra.mxu0 %v3042
      %v3249 = vpop.f32.mrf.mxu0
      %v3250 = vadd.f32 %v3140, %v3249
      %3251 = vmatmul.f32.gmra.mxu0 %v3045
      %v3252 = vpop.f32.mrf.mxu0
      %v3253 = vadd.f32 %v3140, %v3252
      %3254 = vmatmul.f32.gmra.mxu0 %v3048
      %v3255 = vpop.f32.mrf.mxu0
      %v3256 = vadd.f32 %v3140, %v3255
      %3257 = vmatmul.f32.gmra.mxu0 %v3051
      %v3258 = vpop.f32.mrf.mxu0
      %v3259 = vadd.f32 %v3140, %v3258
      %3260 = vmatmul.f32.gmra.mxu0 %v3054
      %v3261 = vpop.f32.mrf.mxu0
      %v3262 = vadd.f32 %v3140, %v3261
      %3263 = vmatmul.f32.gmra.mxu0 %v3057
      %v3264 = vpop.f32.mrf.mxu0
      %v3265 = vadd.f32 %v3140, %v3264
      %3266 = vmatmul.f32.gmra.mxu0 %v3060
      %v3267 = vpop.f32.mrf.mxu0
      %v3268 = vadd.f32 %v3140, %v3267
      %3269 = vmatmul.f32.gmra.mxu0 %v3063
      %v3270 = vpop.f32.mrf.mxu0
      %v3271 = vadd.f32 %v3140, %v3270
      %3272 = vmatmul.f32.gmra.mxu0 %v3066
      %v3273 = vpop.f32.mrf.mxu0
      %v3274 = vadd.f32 %v3140, %v3273
      %3275 = vmatmul.f32.gmra.mxu0 %v3069
      %v3276 = vpop.f32.mrf.mxu0
      %v3277 = vadd.f32 %v3140, %v3276
      %3278 = vmatmul.f32.gmra.mxu0 %v3072
      %v3279 = vpop.f32.mrf.mxu0
      %v3280 = vadd.f32 %v3140, %v3279
      %3281 = vmatmul.f32.gmra.mxu0 %v3075
      %v3282 = vpop.f32.mrf.mxu0
      %v3283 = vadd.f32 %v3140, %v3282
      %3284 = vmatmul.f32.gmra.mxu0 %v3078
      %v3285 = vpop.f32.mrf.mxu0
      %v3286 = vadd.f32 %v3140, %v3285
      %3287 = vmatmul.f32.gmra.mxu0 %v3081
      %v3288 = vpop.f32.mrf.mxu0
      %v3289 = vadd.f32 %v3140, %v3288
      %3290 = vmatmul.f32.gmra.mxu0 %v3084
      %v3291 = vpop.f32.mrf.mxu0
      %v3292 = vadd.f32 %v3140, %v3291
      %3293 = vmatmul.f32.gmra.mxu0 %v3087
      %v3294 = vpop.f32.mrf.mxu0
      %v3295 = vadd.f32 %v3140, %v3294
      %3296 = vmatmul.f32.gmra.mxu0 %v3090
      %v3297 = vpop.f32.mrf.mxu0
      %v3298 = vadd.f32 %v3140, %v3297
      %3299 = vmatmul.f32.gmra.mxu0 %v3093
      %v3300 = vpop.f32.mrf.mxu0
      %v3301 = vadd.f32 %v3140, %v3300
      %3302 = vmatmul.f32.gmra.mxu0 %v3096
      %v3303 = vpop.f32.mrf.mxu0
      %v3304 = vadd.f32 %v3140, %v3303
      %3305 = vmatmul.f32.gmra.mxu0 %v3099
      %v3306 = vpop.f32.mrf.mxu0
      %v3307 = vadd.f32 %v3140, %v3306
      %3308 = vdwg.mxu0
      %3309 = vmatpush.msra.mxu0 %v3133
      %3310 = vmatpush.msra.mxu0 %v3132
      %3311 = vmatpush.msra.mxu0 %v3131
      %3312 = vmatpush.msra.mxu0 %v3130
      %3313 = vmatpush.msra.mxu0 %v3129
      %3314 = vmatpush.msra.mxu0 %v3128
      %3315 = vmatpush.msra.mxu0 %v3127
      %3316 = vmatpush.msra.mxu0 %v3126
      %3317 = vmatpush.msra.mxu0 %v3125
      %3318 = vmatpush.msra.mxu0 %v3124
      %3319 = vmatpush.msra.mxu0 %v3123
      %3320 = vmatpush.msra.mxu0 %v3122
      %3321 = vmatpush.msra.mxu0 %v3121
      %3322 = vmatpush.msra.mxu0 %v3120
      %3323 = vmatpush.msra.mxu0 %v3119
      %3324 = vmatpush.msra.mxu0 %v3118
      %3325 = vmatmul.f32.gmra.mxu0 %v3028
      %v3326 = vpop.f32.mrf.mxu0
      %v3327 = vadd.f32 %v3235, %v3326
      %3328 = vmatmul.f32.gmra.mxu0 %v3031
      %v3329 = vpop.f32.mrf.mxu0
      %v3330 = vadd.f32 %v3238, %v3329
      %3331 = vmatmul.f32.gmra.mxu0 %v3034
      %v3332 = vpop.f32.mrf.mxu0
      %v3333 = vadd.f32 %v3241, %v3332
      %3334 = vmatmul.f32.gmra.mxu0 %v3037
      %v3335 = vpop.f32.mrf.mxu0
      %v3336 = vadd.f32 %v3244, %v3335
      %3337 = vmatmul.f32.gmra.mxu0 %v3040
      %v3338 = vpop.f32.mrf.mxu0
      %v3339 = vadd.f32 %v3247, %v3338
      %3340 = vmatmul.f32.gmra.mxu0 %v3043
      %v3341 = vpop.f32.mrf.mxu0
      %v3342 = vadd.f32 %v3250, %v3341
      %3343 = vmatmul.f32.gmra.mxu0 %v3046
      %v3344 = vpop.f32.mrf.mxu0
      %v3345 = vadd.f32 %v3253, %v3344
      %3346 = vmatmul.f32.gmra.mxu0 %v3049
      %v3347 = vpop.f32.mrf.mxu0
      %v3348 = vadd.f32 %v3256, %v3347
      %3349 = vmatmul.f32.gmra.mxu0 %v3052
      %v3350 = vpop.f32.mrf.mxu0
      %v3351 = vadd.f32 %v3259, %v3350
      %3352 = vmatmul.f32.gmra.mxu0 %v3055
      %v3353 = vpop.f32.mrf.mxu0
      %v3354 = vadd.f32 %v3262, %v3353
      %3355 = vmatmul.f32.gmra.mxu0 %v3058
      %v3356 = vpop.f32.mrf.mxu0
      %v3357 = vadd.f32 %v3265, %v3356
      %3358 = vmatmul.f32.gmra.mxu0 %v3061
      %v3359 = vpop.f32.mrf.mxu0
      %v3360 = vadd.f32 %v3268, %v3359
      %3361 = vmatmul.f32.gmra.mxu0 %v3064
      %v3362 = vpop.f32.mrf.mxu0
      %v3363 = vadd.f32 %v3271, %v3362
      %3364 = vmatmul.f32.gmra.mxu0 %v3067
      %v3365 = vpop.f32.mrf.mxu0
      %v3366 = vadd.f32 %v3274, %v3365
      %3367 = vmatmul.f32.gmra.mxu0 %v3070
      %v3368 = vpop.f32.mrf.mxu0
      %v3369 = vadd.f32 %v3277, %v3368
      %3370 = vmatmul.f32.gmra.mxu0 %v3073
      %v3371 = vpop.f32.mrf.mxu0
      %v3372 = vadd.f32 %v3280, %v3371
      %3373 = vmatmul.f32.gmra.mxu0 %v3076
      %v3374 = vpop.f32.mrf.mxu0
      %v3375 = vadd.f32 %v3283, %v3374
      %3376 = vmatmul.f32.gmra.mxu0 %v3079
      %v3377 = vpop.f32.mrf.mxu0
      %v3378 = vadd.f32 %v3286, %v3377
      %3379 = vmatmul.f32.gmra.mxu0 %v3082
      %v3380 = vpop.f32.mrf.mxu0
      %v3381 = vadd.f32 %v3289, %v3380
      %3382 = vmatmul.f32.gmra.mxu0 %v3085
      %v3383 = vpop.f32.mrf.mxu0
      %v3384 = vadd.f32 %v3292, %v3383
      %3385 = vmatmul.f32.gmra.mxu0 %v3088
      %v3386 = vpop.f32.mrf.mxu0
      %v3387 = vadd.f32 %v3295, %v3386
      %3388 = vmatmul.f32.gmra.mxu0 %v3091
      %v3389 = vpop.f32.mrf.mxu0
      %v3390 = vadd.f32 %v3298, %v3389
      %3391 = vmatmul.f32.gmra.mxu0 %v3094
      %v3392 = vpop.f32.mrf.mxu0
      %v3393 = vadd.f32 %v3301, %v3392
      %3394 = vmatmul.f32.gmra.mxu0 %v3097
      %v3395 = vpop.f32.mrf.mxu0
      %v3396 = vadd.f32 %v3304, %v3395
      %3397 = vmatmul.f32.gmra.mxu0 %v3100
      %v3398 = vpop.f32.mrf.mxu0
      %v3399 = vadd.f32 %v3307, %v3398
      %3400 = vdwg.mxu0
      %3401 = vmatpush.msra.mxu0 0.0
      %3402 = vmatpush.msra.mxu0 0.0
      %3403 = vmatpush.msra.mxu0 0.0
      %3404 = vmatpush.msra.mxu0 0.0
      %3405 = vmatpush.msra.mxu0 0.0
      %3406 = vmatpush.msra.mxu0 0.0
      %3407 = vmatpush.msra.mxu0 0.0
      %3408 = vmatpush.msra.mxu0 0.0
      %3409 = vmatpush.msra.mxu0 0.0
      %3410 = vmatpush.msra.mxu0 0.0
      %3411 = vmatpush.msra.mxu0 0.0
      %3412 = vmatpush.msra.mxu0 0.0
      %3413 = vmatpush.msra.mxu0 %v3137
      %3414 = vmatpush.msra.mxu0 %v3136
      %3415 = vmatpush.msra.mxu0 %v3135
      %3416 = vmatpush.msra.mxu0 %v3134
      %3417 = vmatmul.f32.gmra.mxu0 %v3143
      %v3418 = vpop.f32.mrf.mxu0
      %v3419 = vadd.f32 %v3327, %v3418
      %3420 = vmatmul.f32.gmra.mxu0 %v3146
      %v3421 = vpop.f32.mrf.mxu0
      %v3422 = vadd.f32 %v3330, %v3421
      %3423 = vmatmul.f32.gmra.mxu0 %v3149
      %v3424 = vpop.f32.mrf.mxu0
      %v3425 = vadd.f32 %v3333, %v3424
      %3426 = vmatmul.f32.gmra.mxu0 %v3152
      %v3427 = vpop.f32.mrf.mxu0
      %v3428 = vadd.f32 %v3336, %v3427
      %3429 = vmatmul.f32.gmra.mxu0 %v3155
      %v3430 = vpop.f32.mrf.mxu0
      %v3431 = vadd.f32 %v3339, %v3430
      %3432 = vmatmul.f32.gmra.mxu0 %v3158
      %v3433 = vpop.f32.mrf.mxu0
      %v3434 = vadd.f32 %v3342, %v3433
      %3435 = vmatmul.f32.gmra.mxu0 %v3161
      %v3436 = vpop.f32.mrf.mxu0
      %v3437 = vadd.f32 %v3345, %v3436
      %3438 = vmatmul.f32.gmra.mxu0 %v3164
      %v3439 = vpop.f32.mrf.mxu0
      %v3440 = vadd.f32 %v3348, %v3439
      %3441 = vmatmul.f32.gmra.mxu0 %v3167
      %v3442 = vpop.f32.mrf.mxu0
      %v3443 = vadd.f32 %v3351, %v3442
      %3444 = vmatmul.f32.gmra.mxu0 %v3170
      %v3445 = vpop.f32.mrf.mxu0
      %v3446 = vadd.f32 %v3354, %v3445
      %3447 = vmatmul.f32.gmra.mxu0 %v3173
      %v3448 = vpop.f32.mrf.mxu0
      %v3449 = vadd.f32 %v3357, %v3448
      %3450 = vmatmul.f32.gmra.mxu0 %v3176
      %v3451 = vpop.f32.mrf.mxu0
      %v3452 = vadd.f32 %v3360, %v3451
      %3453 = vmatmul.f32.gmra.mxu0 %v3179
      %v3454 = vpop.f32.mrf.mxu0
      %v3455 = vadd.f32 %v3363, %v3454
      %3456 = vmatmul.f32.gmra.mxu0 %v3182
      %v3457 = vpop.f32.mrf.mxu0
      %v3458 = vadd.f32 %v3366, %v3457
      %3459 = vmatmul.f32.gmra.mxu0 %v3185
      %v3460 = vpop.f32.mrf.mxu0
      %v3461 = vadd.f32 %v3369, %v3460
      %3462 = vmatmul.f32.gmra.mxu0 %v3188
      %v3463 = vpop.f32.mrf.mxu0
      %v3464 = vadd.f32 %v3372, %v3463
      %3465 = vmatmul.f32.gmra.mxu0 %v3191
      %v3466 = vpop.f32.mrf.mxu0
      %v3467 = vadd.f32 %v3375, %v3466
      %3468 = vmatmul.f32.gmra.mxu0 %v3194
      %v3469 = vpop.f32.mrf.mxu0
      %v3470 = vadd.f32 %v3378, %v3469
      %3471 = vmatmul.f32.gmra.mxu0 %v3197
      %v3472 = vpop.f32.mrf.mxu0
      %v3473 = vadd.f32 %v3381, %v3472
      %3474 = vmatmul.f32.gmra.mxu0 %v3200
      %v3475 = vpop.f32.mrf.mxu0
      %v3476 = vadd.f32 %v3384, %v3475
      %3477 = vmatmul.f32.gmra.mxu0 %v3203
      %v3478 = vpop.f32.mrf.mxu0
      %v3479 = vadd.f32 %v3387, %v3478
      %3480 = vmatmul.f32.gmra.mxu0 %v3206
      %v3481 = vpop.f32.mrf.mxu0
      %v3482 = vadd.f32 %v3390, %v3481
      %3483 = vmatmul.f32.gmra.mxu0 %v3209
      %v3484 = vpop.f32.mrf.mxu0
      %v3485 = vadd.f32 %v3393, %v3484
      %3486 = vmatmul.f32.gmra.mxu0 %v3212
      %v3487 = vpop.f32.mrf.mxu0
      %v3488 = vadd.f32 %v3396, %v3487
      %3489 = vmatmul.f32.gmra.mxu0 %v3215
      %v3490 = vpop.f32.mrf.mxu0
      %v3491 = vadd.f32 %v3399, %v3490
      %3492 = vdwg.mxu0
      %v3493 = vmax.f32 %v3419, 0.0
      %v3494 = vmax.f32 %v3422, 0.0
      %v3495 = vmax.f32 %v3425, 0.0
      %v3496 = vmax.f32 %v3428, 0.0
      %v3497 = vmax.f32 %v3431, 0.0
      %v3498 = vmax.f32 %v3434, 0.0
      %v3499 = vmax.f32 %v3437, 0.0
      %v3500 = vmax.f32 %v3440, 0.0
      %v3501 = vmax.f32 %v3443, 0.0
      %v3502 = vmax.f32 %v3446, 0.0
      %v3503 = vmax.f32 %v3449, 0.0
      %v3504 = vmax.f32 %v3452, 0.0
      %v3505 = vmax.f32 %v3455, 0.0
      %v3506 = vmax.f32 %v3458, 0.0
      %v3507 = vmax.f32 %v3461, 0.0
      %v3508 = vmax.f32 %v3464, 0.0
      %v3509 = vmax.f32 %v3467, 0.0
      %v3510 = vmax.f32 %v3470, 0.0
      %v3511 = vmax.f32 %v3473, 0.0
      %v3512 = vmax.f32 %v3476, 0.0
      %v3513 = vmax.f32 %v3479, 0.0
      %v3514 = vmax.f32 %v3482, 0.0
      %v3515 = vmax.f32 %v3485, 0.0
      %v3516 = vmax.f32 %v3488, 0.0
      %v3517 = vmax.f32 %v3491, 0.0
      %3518 = vst.msk [vmem:[#allocation6] sm:$0xff] %vm1656, %v3493
      %3519 = vst.msk [vmem:[#allocation6 + $0x8] sm:$0xff] %vm1656, %v3494
      %3520 = vst.msk [vmem:[#allocation6 + $0x10] sm:$0xff] %vm1656, %v3495
      %3521 = vst.msk [vmem:[#allocation6 + $0x18] sm:$0xff] %vm1656, %v3496
      %3522 = vst.msk [vmem:[#allocation6 + $0x20] sm:$0xff] %vm1656, %v3497
      %3523 = vst.msk [vmem:[#allocation6 + $0x28] sm:$0xff] %vm1656, %v3498
      %3524 = vst.msk [vmem:[#allocation6 + $0x30] sm:$0xff] %vm1656, %v3499
      %3525 = vst.msk [vmem:[#allocation6 + $0x38] sm:$0xff] %vm1656, %v3500
      %3526 = vst.msk [vmem:[#allocation6 + $0x40] sm:$0xff] %vm1656, %v3501
      %3527 = vst.msk [vmem:[#allocation6 + $0x48] sm:$0xff] %vm1656, %v3502
      %3528 = vst.msk [vmem:[#allocation6 + $0x50] sm:$0xff] %vm1656, %v3503
      %3529 = vst.msk [vmem:[#allocation6 + $0x58] sm:$0xff] %vm1656, %v3504
      %3530 = vst.msk [vmem:[#allocation6 + $0x60] sm:$0xff] %vm1656, %v3505
      %3531 = vst.msk [vmem:[#allocation6 + $0x68] sm:$0xff] %vm1656, %v3506
      %3532 = vst.msk [vmem:[#allocation6 + $0x70] sm:$0xff] %vm1656, %v3507
      %3533 = vst.msk [vmem:[#allocation6 + $0x78] sm:$0xff] %vm1656, %v3508
      %3534 = vst.msk [vmem:[#allocation6 + $0x80] sm:$0xff] %vm1656, %v3509
      %3535 = vst.msk [vmem:[#allocation6 + $0x88] sm:$0xff] %vm1656, %v3510
      %3536 = vst.msk [vmem:[#allocation6 + $0x90] sm:$0xff] %vm1656, %v3511
      %3537 = vst.msk [vmem:[#allocation6 + $0x98] sm:$0xff] %vm1656, %v3512
      %3538 = vst.msk [vmem:[#allocation6 + $0xa0] sm:$0xff] %vm1656, %v3513
      %3539 = vst.msk [vmem:[#allocation6 + $0xa8] sm:$0xff] %vm1656, %v3514
      %3540 = vst.msk [vmem:[#allocation6 + $0xb0] sm:$0xff] %vm1656, %v3515
      %3541 = vst.msk [vmem:[#allocation6 + $0xb8] sm:$0xff] %vm1656, %v3516
      %vm3542 = vcmask 519168
      %3543 = vst.msk [vmem:[#allocation6 + $0xc0] sm:$0xf] %vm3542, %v3517
      %v3544 = vld [vmem:[#allocation6] ss:$2 sm:$0xff]
      %s3545 = scalar_lea.vmem [#allocation6], 16
      %v3546 = vld [vmem:[%s3545] ss:$2 sm:$0xff]
      %s3547 = scalar_lea.vmem [#allocation6], 32
      %v3548 = vld [vmem:[%s3547] ss:$2 sm:$0xff]
      %s3549 = scalar_lea.vmem [#allocation6], 48
      %v3550 = vld [vmem:[%s3549] ss:$2 sm:$0xff]
      %s3551 = scalar_lea.vmem [#allocation6], 64
      %v3552 = vld [vmem:[%s3551] ss:$2 sm:$0xff]
      %s3553 = scalar_lea.vmem [#allocation6], 80
      %v3554 = vld [vmem:[%s3553] ss:$2 sm:$0xff]
      %s3555 = scalar_lea.vmem [#allocation6], 96
      %v3556 = vld [vmem:[%s3555] ss:$2 sm:$0xff]
      %s3557 = scalar_lea.vmem [#allocation6], 112
      %v3558 = vld [vmem:[%s3557] ss:$2 sm:$0xff]
      %s3559 = scalar_lea.vmem [#allocation6], 128
      %v3560 = vld [vmem:[%s3559] ss:$2 sm:$0xff]
      %s3561 = scalar_lea.vmem [#allocation6], 144
      %v3562 = vld [vmem:[%s3561] ss:$2 sm:$0xff]
      %s3563 = scalar_lea.vmem [#allocation6], 160
      %v3564 = vld [vmem:[%s3563] ss:$2 sm:$0xff]
      %s3565 = scalar_lea.vmem [#allocation6], 176
      %v3566 = vld [vmem:[%s3565] ss:$2 sm:$0xff]
      %s3567 = scalar_lea.vmem [#allocation6], 192
      %v3568 = vld [vmem:[%s3567] ss:$2 sm:$0x3]
      %s3569 = scalar_lea.vmem [#allocation6], 1
      %v3570 = vld [vmem:[%s3569] ss:$2 sm:$0xff]
      %s3571 = scalar_lea.vmem [#allocation6], 17
      %v3572 = vld [vmem:[%s3571] ss:$2 sm:$0xff]
      %s3573 = scalar_lea.vmem [#allocation6], 33
      %v3574 = vld [vmem:[%s3573] ss:$2 sm:$0xff]
      %s3575 = scalar_lea.vmem [#allocation6], 49
      %v3576 = vld [vmem:[%s3575] ss:$2 sm:$0xff]
      %s3577 = scalar_lea.vmem [#allocation6], 65
      %v3578 = vld [vmem:[%s3577] ss:$2 sm:$0xff]
      %s3579 = scalar_lea.vmem [#allocation6], 81
      %v3580 = vld [vmem:[%s3579] ss:$2 sm:$0xff]
      %s3581 = scalar_lea.vmem [#allocation6], 97
      %v3582 = vld [vmem:[%s3581] ss:$2 sm:$0xff]
      %s3583 = scalar_lea.vmem [#allocation6], 113
      %v3584 = vld [vmem:[%s3583] ss:$2 sm:$0xff]
      %s3585 = scalar_lea.vmem [#allocation6], 129
      %v3586 = vld [vmem:[%s3585] ss:$2 sm:$0xff]
      %s3587 = scalar_lea.vmem [#allocation6], 145
      %v3588 = vld [vmem:[%s3587] ss:$2 sm:$0xff]
      %s3589 = scalar_lea.vmem [#allocation6], 161
      %v3590 = vld [vmem:[%s3589] ss:$2 sm:$0xff]
      %s3591 = scalar_lea.vmem [#allocation6], 177
      %v3592 = vld [vmem:[%s3591] ss:$2 sm:$0xff]
      %s3593 = scalar_lea.vmem [#allocation6], 193
      %v3594 = vld [vmem:[%s3593] ss:$2 sm:$0x3]
      %v3595 = vmax.f32 %v3544, %v3570
      %v3596 = vmax.f32 %v3546, %v3572
      %v3597 = vmax.f32 %v3548, %v3574
      %v3598 = vmax.f32 %v3550, %v3576
      %v3599 = vmax.f32 %v3552, %v3578
      %v3600 = vmax.f32 %v3554, %v3580
      %v3601 = vmax.f32 %v3556, %v3582
      %v3602 = vmax.f32 %v3558, %v3584
      %v3603 = vmax.f32 %v3560, %v3586
      %v3604 = vmax.f32 %v3562, %v3588
      %v3605 = vmax.f32 %v3564, %v3590
      %v3606 = vmax.f32 %v3566, %v3592
      %v3607 = vmax.f32 %v3568, %v3594
      %3608 = vst.msk [vmem:[#allocation7] sm:$0xff] %vm1656, %v3595
      %3609 = vst.msk [vmem:[#allocation7 + $0x8] sm:$0xff] %vm1656, %v3596
      %3610 = vst.msk [vmem:[#allocation7 + $0x10] sm:$0xff] %vm1656, %v3597
      %3611 = vst.msk [vmem:[#allocation7 + $0x18] sm:$0xff] %vm1656, %v3598
      %3612 = vst.msk [vmem:[#allocation7 + $0x20] sm:$0xff] %vm1656, %v3599
      %3613 = vst.msk [vmem:[#allocation7 + $0x28] sm:$0xff] %vm1656, %v3600
      %3614 = vst.msk [vmem:[#allocation7 + $0x30] sm:$0xff] %vm1656, %v3601
      %3615 = vst.msk [vmem:[#allocation7 + $0x38] sm:$0xff] %vm1656, %v3602
      %3616 = vst.msk [vmem:[#allocation7 + $0x40] sm:$0xff] %vm1656, %v3603
      %3617 = vst.msk [vmem:[#allocation7 + $0x48] sm:$0xff] %vm1656, %v3604
      %3618 = vst.msk [vmem:[#allocation7 + $0x50] sm:$0xff] %vm1656, %v3605
      %3619 = vst.msk [vmem:[#allocation7 + $0x58] sm:$0xff] %vm1656, %v3606
      %vm3620 = vcmask 517120
      %3621 = vst.msk [vmem:[#allocation7 + $0x60] sm:$0x3] %vm3620, %v3607
      %v3622 = vld [vmem:[#allocation7] sm:$0x7f]
      %v3623 = vld [vmem:[#allocation7 + $0x7] sm:$0x7f]
      %v3624 = vmax.f32 %v3622, %v3623
      %vm3625 = vcmask 522240
      %3626 = vst.msk [vmem:[%s224] sm:$0x7f] %vm3625, %v3624
      %v3627 = vld [vmem:[#allocation7 + $0xe] sm:$0x7f]
      %v3628 = vld [vmem:[#allocation7 + $0x15] sm:$0x7f]
      %v3629 = vmax.f32 %v3627, %v3628
      %3630 = vst.msk [vmem:[%s224 + $0x7] sm:$0x7f] %vm3625, %v3629
      %v3631 = vld [vmem:[#allocation7 + $0x1c] sm:$0x7f]
      %v3632 = vld [vmem:[#allocation7 + $0x23] sm:$0x7f]
      %v3633 = vmax.f32 %v3631, %v3632
      %3634 = vst.msk [vmem:[%s224 + $0xe] sm:$0x7f] %vm3625, %v3633
      %v3635 = vld [vmem:[#allocation7 + $0x2a] sm:$0x7f]
      %v3636 = vld [vmem:[#allocation7 + $0x31] sm:$0x7f]
      %v3637 = vmax.f32 %v3635, %v3636
      %3638 = vst.msk [vmem:[%s224 + $0x15] sm:$0x7f] %vm3625, %v3637
      %v3639 = vld [vmem:[#allocation7 + $0x38] sm:$0x7f]
      %v3640 = vld [vmem:[#allocation7 + $0x3f] sm:$0x7f]
      %v3641 = vmax.f32 %v3639, %v3640
      %3642 = vst.msk [vmem:[%s224 + $0x1c] sm:$0x7f] %vm3625, %v3641
      %v3643 = vld [vmem:[#allocation7 + $0x46] sm:$0x7f]
      %v3644 = vld [vmem:[#allocation7 + $0x4d] sm:$0x7f]
      %v3645 = vmax.f32 %v3643, %v3644
      %3646 = vst.msk [vmem:[%s224 + $0x23] sm:$0x7f] %vm3625, %v3645
      %v3647 = vld [vmem:[#allocation7 + $0x54] sm:$0x7f]
      %v3648 = vld [vmem:[#allocation7 + $0x5b] sm:$0x7f]
      %v3649 = vmax.f32 %v3647, %v3648
      %3650 = vst.msk [vmem:[%s224 + $0x2a] sm:$0x7f] %vm3625, %v3649
      %p3651 = scmp.lt.s32.totalorder %s16, 1
      %s3652 = scalar_select %p3651, %s16, 1
      %s3653 = smul.addr %s3652, 7
      %s3654 = smul.addr %s3653, 8
      %s3655 = scalar_lea.vmem %s5, %s3654
      // Predicated region
      $region41: #{simple_cnn_forward.2} parent=39 // pred_check
        %p3656 = pneg %p144
      $region42: #{simple_cnn_forward.2} parent=39 // pred_check_branch
        %3658 = sbr.rel (%p3656) target = $region44
      $region43: #{simple_cnn_forward.2} parent=39 // pred_region
        _
      $region44: #{simple_cnn_forward.2} parent=39 // pred_fallthru
        _
    $region40: #{simple_cnn_forward.2} parent=5 // pred_fallthru
      _
    %p3659 = scmp.le.s32.totalorder 2, %s11
    // Predicated region
    $region45: #{simple_cnn_forward.2} parent=5 // pred_check
      %p3660 = pneg %p3659
    $region46: #{simple_cnn_forward.2} parent=5 // pred_check_branch
      %3662 = sbr.rel (%p3660) target = $region48
    $region47: #{simple_cnn_forward.2} parent=5 // pred_region
      %s3663 = ssub.s32 %s11, 2
      // Predicated region
      $region49: #{simple_cnn_forward.2} parent=47 // pred_check
        %p3664 = pneg %p150
      $region50: #{simple_cnn_forward.2} parent=47 // pred_check_branch
        %3666 = sbr.rel (%p3664) target = $region52
      $region51: #{simple_cnn_forward.2} parent=47 // pred_region
        %p3667 = scmp.lt.s32.totalorder %s17, 1
        %s3668 = scalar_select %p3667, %s17, 1
        %s3669 = smul.addr %s3668, 7
        %s3670 = smul.addr %s3669, 8
        %s3671 = scalar_lea.vmem %s5, %s3670
      $region52: #{simple_cnn_forward.2} parent=47 // pred_fallthru
        _
    $region48: #{simple_cnn_forward.2} parent=5 // pred_fallthru
      _
  $region6: #{simple_cnn_forward.2} parent=0 // loop_footer
    %s15 = sadd.s32 1, %s11
  $region7: #{simple_cnn_forward.2} parent=0 // loop_footer_branch
    %10 = sbr.rel target = $region3
  $region8: #{simple_cnn_forward.2} parent=0 // loop_exit
    _

</llo_original>
